<compile_context>
chip_gen: v7x
topology: tpu7x:2x2x1
jax: 0.10.0
libtpu: 0.0.40
codegen_flags: <defaults>
</compile_context>

<pallas_src>
import functools

import jax
import jax.numpy as jnp
from jax.experimental import pallas as pl
from jax.experimental.pallas import tpu as pltpu


def _pre_norm_attention_kernel(
    x_ref,       # (Bb, N, D)        f32
    wqkv_ref,    # (D, 3*inner)      bf16  (q columns pre-scaled by dh**-0.5)
    wo_ref,      # (inner, D)        bf16
    bo_ref,      # (1, D)            f32
    gamma_ref,   # (1, D)            f32
    beta_ref,    # (1, D)            f32
    out_ref,     # (Bb, N, D)        f32
    *,
    heads: int,
    dim_head: int,
    eps: float,
):
    bb, n, d = x_ref.shape
    rows = bb * n
    inner = heads * dim_head

    # ---- PreNorm: LayerNorm(x) in f32 (biased variance, like torch.nn.LayerNorm) ----
    x = x_ref[...].reshape(rows, d)                                   # f32
    mean = jnp.mean(x, axis=-1, keepdims=True)
    var = jnp.mean((x - mean) ** 2, axis=-1, keepdims=True)
    x_hat = (x - mean) * jax.lax.rsqrt(var + eps)
    x_ln = (x_hat * gamma_ref[0] + beta_ref[0]).astype(jnp.bfloat16)  # (rows, D) bf16

    # ---- fused QKV projection: one lane-dense MXU pass (rows,128)@(128,384) ----
    qkv = jnp.dot(x_ln, wqkv_ref[...], preferred_element_type=jnp.float32)  # (rows, 3*inner) f32

    # 128-lane-aligned splits (free), then leading-dim-only reshapes (free).
    q_all = qkv[:, 0 * inner:1 * inner].astype(jnp.bfloat16).reshape(bb, n, inner)
    k_all = qkv[:, 1 * inner:2 * inner].astype(jnp.bfloat16).reshape(bb, n, inner)
    v_all = qkv[:, 2 * inner:3 * inner].astype(jnp.bfloat16).reshape(bb, n, inner)

    # ---- per-head attention: small static loop, batched over the batch dim ----
    head_outs = []
    for h in range(heads):
        lo, hi = h * dim_head, (h + 1) * dim_head
        q3 = q_all[:, :, lo:hi]                                       # (Bb, N, dh) bf16
        k3 = k_all[:, :, lo:hi]
        v3 = v_all[:, :, lo:hi]

        dots = jnp.einsum("bqd,bkd->bqk", q3, k3,
                          preferred_element_type=jnp.float32)         # (Bb, N, N) f32
        dots = dots - jnp.max(dots, axis=-1, keepdims=True)
        p = jnp.exp(dots)
        attn = p * pl.reciprocal(jnp.sum(p, axis=-1, keepdims=True), approx=False)

        o = jnp.einsum("bqk,bkd->bqd", attn.astype(jnp.bfloat16), v3,
                       preferred_element_type=jnp.float32)            # (Bb, N, dh) f32
        head_outs.append(o)

    o_all = jnp.concatenate(head_outs, axis=-1)                       # (Bb, N, inner) f32
    o_flat = o_all.reshape(rows, inner).astype(jnp.bfloat16)

    # ---- to_out: one full-depth matmul + bias, then the PreNorm residual (raw x) ----
    y = jnp.dot(o_flat, wo_ref[...], preferred_element_type=jnp.float32)
    y = y + bo_ref[0] + x
    out_ref[...] = y.reshape(bb, n, d).astype(out_ref.dtype)


def pre_norm_attention(x, w_qkv, w_o, b_o, gamma, beta, *,
                       heads, dim_head, eps=1e-5, batch_block=2):
    """x: [B, N, D] float32 -> [B, N, D] float32.  out = Attention(LayerNorm(x)) + x.

    batch_block: batch rows per grid step.  Default 2 keeps >=2 parallel grid steps
    (shards across v7x's two TensorCores); on single-TC chips (v5e/v6e) pass
    batch_block=B to minimize grid-step overhead.
    """
    B, N, D = x.shape
    inner = heads * dim_head
    assert w_qkv.shape == (D, 3 * inner)
    assert w_o.shape == (inner, D)
    Bb = min(batch_block, B)
    assert B % Bb == 0, "batch must be divisible by batch_block"

    # Wrapper-side (one-time, constant) weight prep:
    #  * fold the 1/sqrt(dh) softmax scale into the Wq columns,
    #  * pack Q/K/V into one bf16 slab -> single DMA per grid step.
    scale = dim_head ** -0.5
    w_qkv_scaled = w_qkv.at[:, :inner].multiply(scale)
    wqkv_bf16 = w_qkv_scaled.astype(jnp.bfloat16)                     # (D, 3*inner)
    wo_bf16 = w_o.astype(jnp.bfloat16)                                # (inner, D)

    bo2 = b_o.reshape(1, D).astype(jnp.float32)
    g2 = gamma.reshape(1, D).astype(jnp.float32)
    bt2 = beta.reshape(1, D).astype(jnp.float32)

    kernel = functools.partial(_pre_norm_attention_kernel,
                               heads=heads, dim_head=dim_head, eps=eps)

    return pl.pallas_call(
        kernel,
        out_shape=jax.ShapeDtypeStruct((B, N, D), jnp.float32),
        grid_spec=pltpu.PrefetchScalarGridSpec(
            num_scalar_prefetch=0,
            grid=(B // Bb,),                                          # batch blocks only
            in_specs=[
                pl.BlockSpec((Bb, N, D), lambda b: (b, 0, 0)),        # x
                pl.BlockSpec((D, 3 * inner), lambda b: (0, 0)),       # packed W_qkv
                pl.BlockSpec((inner, D), lambda b: (0, 0)),           # W_o
                pl.BlockSpec((1, D), lambda b: (0, 0)),               # b_o
                pl.BlockSpec((1, D), lambda b: (0, 0)),               # LN gamma
                pl.BlockSpec((1, D), lambda b: (0, 0)),               # LN beta
            ],
            out_specs=pl.BlockSpec((Bb, N, D), lambda b: (b, 0, 0)),
        ),
        compiler_params=pltpu.CompilerParams(
            dimension_semantics=("parallel",),
        ),
    )(x, wqkv_bf16, wo_bf16, bo2, g2, bt2)


def _reference(x, w_qkv, w_o, b_o, gamma, beta, *, heads, dim_head, eps=1e-5):
    """Pure-JAX f32 reference mirroring the PyTorch PreNormattention(Attention) module."""
    B, N, D = x.shape
    inner = heads * dim_head
    scale = dim_head ** -0.5
    mean = jnp.mean(x, axis=-1, keepdims=True)
    var = jnp.mean((x - mean) ** 2, axis=-1, keepdims=True)
    x_ln = (x - mean) / jnp.sqrt(var + eps) * gamma + beta
    qkv = jnp.einsum("bnd,de->bne", x_ln, w_qkv)
    q, k, v = jnp.split(qkv, 3, axis=-1)

    def split_heads(t):  # (B, N, inner) -> (B, H, N, dh)
        return t.reshape(B, N, heads, dim_head).transpose(0, 2, 1, 3)

    q, k, v = map(split_heads, (q, k, v))
    dots = jnp.einsum("bhqd,bhkd->bhqk", q, k) * scale
    attn = jax.nn.softmax(dots, axis=-1)
    o = jnp.einsum("bhqk,bhkd->bhqd", attn, v).transpose(0, 2, 1, 3).reshape(B, N, inner)
    fn_out = jnp.einsum("bne,ed->bnd", o, w_o) + b_o
    return fn_out + x


if __name__ == "__main__":
    # Small but layout-friendly shapes: D = 128 (lane-dense), N = 64, heads=4, dh=32.
    B, N, D = 4, 64, 128
    heads, dim_head = 4, 32
    inner = heads * dim_head

    key = jax.random.PRNGKey(0)
    kx, kqkv, kwo, kbo, kg, kb = jax.random.split(key, 6)

    x = jax.random.normal(kx, (B, N, D), dtype=jnp.float32)
    # Deterministic synthetic parameters (no checkpoint loading).
    w_qkv = jax.random.normal(kqkv, (D, 3 * inner), dtype=jnp.float32) * (D ** -0.5)
    w_o = jax.random.normal(kwo, (inner, D), dtype=jnp.float32) * (inner ** -0.5)
    b_o = jax.random.normal(kbo, (D,), dtype=jnp.float32) * 0.01
    gamma = 1.0 + 0.1 * jax.random.normal(kg, (D,), dtype=jnp.float32)
    beta = 0.05 * jax.random.normal(kb, (D,), dtype=jnp.float32)

    out = pre_norm_attention(
        x, w_qkv, w_o, b_o, gamma, beta, heads=heads, dim_head=dim_head
    )
    out = jax.block_until_ready(out)

    ref = _reference(x, w_qkv, w_o, b_o, gamma, beta, heads=heads, dim_head=dim_head)
    # bf16 matmul inputs (f32 accumulation) vs the f32 reference.
    max_diff = jnp.max(jnp.abs(out - ref))
    assert jnp.allclose(out, ref, atol=1e-1, rtol=5e-2), f"mismatch, max|diff|={max_diff}"

    print("KERNEL_OK")
</pallas_src>

<mosaic_0001>
module attributes {stable_mosaic.version = 11 : i64} {
  func.func @_pre_norm_attention_kernel(%arg0: i32, %arg1: memref<2x64x128xf32, #tpu.memory_space<vmem>>, %arg2: memref<128x384xbf16, #tpu.memory_space<vmem>>, %arg3: memref<128x128xbf16, #tpu.memory_space<vmem>>, %arg4: memref<1x128xf32, #tpu.memory_space<vmem>>, %arg5: memref<1x128xf32, #tpu.memory_space<vmem>>, %arg6: memref<1x128xf32, #tpu.memory_space<vmem>>, %arg7: memref<2x64x128xf32, #tpu.memory_space<vmem>>) attributes {dimension_semantics = [#tpu.dimension_semantics<parallel>], iteration_bounds = array<i64: 2>, scalar_prefetch = 0 : i64, scratch_operands = 0 : i64, tpu.core_type = #tpu.core_type<tc>, window_params = [{transform_indices = @transform_0, window_bounds = array<i64: 2, 64, 128>}, {pipeline_mode = #tpu.pipeline_mode<synchronous>, transform_indices = @transform_1, window_bounds = array<i64: 128, 384>}, {pipeline_mode = #tpu.pipeline_mode<synchronous>, transform_indices = @transform_2, window_bounds = array<i64: 128, 128>}, {pipeline_mode = #tpu.pipeline_mode<synchronous>, transform_indices = @transform_3, window_bounds = array<i64: 1, 128>}, {pipeline_mode = #tpu.pipeline_mode<synchronous>, transform_indices = @transform_4, window_bounds = array<i64: 1, 128>}, {pipeline_mode = #tpu.pipeline_mode<synchronous>, transform_indices = @transform_5, window_bounds = array<i64: 1, 128>}, {transform_indices = @transform_6, window_bounds = array<i64: 2, 64, 128>}]} {
    %c0 = arith.constant 0 : index
    %c0_0 = arith.constant 0 : index
    %c0_1 = arith.constant 0 : index
    %0 = vector.load %arg1[%c0, %c0_0, %c0_1] : memref<2x64x128xf32, #tpu.memory_space<vmem>>, vector<2x64x128xf32>
    %1 = vector.shape_cast %0 : vector<2x64x128xf32> to vector<128x128xf32>
    %cst = arith.constant dense<0.000000e+00> : vector<128xf32>
    %2 = vector.multi_reduction <add>, %1, %cst [1] : vector<128x128xf32> to vector<128xf32>
    %3 = vector.shape_cast %2 : vector<128xf32> to vector<128x1xf32>
    %cst_2 = arith.constant 1.280000e+02 : f32
    %4 = vector.broadcast %cst_2 : f32 to vector<128x1xf32>
    %5 = arith.divf %3, %4 : vector<128x1xf32>
    %6 = vector.broadcast %5 : vector<128x1xf32> to vector<128x128xf32>
    %7 = arith.subf %1, %6 : vector<128x128xf32>
    %8 = arith.mulf %7, %7 : vector<128x128xf32>
    %cst_3 = arith.constant dense<0.000000e+00> : vector<128xf32>
    %9 = vector.multi_reduction <add>, %8, %cst_3 [1] : vector<128x128xf32> to vector<128xf32>
    %10 = vector.shape_cast %9 : vector<128xf32> to vector<128x1xf32>
    %cst_4 = arith.constant 1.280000e+02 : f32
    %11 = vector.broadcast %cst_4 : f32 to vector<128x1xf32>
    %12 = arith.divf %10, %11 : vector<128x1xf32>
    %13 = vector.broadcast %5 : vector<128x1xf32> to vector<128x128xf32>
    %14 = arith.subf %1, %13 : vector<128x128xf32>
    %cst_5 = arith.constant 9.99999974E-6 : f32
    %15 = vector.broadcast %cst_5 : f32 to vector<128x1xf32>
    %16 = arith.addf %12, %15 : vector<128x1xf32>
    %17 = math.rsqrt %16 : vector<128x1xf32>
    %18 = vector.broadcast %17 : vector<128x1xf32> to vector<128x128xf32>
    %19 = arith.mulf %14, %18 : vector<128x128xf32>
    %c0_6 = arith.constant 0 : index
    %c0_7 = arith.constant 0 : index
    %20 = vector.load %arg5[%c0_6, %c0_7] : memref<1x128xf32, #tpu.memory_space<vmem>>, vector<1x128xf32>
    %21 = vector.shape_cast %20 : vector<1x128xf32> to vector<128xf32>
    %22 = vector.shape_cast %21 : vector<128xf32> to vector<1x128xf32>
    %23 = vector.broadcast %22 : vector<1x128xf32> to vector<128x128xf32>
    %24 = arith.mulf %19, %23 : vector<128x128xf32>
    %c0_8 = arith.constant 0 : index
    %c0_9 = arith.constant 0 : index
    %25 = vector.load %arg6[%c0_8, %c0_9] : memref<1x128xf32, #tpu.memory_space<vmem>>, vector<1x128xf32>
    %26 = vector.shape_cast %25 : vector<1x128xf32> to vector<128xf32>
    %27 = vector.shape_cast %26 : vector<128xf32> to vector<1x128xf32>
    %28 = vector.broadcast %27 : vector<1x128xf32> to vector<128x128xf32>
    %29 = arith.addf %24, %28 : vector<128x128xf32>
    %30 = arith.truncf %29 : vector<128x128xf32> to vector<128x128xbf16>
    %c0_10 = arith.constant 0 : index
    %c0_11 = arith.constant 0 : index
    %31 = vector.load %arg2[%c0_10, %c0_11] : memref<128x384xbf16, #tpu.memory_space<vmem>>, vector<128x384xbf16>
    %cst_12 = arith.constant dense<0.000000e+00> : vector<128x384xf32>
    %32 = tpu.matmul %30, %31, %cst_12 {dimension_numbers = #tpu.dot_dimension_numbers<[1], [0], [0], [1], [0, 0, 1, 1], [], []>} : vector<128x128xbf16>, vector<128x384xbf16>, vector<128x384xf32> -> vector<128x384xf32>
    %33 = vector.extract_strided_slice %32 {offsets = [0, 0], sizes = [128, 128], strides = [1, 1]} : vector<128x384xf32> to vector<128x128xf32>
    %34 = arith.truncf %33 : vector<128x128xf32> to vector<128x128xbf16>
    %35 = vector.shape_cast %34 : vector<128x128xbf16> to vector<2x64x128xbf16>
    %36 = vector.extract_strided_slice %32 {offsets = [0, 128], sizes = [128, 128], strides = [1, 1]} : vector<128x384xf32> to vector<128x128xf32>
    %37 = arith.truncf %36 : vector<128x128xf32> to vector<128x128xbf16>
    %38 = vector.shape_cast %37 : vector<128x128xbf16> to vector<2x64x128xbf16>
    %39 = vector.extract_strided_slice %32 {offsets = [0, 256], sizes = [128, 128], strides = [1, 1]} : vector<128x384xf32> to vector<128x128xf32>
    %40 = arith.truncf %39 : vector<128x128xf32> to vector<128x128xbf16>
    %41 = vector.shape_cast %40 : vector<128x128xbf16> to vector<2x64x128xbf16>
    %42 = vector.extract_strided_slice %35 {offsets = [0, 0, 0], sizes = [2, 64, 32], strides = [1, 1, 1]} : vector<2x64x128xbf16> to vector<2x64x32xbf16>
    %43 = vector.extract_strided_slice %38 {offsets = [0, 0, 0], sizes = [2, 64, 32], strides = [1, 1, 1]} : vector<2x64x128xbf16> to vector<2x64x32xbf16>
    %44 = vector.extract_strided_slice %41 {offsets = [0, 0, 0], sizes = [2, 64, 32], strides = [1, 1, 1]} : vector<2x64x128xbf16> to vector<2x64x32xbf16>
    "tpu.trace_start"() <{level = 10 : i32, message = "bqd,bkd->bqk"}> : () -> ()
    %cst_13 = arith.constant dense<0.000000e+00> : vector<2x64x64xf32>
    %45 = tpu.matmul %42, %43, %cst_13 {dimension_numbers = #tpu.dot_dimension_numbers<[2], [2], [1], [1], [0, 0, 0, 1, 1, 1], [0], [0]>} : vector<2x64x32xbf16>, vector<2x64x32xbf16>, vector<2x64x64xf32> -> vector<2x64x64xf32>
    "tpu.trace_stop"() : () -> ()
    %cst_14 = arith.constant dense<0xFF800000> : vector<2x64xf32>
    %46 = vector.multi_reduction <maximumf>, %45, %cst_14 [2] : vector<2x64x64xf32> to vector<2x64xf32>
    %47 = vector.shape_cast %46 : vector<2x64xf32> to vector<2x64x1xf32>
    %48 = vector.broadcast %47 : vector<2x64x1xf32> to vector<2x64x64xf32>
    %49 = arith.subf %45, %48 : vector<2x64x64xf32>
    %50 = math.exp %49 : vector<2x64x64xf32>
    %cst_15 = arith.constant dense<0.000000e+00> : vector<2x64xf32>
    %51 = vector.multi_reduction <add>, %50, %cst_15 [2] : vector<2x64x64xf32> to vector<2x64xf32>
    %52 = vector.shape_cast %51 : vector<2x64xf32> to vector<2x64x1xf32>
    %53 = tpu.reciprocal %52 : vector<2x64x1xf32> -> vector<2x64x1xf32>
    %54 = vector.broadcast %53 : vector<2x64x1xf32> to vector<2x64x64xf32>
    %55 = arith.mulf %50, %54 : vector<2x64x64xf32>
    %56 = arith.truncf %55 : vector<2x64x64xf32> to vector<2x64x64xbf16>
    "tpu.trace_start"() <{level = 10 : i32, message = "bqk,bkd->bqd"}> : () -> ()
    %cst_16 = arith.constant dense<0.000000e+00> : vector<2x64x32xf32>
    %57 = tpu.matmul %56, %44, %cst_16 {dimension_numbers = #tpu.dot_dimension_numbers<[2], [1], [1], [2], [0, 0, 0, 1, 1, 2], [0], [0]>} : vector<2x64x64xbf16>, vector<2x64x32xbf16>, vector<2x64x32xf32> -> vector<2x64x32xf32>
    "tpu.trace_stop"() : () -> ()
    %58 = vector.extract_strided_slice %35 {offsets = [0, 0, 32], sizes = [2, 64, 32], strides = [1, 1, 1]} : vector<2x64x128xbf16> to vector<2x64x32xbf16>
    %59 = vector.extract_strided_slice %38 {offsets = [0, 0, 32], sizes = [2, 64, 32], strides = [1, 1, 1]} : vector<2x64x128xbf16> to vector<2x64x32xbf16>
    %60 = vector.extract_strided_slice %41 {offsets = [0, 0, 32], sizes = [2, 64, 32], strides = [1, 1, 1]} : vector<2x64x128xbf16> to vector<2x64x32xbf16>
    "tpu.trace_start"() <{level = 10 : i32, message = "bqd,bkd->bqk"}> : () -> ()
    %cst_17 = arith.constant dense<0.000000e+00> : vector<2x64x64xf32>
    %61 = tpu.matmul %58, %59, %cst_17 {dimension_numbers = #tpu.dot_dimension_numbers<[2], [2], [1], [1], [0, 0, 0, 1, 1, 1], [0], [0]>} : vector<2x64x32xbf16>, vector<2x64x32xbf16>, vector<2x64x64xf32> -> vector<2x64x64xf32>
    "tpu.trace_stop"() : () -> ()
    %cst_18 = arith.constant dense<0xFF800000> : vector<2x64xf32>
    %62 = vector.multi_reduction <maximumf>, %61, %cst_18 [2] : vector<2x64x64xf32> to vector<2x64xf32>
    %63 = vector.shape_cast %62 : vector<2x64xf32> to vector<2x64x1xf32>
    %64 = vector.broadcast %63 : vector<2x64x1xf32> to vector<2x64x64xf32>
    %65 = arith.subf %61, %64 : vector<2x64x64xf32>
    %66 = math.exp %65 : vector<2x64x64xf32>
    %cst_19 = arith.constant dense<0.000000e+00> : vector<2x64xf32>
    %67 = vector.multi_reduction <add>, %66, %cst_19 [2] : vector<2x64x64xf32> to vector<2x64xf32>
    %68 = vector.shape_cast %67 : vector<2x64xf32> to vector<2x64x1xf32>
    %69 = tpu.reciprocal %68 : vector<2x64x1xf32> -> vector<2x64x1xf32>
    %70 = vector.broadcast %69 : vector<2x64x1xf32> to vector<2x64x64xf32>
    %71 = arith.mulf %66, %70 : vector<2x64x64xf32>
    %72 = arith.truncf %71 : vector<2x64x64xf32> to vector<2x64x64xbf16>
    "tpu.trace_start"() <{level = 10 : i32, message = "bqk,bkd->bqd"}> : () -> ()
    %cst_20 = arith.constant dense<0.000000e+00> : vector<2x64x32xf32>
    %73 = tpu.matmul %72, %60, %cst_20 {dimension_numbers = #tpu.dot_dimension_numbers<[2], [1], [1], [2], [0, 0, 0, 1, 1, 2], [0], [0]>} : vector<2x64x64xbf16>, vector<2x64x32xbf16>, vector<2x64x32xf32> -> vector<2x64x32xf32>
    "tpu.trace_stop"() : () -> ()
    %74 = vector.extract_strided_slice %35 {offsets = [0, 0, 64], sizes = [2, 64, 32], strides = [1, 1, 1]} : vector<2x64x128xbf16> to vector<2x64x32xbf16>
    %75 = vector.extract_strided_slice %38 {offsets = [0, 0, 64], sizes = [2, 64, 32], strides = [1, 1, 1]} : vector<2x64x128xbf16> to vector<2x64x32xbf16>
    %76 = vector.extract_strided_slice %41 {offsets = [0, 0, 64], sizes = [2, 64, 32], strides = [1, 1, 1]} : vector<2x64x128xbf16> to vector<2x64x32xbf16>
    "tpu.trace_start"() <{level = 10 : i32, message = "bqd,bkd->bqk"}> : () -> ()
    %cst_21 = arith.constant dense<0.000000e+00> : vector<2x64x64xf32>
    %77 = tpu.matmul %74, %75, %cst_21 {dimension_numbers = #tpu.dot_dimension_numbers<[2], [2], [1], [1], [0, 0, 0, 1, 1, 1], [0], [0]>} : vector<2x64x32xbf16>, vector<2x64x32xbf16>, vector<2x64x64xf32> -> vector<2x64x64xf32>
    "tpu.trace_stop"() : () -> ()
    %cst_22 = arith.constant dense<0xFF800000> : vector<2x64xf32>
    %78 = vector.multi_reduction <maximumf>, %77, %cst_22 [2] : vector<2x64x64xf32> to vector<2x64xf32>
    %79 = vector.shape_cast %78 : vector<2x64xf32> to vector<2x64x1xf32>
    %80 = vector.broadcast %79 : vector<2x64x1xf32> to vector<2x64x64xf32>
    %81 = arith.subf %77, %80 : vector<2x64x64xf32>
    %82 = math.exp %81 : vector<2x64x64xf32>
    %cst_23 = arith.constant dense<0.000000e+00> : vector<2x64xf32>
    %83 = vector.multi_reduction <add>, %82, %cst_23 [2] : vector<2x64x64xf32> to vector<2x64xf32>
    %84 = vector.shape_cast %83 : vector<2x64xf32> to vector<2x64x1xf32>
    %85 = tpu.reciprocal %84 : vector<2x64x1xf32> -> vector<2x64x1xf32>
    %86 = vector.broadcast %85 : vector<2x64x1xf32> to vector<2x64x64xf32>
    %87 = arith.mulf %82, %86 : vector<2x64x64xf32>
    %88 = arith.truncf %87 : vector<2x64x64xf32> to vector<2x64x64xbf16>
    "tpu.trace_start"() <{level = 10 : i32, message = "bqk,bkd->bqd"}> : () -> ()
    %cst_24 = arith.constant dense<0.000000e+00> : vector<2x64x32xf32>
    %89 = tpu.matmul %88, %76, %cst_24 {dimension_numbers = #tpu.dot_dimension_numbers<[2], [1], [1], [2], [0, 0, 0, 1, 1, 2], [0], [0]>} : vector<2x64x64xbf16>, vector<2x64x32xbf16>, vector<2x64x32xf32> -> vector<2x64x32xf32>
    "tpu.trace_stop"() : () -> ()
    %90 = vector.extract_strided_slice %35 {offsets = [0, 0, 96], sizes = [2, 64, 32], strides = [1, 1, 1]} : vector<2x64x128xbf16> to vector<2x64x32xbf16>
    %91 = vector.extract_strided_slice %38 {offsets = [0, 0, 96], sizes = [2, 64, 32], strides = [1, 1, 1]} : vector<2x64x128xbf16> to vector<2x64x32xbf16>
    %92 = vector.extract_strided_slice %41 {offsets = [0, 0, 96], sizes = [2, 64, 32], strides = [1, 1, 1]} : vector<2x64x128xbf16> to vector<2x64x32xbf16>
    "tpu.trace_start"() <{level = 10 : i32, message = "bqd,bkd->bqk"}> : () -> ()
    %cst_25 = arith.constant dense<0.000000e+00> : vector<2x64x64xf32>
    %93 = tpu.matmul %90, %91, %cst_25 {dimension_numbers = #tpu.dot_dimension_numbers<[2], [2], [1], [1], [0, 0, 0, 1, 1, 1], [0], [0]>} : vector<2x64x32xbf16>, vector<2x64x32xbf16>, vector<2x64x64xf32> -> vector<2x64x64xf32>
    "tpu.trace_stop"() : () -> ()
    %cst_26 = arith.constant dense<0xFF800000> : vector<2x64xf32>
    %94 = vector.multi_reduction <maximumf>, %93, %cst_26 [2] : vector<2x64x64xf32> to vector<2x64xf32>
    %95 = vector.shape_cast %94 : vector<2x64xf32> to vector<2x64x1xf32>
    %96 = vector.broadcast %95 : vector<2x64x1xf32> to vector<2x64x64xf32>
    %97 = arith.subf %93, %96 : vector<2x64x64xf32>
    %98 = math.exp %97 : vector<2x64x64xf32>
    %cst_27 = arith.constant dense<0.000000e+00> : vector<2x64xf32>
    %99 = vector.multi_reduction <add>, %98, %cst_27 [2] : vector<2x64x64xf32> to vector<2x64xf32>
    %100 = vector.shape_cast %99 : vector<2x64xf32> to vector<2x64x1xf32>
    %101 = tpu.reciprocal %100 : vector<2x64x1xf32> -> vector<2x64x1xf32>
    %102 = vector.broadcast %101 : vector<2x64x1xf32> to vector<2x64x64xf32>
    %103 = arith.mulf %98, %102 : vector<2x64x64xf32>
    %104 = arith.truncf %103 : vector<2x64x64xf32> to vector<2x64x64xbf16>
    "tpu.trace_start"() <{level = 10 : i32, message = "bqk,bkd->bqd"}> : () -> ()
    %cst_28 = arith.constant dense<0.000000e+00> : vector<2x64x32xf32>
    %105 = tpu.matmul %104, %92, %cst_28 {dimension_numbers = #tpu.dot_dimension_numbers<[2], [1], [1], [2], [0, 0, 0, 1, 1, 2], [0], [0]>} : vector<2x64x64xbf16>, vector<2x64x32xbf16>, vector<2x64x32xf32> -> vector<2x64x32xf32>
    "tpu.trace_stop"() : () -> ()
    %106 = tpu.concatenate %57, %73, %89, %105 in 2 : vector<2x64x32xf32>, vector<2x64x32xf32>, vector<2x64x32xf32>, vector<2x64x32xf32> -> vector<2x64x128xf32>
    %107 = vector.shape_cast %106 : vector<2x64x128xf32> to vector<128x128xf32>
    %108 = arith.truncf %107 : vector<128x128xf32> to vector<128x128xbf16>
    %c0_29 = arith.constant 0 : index
    %c0_30 = arith.constant 0 : index
    %109 = vector.load %arg3[%c0_29, %c0_30] : memref<128x128xbf16, #tpu.memory_space<vmem>>, vector<128x128xbf16>
    %cst_31 = arith.constant dense<0.000000e+00> : vector<128x128xf32>
    %110 = tpu.matmul %108, %109, %cst_31 {dimension_numbers = #tpu.dot_dimension_numbers<[1], [0], [0], [1], [0, 0, 1, 1], [], []>} : vector<128x128xbf16>, vector<128x128xbf16>, vector<128x128xf32> -> vector<128x128xf32>
    %c0_32 = arith.constant 0 : index
    %c0_33 = arith.constant 0 : index
    %111 = vector.load %arg4[%c0_32, %c0_33] : memref<1x128xf32, #tpu.memory_space<vmem>>, vector<1x128xf32>
    %112 = vector.shape_cast %111 : vector<1x128xf32> to vector<128xf32>
    %113 = vector.shape_cast %112 : vector<128xf32> to vector<1x128xf32>
    %114 = vector.broadcast %113 : vector<1x128xf32> to vector<128x128xf32>
    %115 = arith.addf %110, %114 : vector<128x128xf32>
    %116 = arith.addf %115, %1 : vector<128x128xf32>
    %117 = vector.shape_cast %116 : vector<128x128xf32> to vector<2x64x128xf32>
    %c0_34 = arith.constant 0 : index
    %c0_35 = arith.constant 0 : index
    %c0_36 = arith.constant 0 : index
    %118 = vector.load %arg7[%c0_34, %c0_35, %c0_36] : memref<2x64x128xf32, #tpu.memory_space<vmem>>, vector<2x64x128xf32>
    tpu.vector_store %arg7[%c0_34, %c0_35, %c0_36], %117 {strides = array<i32>} : memref<2x64x128xf32, #tpu.memory_space<vmem>>, vector<2x64x128xf32>,
    return
  }
  func.func @transform_0(%arg0: i32) -> (i32, i32, i32) {
    %c0_i32 = arith.constant 0 : i32
    %c0_i32_0 = arith.constant 0 : i32
    %c0_i32_1 = arith.constant 0 : i32
    return %arg0, %c0_i32, %c0_i32_0 : i32, i32, i32
  }
  func.func @transform_1(%arg0: i32) -> (i32, i32) {
    %c0_i32 = arith.constant 0 : i32
    %c0_i32_0 = arith.constant 0 : i32
    %c0_i32_1 = arith.constant 0 : i32
    return %c0_i32, %c0_i32_0 : i32, i32
  }
  func.func @transform_2(%arg0: i32) -> (i32, i32) {
    %c0_i32 = arith.constant 0 : i32
    %c0_i32_0 = arith.constant 0 : i32
    %c0_i32_1 = arith.constant 0 : i32
    return %c0_i32, %c0_i32_0 : i32, i32
  }
  func.func @transform_3(%arg0: i32) -> (i32, i32) {
    %c0_i32 = arith.constant 0 : i32
    %c0_i32_0 = arith.constant 0 : i32
    %c0_i32_1 = arith.constant 0 : i32
    return %c0_i32, %c0_i32_0 : i32, i32
  }
  func.func @transform_4(%arg0: i32) -> (i32, i32) {
    %c0_i32 = arith.constant 0 : i32
    %c0_i32_0 = arith.constant 0 : i32
    %c0_i32_1 = arith.constant 0 : i32
    return %c0_i32, %c0_i32_0 : i32, i32
  }
  func.func @transform_5(%arg0: i32) -> (i32, i32) {
    %c0_i32 = arith.constant 0 : i32
    %c0_i32_0 = arith.constant 0 : i32
    %c0_i32_1 = arith.constant 0 : i32
    return %c0_i32, %c0_i32_0 : i32, i32
  }
  func.func @transform_6(%arg0: i32) -> (i32, i32, i32) {
    %c0_i32 = arith.constant 0 : i32
    %c0_i32_0 = arith.constant 0 : i32
    %c0_i32_1 = arith.constant 0 : i32
    return %arg0, %c0_i32, %c0_i32_0 : i32, i32, i32
  }
}

</mosaic_0001>

<llo_original>
// kernel: tpu_custom_call.1
$region0: #{tpu_custom_call.1}
  #allocation0 [shape = 'u32[]', space=smem, size = 0x4, offset = 0x4, fixed_abs, tag = 'smem constant byte address 0x4 - core index']
  #allocation1 [shape = 'u32[144,128]{1,0:T(1,128)}', space=vmem, size = 0x12000, scoped, tag = 'internal scratch']
  %s0 = inlined_call_operand.hbm [shape: f32[4,64,128], index: 0, kind: input, shape index: {}]
  %s1 = inlined_call_operand.hbm [shape: bf16[128,384], index: 1, kind: input, shape index: {}]
  %s2 = inlined_call_operand.hbm [shape: bf16[128,128], index: 2, kind: input, shape index: {}]
  %s3 = inlined_call_operand.vmem [shape: f32[1,128], index: 3, kind: input, shape index: {}]
  %s4 = inlined_call_operand.vmem [shape: f32[1,128], index: 4, kind: input, shape index: {}]
  %s5 = inlined_call_operand.vmem [shape: f32[1,128], index: 5, kind: input, shape index: {}]
  %s6 = inlined_call_operand.hbm [shape: f32[4,64,128], index: 6, kind: output, shape index: {}]
  %s7 = sld [smem:[#allocation0]]
  $region69: #{tpu_custom_call.1} parent=0
    _
  %s9 = ssub.s32 1, %s7
  %s10 = scalar_select 0, %s9, %s7
  $region1: #{tpu_custom_call.1} parent=0
    #allocation2 [shape = 'u8[131072]{0}', space=vmem, size = 0x20000, scoped, tag = 'input window, operand 0']
    #allocation3 [shape = 's32[2]{0}', space=sflag, size = 0x8, scoped, tag = 'scoped memory for tpu_custom_call.1']
    #allocation4 [shape = 's32[2]{0}', space=sflag, size = 0x8, scoped, tag = 'scoped memory for tpu_custom_call.1']
    #allocation5 [shape = 'u8[98304]{0}', space=vmem, size = 0x18000, scoped, tag = 'input window, operand 1, single buffered']
    #allocation6 [shape = 's32[1]{0}', space=sflag, size = 0x4, scoped, tag = 'scoped memory for tpu_custom_call.1']
    #allocation7 [shape = 'u8[32768]{0}', space=vmem, size = 0x8000, scoped, tag = 'input window, operand 2, single buffered']
    #allocation8 [shape = 'u8[131072]{0}', space=vmem, size = 0x20000, scoped, tag = 'output window, operand 0']
    %11 = vsyncpa [#allocation3], 0
    %s12 = scalar_lea.sflag [#allocation3], 1
    %13 = vsyncpa %s12, 0
    %14 = vsyncpa [#allocation6], 0
    %15 = vsyncpa [#allocation4], 0
    %s16 = scalar_lea.sflag [#allocation4], 1
    %17 = vsyncpa %s16, 0
    loop: start=0, step=1, limit=4
    $region2: #{tpu_custom_call.1} parent=1 // loop_pre_header
      _
    $region3: #{tpu_custom_call.1} parent=1 // loop_header
      %s19 = sphi 0, %s23
      %p20 = scmp.ge.s32.totalorder %s19, 4
      %s29 = sphi 0, %s31
      %s32 = sphi 0, %s29
      %s33 = sphi 0, %s32
      %s49 = sphi 0, %s33
      %s53 = sphi 0, %s53
      %s55 = sphi 0, %s53
      %s56 = sphi 0, %s55
      %s70 = sphi 0, %s56
      %s74 = sphi 0, %s74
      %s76 = sphi 0, %s74
      %s77 = sphi 0, %s76
      %s91 = sphi 0, %s77
      %s95 = sphi 0, %s95
      %s97 = sphi 0, %s95
      %s98 = sphi 0, %s97
      %s112 = sphi 0, %s98
      %s116 = sphi 0, %s116
      %s118 = sphi 0, %s116
      %s119 = sphi 0, %s118
      %s133 = sphi 0, %s119
      %s137 = sphi 0, %s137
      %s139 = sphi 0, %s137
      %s140 = sphi 0, %s139
      %s154 = sphi 0, %s140
      %s160 = sphi 0, %s162
      %s163 = sphi 0, %s160
      %s164 = sphi 0, %s163
      %s180 = sphi 0, %s164
    $region4: #{tpu_custom_call.1} parent=1 // loop_header_branch
      %22 = sbr.rel (%p20) target = $region8
    $region5: #{tpu_custom_call.1} parent=1 // loop_body
      %s24 = ssub.s32 %s19, 1
      %s25 = ssub.s32 %s19, 2
      %s26 = sadd.s32 %s19, 1
      %s27 = ssub.s32 %s19, %s26
      %p28 = scmp.eq.s32.totalorder %s27, 0
      %s30 = sadd.s32 %s29, 1
      %s31 = scalar_select %p28, %s29, %s30
      %p34 = pneg %p28
      %p35 = scmp.eq.s32.totalorder %s19, 1
      %p36 = por %p34, %p35
      %p37 = scmp.ne.s32.totalorder %s29, %s32
      %p38 = scmp.eq.s32.totalorder %s19, 0
      %p39 = por %p37, %p38
      %p40 = scmp.ne.s32.totalorder %s29, %s32
      %p41 = scmp.eq.s32.totalorder %s24, 1
      %p42 = por %p40, %p41
      %p43 = scmp.ne.s32.totalorder %s32, %s33
      %p44 = scmp.eq.s32.totalorder %s24, 0
      %p45 = por %p43, %p44
      %p46 = scmp.ne.s32.totalorder %s32, %s33
      %p47 = scmp.eq.s32.totalorder %s25, 1
      %p48 = por %p46, %p47
      %p50 = scmp.ne.s32.totalorder %s33, %s49
      %p51 = scmp.eq.s32.totalorder %s25, 0
      %p52 = por %p50, %p51
      %s54 = sadd.s32 %s53, 1
      %p57 = scmp.eq.s32.totalorder %s19, 1
      %p58 = scmp.ne.s32.totalorder %s53, %s55
      %p59 = scmp.eq.s32.totalorder %s19, 0
      %p60 = por %p58, %p59
      %p61 = scmp.ne.s32.totalorder %s53, %s55
      %p62 = scmp.eq.s32.totalorder %s24, 1
      %p63 = por %p61, %p62
      %p64 = scmp.ne.s32.totalorder %s55, %s56
      %p65 = scmp.eq.s32.totalorder %s24, 0
      %p66 = por %p64, %p65
      %p67 = scmp.ne.s32.totalorder %s55, %s56
      %p68 = scmp.eq.s32.totalorder %s25, 1
      %p69 = por %p67, %p68
      %p71 = scmp.ne.s32.totalorder %s56, %s70
      %p72 = scmp.eq.s32.totalorder %s25, 0
      %p73 = por %p71, %p72
      %s75 = sadd.s32 %s74, 1
      %p78 = scmp.eq.s32.totalorder %s19, 1
      %p79 = scmp.ne.s32.totalorder %s74, %s76
      %p80 = scmp.eq.s32.totalorder %s19, 0
      %p81 = por %p79, %p80
      %p82 = scmp.ne.s32.totalorder %s74, %s76
      %p83 = scmp.eq.s32.totalorder %s24, 1
      %p84 = por %p82, %p83
      %p85 = scmp.ne.s32.totalorder %s76, %s77
      %p86 = scmp.eq.s32.totalorder %s24, 0
      %p87 = por %p85, %p86
      %p88 = scmp.ne.s32.totalorder %s76, %s77
      %p89 = scmp.eq.s32.totalorder %s25, 1
      %p90 = por %p88, %p89
      %p92 = scmp.ne.s32.totalorder %s77, %s91
      %p93 = scmp.eq.s32.totalorder %s25, 0
      %p94 = por %p92, %p93
      %s96 = sadd.s32 %s95, 1
      %p99 = scmp.eq.s32.totalorder %s19, 1
      %p100 = scmp.ne.s32.totalorder %s95, %s97
      %p101 = scmp.eq.s32.totalorder %s19, 0
      %p102 = por %p100, %p101
      %p103 = scmp.ne.s32.totalorder %s95, %s97
      %p104 = scmp.eq.s32.totalorder %s24, 1
      %p105 = por %p103, %p104
      %p106 = scmp.ne.s32.totalorder %s97, %s98
      %p107 = scmp.eq.s32.totalorder %s24, 0
      %p108 = por %p106, %p107
      %p109 = scmp.ne.s32.totalorder %s97, %s98
      %p110 = scmp.eq.s32.totalorder %s25, 1
      %p111 = por %p109, %p110
      %p113 = scmp.ne.s32.totalorder %s98, %s112
      %p114 = scmp.eq.s32.totalorder %s25, 0
      %p115 = por %p113, %p114
      %s117 = sadd.s32 %s116, 1
      %p120 = scmp.eq.s32.totalorder %s19, 1
      %p121 = scmp.ne.s32.totalorder %s116, %s118
      %p122 = scmp.eq.s32.totalorder %s19, 0
      %p123 = por %p121, %p122
      %p124 = scmp.ne.s32.totalorder %s116, %s118
      %p125 = scmp.eq.s32.totalorder %s24, 1
      %p126 = por %p124, %p125
      %p127 = scmp.ne.s32.totalorder %s118, %s119
      %p128 = scmp.eq.s32.totalorder %s24, 0
      %p129 = por %p127, %p128
      %p130 = scmp.ne.s32.totalorder %s118, %s119
      %p131 = scmp.eq.s32.totalorder %s25, 1
      %p132 = por %p130, %p131
      %p134 = scmp.ne.s32.totalorder %s119, %s133
      %p135 = scmp.eq.s32.totalorder %s25, 0
      %p136 = por %p134, %p135
      %s138 = sadd.s32 %s137, 1
      %p141 = scmp.eq.s32.totalorder %s19, 1
      %p142 = scmp.ne.s32.totalorder %s137, %s139
      %p143 = scmp.eq.s32.totalorder %s19, 0
      %p144 = por %p142, %p143
      %p145 = scmp.ne.s32.totalorder %s137, %s139
      %p146 = scmp.eq.s32.totalorder %s24, 1
      %p147 = por %p145, %p146
      %p148 = scmp.ne.s32.totalorder %s139, %s140
      %p149 = scmp.eq.s32.totalorder %s24, 0
      %p150 = por %p148, %p149
      %p151 = scmp.ne.s32.totalorder %s139, %s140
      %p152 = scmp.eq.s32.totalorder %s25, 1
      %p153 = por %p151, %p152
      %p155 = scmp.ne.s32.totalorder %s140, %s154
      %p156 = scmp.eq.s32.totalorder %s25, 0
      %p157 = por %p155, %p156
      %s158 = ssub.s32 %s19, %s26
      %p159 = scmp.eq.s32.totalorder %s158, 0
      %s161 = sadd.s32 %s160, 1
      %s162 = scalar_select %p159, %s160, %s161
      %p165 = pneg %p159
      %p166 = scmp.eq.s32.totalorder %s19, 1
      %p167 = por %p165, %p166
      %p168 = scmp.ne.s32.totalorder %s160, %s163
      %p169 = scmp.eq.s32.totalorder %s19, 0
      %p170 = por %p168, %p169
      %p171 = scmp.ne.s32.totalorder %s160, %s163
      %p172 = scmp.eq.s32.totalorder %s24, 1
      %p173 = por %p171, %p172
      %p174 = scmp.ne.s32.totalorder %s163, %s164
      %p175 = scmp.eq.s32.totalorder %s24, 0
      %p176 = por %p174, %p175
      %p177 = scmp.ne.s32.totalorder %s163, %s164
      %p178 = scmp.eq.s32.totalorder %s25, 1
      %p179 = por %p177, %p178
      %p181 = scmp.ne.s32.totalorder %s164, %s180
      %p182 = scmp.eq.s32.totalorder %s25, 0
      %p183 = por %p181, %p182
      %p184 = scmp.le.s32.totalorder 1, %s19
      %p185 = scmp.lt.s32.totalorder %s19, 3
      %p186 = pnand %p184, %p185
      %p187 = pneg %p186
      // Predicated region
      $region9: #{tpu_custom_call.1} parent=5 // pred_check
        _
      $region10: #{tpu_custom_call.1} parent=5 // pred_check_branch
        %189 = sbr.rel (%p186) target = $region12
      $region11: #{tpu_custom_call.1} parent=5 // pred_region
        %s190 = ssub.s32 %s19, 1
        // Predicated region
        $region13: #{tpu_custom_call.1} parent=11 // pred_check
          %p191 = pneg %p66
        $region14: #{tpu_custom_call.1} parent=11 // pred_check_branch
          %193 = sbr.rel (%p191) target = $region16
        $region15: #{tpu_custom_call.1} parent=11 // pred_region
          %s195 = ssub.s32 3072, 3072
          %196 = vsyncadd [#allocation6], %s195
          %s197 = sshll.u32 [#allocation5], 4
          %s198 = int_to_ptr.vmem [resolvable:$true] %s197
          %203 = dma.hbm_to_vmem [thread:$0]  %s1, 3072, %s198, [#allocation6], 192, 192, 12
        $region16: #{tpu_custom_call.1} parent=11 // pred_fallthru
          _
        // Predicated region
        $region17: #{tpu_custom_call.1} parent=11 // pred_check
          %p204 = pneg %p87
        $region18: #{tpu_custom_call.1} parent=11 // pred_check_branch
          %206 = sbr.rel (%p204) target = $region20
        $region19: #{tpu_custom_call.1} parent=11 // pred_region
          %s208 = ssub.s32 1024, 1024
          %209 = vsyncadd [#allocation6], %s208
          %s210 = sshll.u32 [#allocation7], 4
          %s211 = int_to_ptr.vmem [resolvable:$true] %s210
          %216 = dma.hbm_to_vmem [thread:$0]  %s2, 1024, %s211, [#allocation6], 64, 64, 4
        $region20: #{tpu_custom_call.1} parent=11 // pred_fallthru
          _
        // Predicated region
        $region21: #{tpu_custom_call.1} parent=11 // pred_check
          %p217 = pneg %p108
        $region22: #{tpu_custom_call.1} parent=11 // pred_check_branch
          %219 = sbr.rel (%p217) target = $region24
        $region23: #{tpu_custom_call.1} parent=11 // pred_region
          _
        $region24: #{tpu_custom_call.1} parent=11 // pred_fallthru
          _
        // Predicated region
        $region25: #{tpu_custom_call.1} parent=11 // pred_check
          %p220 = pneg %p129
        $region26: #{tpu_custom_call.1} parent=11 // pred_check_branch
          %222 = sbr.rel (%p220) target = $region28
        $region27: #{tpu_custom_call.1} parent=11 // pred_region
          _
        $region28: #{tpu_custom_call.1} parent=11 // pred_fallthru
          _
        // Predicated region
        $region29: #{tpu_custom_call.1} parent=11 // pred_check
          %p223 = pneg %p150
        $region30: #{tpu_custom_call.1} parent=11 // pred_check_branch
          %225 = sbr.rel (%p223) target = $region32
        $region31: #{tpu_custom_call.1} parent=11 // pred_region
          _
        $region32: #{tpu_custom_call.1} parent=11 // pred_fallthru
          _
      $region12: #{tpu_custom_call.1} parent=5 // pred_fallthru
        _
      %p226 = scmp.lt.s32.totalorder %s19, 2
      // Predicated region
      $region33: #{tpu_custom_call.1} parent=5 // pred_check
        %p227 = pneg %p226
      $region34: #{tpu_custom_call.1} parent=5 // pred_check_branch
        %229 = sbr.rel (%p227) target = $region36
      $region35: #{tpu_custom_call.1} parent=5 // pred_region
        // Predicated region
        $region37: #{tpu_custom_call.1} parent=35 // pred_check
          %p230 = pneg %p39
        $region38: #{tpu_custom_call.1} parent=35 // pred_check_branch
          %232 = sbr.rel (%p230) target = $region40
        $region39: #{tpu_custom_call.1} parent=35 // pred_region
          %s233 = sand.u32 %s29, 1
          %s234 = scalar_lea.sflag [#allocation3], %s233
          %s235 = sand.u32 %s29, 1
          %s236 = smul.addr %s235, 128
          %s237 = scalar_lea.vmem [#allocation2], %s236
          %s238 = smul.u32 2, %s19
          %s240 = ssub.s32 2048, 2048
          %241 = vsyncadd %s234, %s240
          %s242 = smul.addr %s238, 8
          %s243 = smul.addr %s242, 128
          %s244 = scalar_lea.hbm %s0, %s243
          %s245 = sshll.u32 %s237, 4
          %s246 = int_to_ptr.vmem [resolvable:$true] %s245
          %251 = dma.hbm_to_vmem [thread:$0]  %s244, 2048, %s246, %s234, 128, 128, 8
        $region40: #{tpu_custom_call.1} parent=35 // pred_fallthru
          _
      $region36: #{tpu_custom_call.1} parent=5 // pred_fallthru
        _
      %p252 = scmp.le.s32.totalorder 1, %s19
      %p253 = scmp.lt.s32.totalorder %s19, 3
      %p254 = pnand %p252, %p253
      %p255 = pneg %p254
      // Predicated region
      $region41: #{tpu_custom_call.1} parent=5 // pred_check
        _
      $region42: #{tpu_custom_call.1} parent=5 // pred_check_branch
        %257 = sbr.rel (%p254) target = $region44
      $region43: #{tpu_custom_call.1} parent=5 // pred_region
        %s258 = ssub.s32 %s19, 1
        %s259 = sand.u32 %s32, 1
        %s260 = scalar_lea.sflag [#allocation3], %s259
        %s261 = sand.u32 %s32, 1
        %s262 = smul.addr %s261, 128
        %s263 = scalar_lea.vmem [#allocation2], %s262
        // Predicated region
        $region45: #{tpu_custom_call.1} parent=43 // pred_check
          %p264 = pneg %p45
        $region46: #{tpu_custom_call.1} parent=43 // pred_check_branch
          %266 = sbr.rel (%p264) target = $region48
        $region47: #{tpu_custom_call.1} parent=43 // pred_region
          %267 = dma.done %s260, 2048
        $region48: #{tpu_custom_call.1} parent=43 // pred_fallthru
          _
        // Predicated region
        $region49: #{tpu_custom_call.1} parent=43 // pred_check
          %p268 = pneg %p66
        $region50: #{tpu_custom_call.1} parent=43 // pred_check_branch
          %270 = sbr.rel (%p268) target = $region52
        $region51: #{tpu_custom_call.1} parent=43 // pred_region
          %271 = dma.done [#allocation6], 3072
        $region52: #{tpu_custom_call.1} parent=43 // pred_fallthru
          _
        // Predicated region
        $region53: #{tpu_custom_call.1} parent=43 // pred_check
          %p272 = pneg %p87
        $region54: #{tpu_custom_call.1} parent=43 // pred_check_branch
          %274 = sbr.rel (%p272) target = $region56
        $region55: #{tpu_custom_call.1} parent=43 // pred_region
          %275 = dma.done [#allocation6], 1024
        $region56: #{tpu_custom_call.1} parent=43 // pred_fallthru
          _
        %s276 = sand.u32 %s32, 1
        %s277 = scalar_lea.sflag [#allocation3], %s276
        %s278 = sand.u32 %s32, 1
        %s279 = smul.addr %s278, 128
        %s280 = scalar_lea.vmem [#allocation2], %s279
        %p281 = pneg %p45
        %p282 = pneg %p42
        %p283 = pneg %p66
        %p284 = pneg %p63
        %p285 = pneg %p87
        %p286 = pneg %p84
        %p287 = pneg %p108
        %p288 = pneg %p105
        %p289 = pneg %p129
        %p290 = pneg %p126
        %p291 = pneg %p150
        %p292 = pneg %p147
        %p293 = pneg %p176
        %p294 = pneg %p173
        %s295 = sand.u32 %s163, 1
        %s296 = scalar_lea.sflag [#allocation4], %s295
        %s297 = sand.u32 %s163, 1
        %s298 = smul.addr %s297, 128
        %s299 = scalar_lea.vmem [#allocation8], %s298
        %s300 = smul.u32 2, %s24
        %s301 = smul.u32 2, %s24
        %v303 = vld [vmem:[%s263] sm:$0xff]
        %v304 = vld [vmem:[%s263 + $0x8] sm:$0xff]
        %v305 = vld [vmem:[%s263 + $0x10] sm:$0xff]
        %v306 = vld [vmem:[%s263 + $0x18] sm:$0xff]
        %v307 = vld [vmem:[%s263 + $0x20] sm:$0xff]
        %v308 = vld [vmem:[%s263 + $0x28] sm:$0xff]
        %v309 = vld [vmem:[%s263 + $0x30] sm:$0xff]
        %v310 = vld [vmem:[%s263 + $0x38] sm:$0xff]
        %v311 = vld [vmem:[%s263 + $0x40] sm:$0xff]
        %v312 = vld [vmem:[%s263 + $0x48] sm:$0xff]
        %v313 = vld [vmem:[%s263 + $0x50] sm:$0xff]
        %v314 = vld [vmem:[%s263 + $0x58] sm:$0xff]
        %v315 = vld [vmem:[%s263 + $0x60] sm:$0xff]
        %v316 = vld [vmem:[%s263 + $0x68] sm:$0xff]
        %v317 = vld [vmem:[%s263 + $0x70] sm:$0xff]
        %v318 = vld [vmem:[%s263 + $0x78] sm:$0xff]
        %319 = vadd.xlane.f32.xlu0 %v303
        %v320 = vpop.xlane.xlu0 %319
        %321 = vadd.xlane.f32.xlu0 %v304
        %v322 = vpop.xlane.xlu0 %321
        %323 = vadd.xlane.f32.xlu0 %v305
        %v324 = vpop.xlane.xlu0 %323
        %325 = vadd.xlane.f32.xlu0 %v306
        %v326 = vpop.xlane.xlu0 %325
        %327 = vadd.xlane.f32.xlu0 %v307
        %v328 = vpop.xlane.xlu0 %327
        %329 = vadd.xlane.f32.xlu0 %v308
        %v330 = vpop.xlane.xlu0 %329
        %331 = vadd.xlane.f32.xlu0 %v309
        %v332 = vpop.xlane.xlu0 %331
        %333 = vadd.xlane.f32.xlu0 %v310
        %v334 = vpop.xlane.xlu0 %333
        %335 = vadd.xlane.f32.xlu0 %v311
        %v336 = vpop.xlane.xlu0 %335
        %337 = vadd.xlane.f32.xlu0 %v312
        %v338 = vpop.xlane.xlu0 %337
        %339 = vadd.xlane.f32.xlu0 %v313
        %v340 = vpop.xlane.xlu0 %339
        %341 = vadd.xlane.f32.xlu0 %v314
        %v342 = vpop.xlane.xlu0 %341
        %343 = vadd.xlane.f32.xlu0 %v315
        %v344 = vpop.xlane.xlu0 %343
        %345 = vadd.xlane.f32.xlu0 %v316
        %v346 = vpop.xlane.xlu0 %345
        %347 = vadd.xlane.f32.xlu0 %v317
        %v348 = vpop.xlane.xlu0 %347
        %349 = vadd.xlane.f32.xlu0 %v318
        %v350 = vpop.xlane.xlu0 %349
        %v351 = vrcp.pop 128.0
        %v352 = vmul.f32 %v320, %v351
        %v353 = vmul.f32 %v322, %v351
        %v354 = vmul.f32 %v324, %v351
        %v355 = vmul.f32 %v326, %v351
        %v356 = vmul.f32 %v328, %v351
        %v357 = vmul.f32 %v330, %v351
        %v358 = vmul.f32 %v332, %v351
        %v359 = vmul.f32 %v334, %v351
        %v360 = vmul.f32 %v336, %v351
        %v361 = vmul.f32 %v338, %v351
        %v362 = vmul.f32 %v340, %v351
        %v363 = vmul.f32 %v342, %v351
        %v364 = vmul.f32 %v344, %v351
        %v365 = vmul.f32 %v346, %v351
        %v366 = vmul.f32 %v348, %v351
        %v367 = vmul.f32 %v350, %v351
        %v368 = vsub.f32 %v303, %v352
        %v369 = vsub.f32 %v304, %v353
        %v370 = vsub.f32 %v305, %v354
        %v371 = vsub.f32 %v306, %v355
        %v372 = vsub.f32 %v307, %v356
        %v373 = vsub.f32 %v308, %v357
        %v374 = vsub.f32 %v309, %v358
        %v375 = vsub.f32 %v310, %v359
        %v376 = vsub.f32 %v311, %v360
        %v377 = vsub.f32 %v312, %v361
        %v378 = vsub.f32 %v313, %v362
        %v379 = vsub.f32 %v314, %v363
        %v380 = vsub.f32 %v315, %v364
        %v381 = vsub.f32 %v316, %v365
        %v382 = vsub.f32 %v317, %v366
        %v383 = vsub.f32 %v318, %v367
        %v384 = vmul.f32 %v368, %v368
        %v385 = vmul.f32 %v369, %v369
        %v386 = vmul.f32 %v370, %v370
        %v387 = vmul.f32 %v371, %v371
        %v388 = vmul.f32 %v372, %v372
        %v389 = vmul.f32 %v373, %v373
        %v390 = vmul.f32 %v374, %v374
        %v391 = vmul.f32 %v375, %v375
        %v392 = vmul.f32 %v376, %v376
        %v393 = vmul.f32 %v377, %v377
        %v394 = vmul.f32 %v378, %v378
        %v395 = vmul.f32 %v379, %v379
        %v396 = vmul.f32 %v380, %v380
        %v397 = vmul.f32 %v381, %v381
        %v398 = vmul.f32 %v382, %v382
        %v399 = vmul.f32 %v383, %v383
        %400 = vadd.xlane.f32.xlu0 %v384
        %v401 = vpop.xlane.xlu0 %400
        %402 = vadd.xlane.f32.xlu0 %v385
        %v403 = vpop.xlane.xlu0 %402
        %404 = vadd.xlane.f32.xlu0 %v386
        %v405 = vpop.xlane.xlu0 %404
        %406 = vadd.xlane.f32.xlu0 %v387
        %v407 = vpop.xlane.xlu0 %406
        %408 = vadd.xlane.f32.xlu0 %v388
        %v409 = vpop.xlane.xlu0 %408
        %410 = vadd.xlane.f32.xlu0 %v389
        %v411 = vpop.xlane.xlu0 %410
        %412 = vadd.xlane.f32.xlu0 %v390
        %v413 = vpop.xlane.xlu0 %412
        %414 = vadd.xlane.f32.xlu0 %v391
        %v415 = vpop.xlane.xlu0 %414
        %416 = vadd.xlane.f32.xlu0 %v392
        %v417 = vpop.xlane.xlu0 %416
        %418 = vadd.xlane.f32.xlu0 %v393
        %v419 = vpop.xlane.xlu0 %418
        %420 = vadd.xlane.f32.xlu0 %v394
        %v421 = vpop.xlane.xlu0 %420
        %422 = vadd.xlane.f32.xlu0 %v395
        %v423 = vpop.xlane.xlu0 %422
        %424 = vadd.xlane.f32.xlu0 %v396
        %v425 = vpop.xlane.xlu0 %424
        %426 = vadd.xlane.f32.xlu0 %v397
        %v427 = vpop.xlane.xlu0 %426
        %428 = vadd.xlane.f32.xlu0 %v398
        %v429 = vpop.xlane.xlu0 %428
        %430 = vadd.xlane.f32.xlu0 %v399
        %v431 = vpop.xlane.xlu0 %430
        %v432 = vmul.f32 %v401, %v351
        %v433 = vmul.f32 %v403, %v351
        %v434 = vmul.f32 %v405, %v351
        %v435 = vmul.f32 %v407, %v351
        %v436 = vmul.f32 %v409, %v351
        %v437 = vmul.f32 %v411, %v351
        %v438 = vmul.f32 %v413, %v351
        %v439 = vmul.f32 %v415, %v351
        %v440 = vmul.f32 %v417, %v351
        %v441 = vmul.f32 %v419, %v351
        %v442 = vmul.f32 %v421, %v351
        %v443 = vmul.f32 %v423, %v351
        %v444 = vmul.f32 %v425, %v351
        %v445 = vmul.f32 %v427, %v351
        %v446 = vmul.f32 %v429, %v351
        %v447 = vmul.f32 %v431, %v351
        %v448 = vadd.f32 %v432, 1e-05
        %v449 = vadd.f32 %v433, 1e-05
        %v450 = vadd.f32 %v434, 1e-05
        %v451 = vadd.f32 %v435, 1e-05
        %v452 = vadd.f32 %v436, 1e-05
        %v453 = vadd.f32 %v437, 1e-05
        %v454 = vadd.f32 %v438, 1e-05
        %v455 = vadd.f32 %v439, 1e-05
        %v456 = vadd.f32 %v440, 1e-05
        %v457 = vadd.f32 %v441, 1e-05
        %v458 = vadd.f32 %v442, 1e-05
        %v459 = vadd.f32 %v443, 1e-05
        %v460 = vadd.f32 %v444, 1e-05
        %v461 = vadd.f32 %v445, 1e-05
        %v462 = vadd.f32 %v446, 1e-05
        %v463 = vadd.f32 %v447, 1e-05
        %v464 = vrsqrt.pop %v448
        %v465 = vrsqrt.pop %v449
        %v466 = vrsqrt.pop %v450
        %v467 = vrsqrt.pop %v451
        %v468 = vrsqrt.pop %v452
        %v469 = vrsqrt.pop %v453
        %v470 = vrsqrt.pop %v454
        %v471 = vrsqrt.pop %v455
        %v472 = vrsqrt.pop %v456
        %v473 = vrsqrt.pop %v457
        %v474 = vrsqrt.pop %v458
        %v475 = vrsqrt.pop %v459
        %v476 = vrsqrt.pop %v460
        %v477 = vrsqrt.pop %v461
        %v478 = vrsqrt.pop %v462
        %v479 = vrsqrt.pop %v463
        %v480 = vmul.f32 %v368, %v464
        %v481 = vmul.f32 %v369, %v465
        %v482 = vmul.f32 %v370, %v466
        %v483 = vmul.f32 %v371, %v467
        %v484 = vmul.f32 %v372, %v468
        %v485 = vmul.f32 %v373, %v469
        %v486 = vmul.f32 %v374, %v470
        %v487 = vmul.f32 %v375, %v471
        %v488 = vmul.f32 %v376, %v472
        %v489 = vmul.f32 %v377, %v473
        %v490 = vmul.f32 %v378, %v474
        %v491 = vmul.f32 %v379, %v475
        %v492 = vmul.f32 %v380, %v476
        %v493 = vmul.f32 %v381, %v477
        %v494 = vmul.f32 %v382, %v478
        %v495 = vmul.f32 %v383, %v479
        %v496 = vld [vmem:[%s4] sm:$0x1]
        %v498 = vlaneseq
        %v499 = vshrl.u32 %v498, 7
        %v500 = vsub.s32 0, %v499
        %v501 = vrot.slane %v496, %v500
        %v503 = vmul.f32 %v480, %v501
        %v504 = vmul.f32 %v481, %v501
        %v505 = vmul.f32 %v482, %v501
        %v506 = vmul.f32 %v483, %v501
        %v507 = vmul.f32 %v484, %v501
        %v508 = vmul.f32 %v485, %v501
        %v509 = vmul.f32 %v486, %v501
        %v510 = vmul.f32 %v487, %v501
        %v511 = vmul.f32 %v488, %v501
        %v512 = vmul.f32 %v489, %v501
        %v513 = vmul.f32 %v490, %v501
        %v514 = vmul.f32 %v491, %v501
        %v515 = vmul.f32 %v492, %v501
        %v516 = vmul.f32 %v493, %v501
        %v517 = vmul.f32 %v494, %v501
        %v518 = vmul.f32 %v495, %v501
        %v519 = vld [vmem:[%s5] sm:$0x1]
        %v521 = vlaneseq
        %v522 = vshrl.u32 %v521, 7
        %v523 = vsub.s32 0, %v522
        %v524 = vrot.slane %v519, %v523
        %v526 = vadd.f32 %v503, %v524
        %v527 = vadd.f32 %v504, %v524
        %v528 = vadd.f32 %v505, %v524
        %v529 = vadd.f32 %v506, %v524
        %v530 = vadd.f32 %v507, %v524
        %v531 = vadd.f32 %v508, %v524
        %v532 = vadd.f32 %v509, %v524
        %v533 = vadd.f32 %v510, %v524
        %v534 = vadd.f32 %v511, %v524
        %v535 = vadd.f32 %v512, %v524
        %v536 = vadd.f32 %v513, %v524
        %v537 = vadd.f32 %v514, %v524
        %v538 = vadd.f32 %v515, %v524
        %v539 = vadd.f32 %v516, %v524
        %v540 = vadd.f32 %v517, %v524
        %v541 = vadd.f32 %v518, %v524
        %v542 = vpack.c.bf16 %v527, %v526
        %v543 = vpack.c.bf16 %v529, %v528
        %v544 = vpack.c.bf16 %v531, %v530
        %v545 = vpack.c.bf16 %v533, %v532
        %v546 = vpack.c.bf16 %v535, %v534
        %v547 = vpack.c.bf16 %v537, %v536
        %v548 = vpack.c.bf16 %v539, %v538
        %v549 = vpack.c.bf16 %v541, %v540
        %v550 = vld [vmem:[#allocation5] sm:$0xff]
        %v551 = vld [vmem:[#allocation5 + $0x8] sm:$0xf]
        %v552 = vld [vmem:[#allocation5 + $0xc] sm:$0xff]
        %v553 = vld [vmem:[#allocation5 + $0x14] sm:$0xf]
        %v554 = vld [vmem:[#allocation5 + $0x18] sm:$0xff]
        %v555 = vld [vmem:[#allocation5 + $0x20] sm:$0xf]
        %v556 = vld [vmem:[#allocation5 + $0x24] sm:$0xff]
        %v557 = vld [vmem:[#allocation5 + $0x2c] sm:$0xf]
        %v558 = vld [vmem:[#allocation5 + $0x30] sm:$0xff]
        %v559 = vld [vmem:[#allocation5 + $0x38] sm:$0xf]
        %v560 = vld [vmem:[#allocation5 + $0x3c] sm:$0xff]
        %v561 = vld [vmem:[#allocation5 + $0x44] sm:$0xf]
        %v562 = vld [vmem:[#allocation5 + $0x48] sm:$0xff]
        %v563 = vld [vmem:[#allocation5 + $0x50] sm:$0xf]
        %v564 = vld [vmem:[#allocation5 + $0x54] sm:$0xff]
        %v565 = vld [vmem:[#allocation5 + $0x5c] sm:$0xf]
        %v566 = vld [vmem:[#allocation5 + $0x60] sm:$0xff]
        %v567 = vld [vmem:[#allocation5 + $0x68] sm:$0xf]
        %v568 = vld [vmem:[#allocation5 + $0x6c] sm:$0xff]
        %v569 = vld [vmem:[#allocation5 + $0x74] sm:$0xf]
        %v570 = vld [vmem:[#allocation5 + $0x78] sm:$0xff]
        %v571 = vld [vmem:[#allocation5 + $0x80] sm:$0xf]
        %v572 = vld [vmem:[#allocation5 + $0x84] sm:$0xff]
        %v573 = vld [vmem:[#allocation5 + $0x8c] sm:$0xf]
        %v574 = vld [vmem:[#allocation5 + $0x90] sm:$0xff]
        %v575 = vld [vmem:[#allocation5 + $0x98] sm:$0xf]
        %v576 = vld [vmem:[#allocation5 + $0x9c] sm:$0xff]
        %v577 = vld [vmem:[#allocation5 + $0xa4] sm:$0xf]
        %v578 = vld [vmem:[#allocation5 + $0xa8] sm:$0xff]
        %v579 = vld [vmem:[#allocation5 + $0xb0] sm:$0xf]
        %v580 = vld [vmem:[#allocation5 + $0xb4] sm:$0xff]
        %v581 = vld [vmem:[#allocation5 + $0xbc] sm:$0xf]
        %v614 = vunpack.c.l.b16 %v550
        %v615 = vunpack.c.h.b16 %v550
        %v616 = vunpack.c.l.b16 %v551
        %v617 = vunpack.c.l.b16 %v552
        %v618 = vunpack.c.h.b16 %v552
        %v619 = vunpack.c.l.b16 %v553
        %v620 = vunpack.c.l.b16 %v554
        %v621 = vunpack.c.h.b16 %v554
        %v622 = vunpack.c.l.b16 %v555
        %v623 = vunpack.c.l.b16 %v556
        %v624 = vunpack.c.h.b16 %v556
        %v625 = vunpack.c.l.b16 %v557
        %v626 = vunpack.c.l.b16 %v558
        %v627 = vunpack.c.h.b16 %v558
        %v628 = vunpack.c.l.b16 %v559
        %v629 = vunpack.c.l.b16 %v560
        %v630 = vunpack.c.h.b16 %v560
        %v631 = vunpack.c.l.b16 %v561
        %v632 = vunpack.c.l.b16 %v562
        %v633 = vunpack.c.h.b16 %v562
        %v634 = vunpack.c.l.b16 %v563
        %v635 = vunpack.c.l.b16 %v564
        %v636 = vunpack.c.h.b16 %v564
        %v637 = vunpack.c.l.b16 %v565
        %v638 = vunpack.c.l.b16 %v566
        %v639 = vunpack.c.h.b16 %v566
        %v640 = vunpack.c.l.b16 %v567
        %v641 = vunpack.c.l.b16 %v568
        %v642 = vunpack.c.h.b16 %v568
        %v643 = vunpack.c.l.b16 %v569
        %v644 = vunpack.c.l.b16 %v570
        %v645 = vunpack.c.h.b16 %v570
        %v646 = vunpack.c.l.b16 %v571
        %v647 = vunpack.c.l.b16 %v572
        %v648 = vunpack.c.h.b16 %v572
        %v649 = vunpack.c.l.b16 %v573
        %v650 = vunpack.c.l.b16 %v574
        %v651 = vunpack.c.h.b16 %v574
        %v652 = vunpack.c.l.b16 %v575
        %v653 = vunpack.c.l.b16 %v576
        %v654 = vunpack.c.h.b16 %v576
        %v655 = vunpack.c.l.b16 %v577
        %v656 = vunpack.c.l.b16 %v578
        %v657 = vunpack.c.h.b16 %v578
        %v658 = vunpack.c.l.b16 %v579
        %v659 = vunpack.c.l.b16 %v580
        %v660 = vunpack.c.h.b16 %v580
        %v661 = vunpack.c.l.b16 %v581
        %v662 = vpack.c.b16 %v617, %v614
        %v663 = vpack.c.b16 %v618, %v615
        %v664 = vpack.c.b16 %v619, %v616
        %v665 = vpack.c.b16 %v623, %v620
        %v666 = vpack.c.b16 %v624, %v621
        %v667 = vpack.c.b16 %v625, %v622
        %v668 = vpack.c.b16 %v629, %v626
        %v669 = vpack.c.b16 %v630, %v627
        %v670 = vpack.c.b16 %v631, %v628
        %v671 = vpack.c.b16 %v635, %v632
        %v672 = vpack.c.b16 %v636, %v633
        %v673 = vpack.c.b16 %v637, %v634
        %v674 = vpack.c.b16 %v641, %v638
        %v675 = vpack.c.b16 %v642, %v639
        %v676 = vpack.c.b16 %v643, %v640
        %v677 = vpack.c.b16 %v647, %v644
        %v678 = vpack.c.b16 %v648, %v645
        %v679 = vpack.c.b16 %v649, %v646
        %v680 = vpack.c.b16 %v653, %v650
        %v681 = vpack.c.b16 %v654, %v651
        %v682 = vpack.c.b16 %v655, %v652
        %v683 = vpack.c.b16 %v659, %v656
        %v684 = vpack.c.b16 %v660, %v657
        %v685 = vpack.c.b16 %v661, %v658
        %710 = vmatprep.subr.bf16.mxu0 %v663
        %711 = vmatpush1.bf16.msra.mxu0 %v662
        %712 = vmatprep.subr.bf16.mxu0 %v666
        %713 = vmatpush1.bf16.msra.mxu0 %v665
        %714 = vmatprep.subr.bf16.mxu0 %v669
        %715 = vmatpush1.bf16.msra.mxu0 %v668
        %716 = vmatprep.subr.bf16.mxu0 %v672
        %717 = vmatpush1.bf16.msra.mxu0 %v671
        %718 = vmatprep.subr.bf16.mxu0 %v675
        %719 = vmatpush1.bf16.msra.mxu0 %v674
        %720 = vmatprep.subr.bf16.mxu0 %v678
        %721 = vmatpush1.bf16.msra.mxu0 %v677
        %722 = vmatprep.subr.bf16.mxu0 %v681
        %723 = vmatpush1.bf16.msra.mxu0 %v680
        %724 = vmatprep.subr.bf16.mxu0 %v684
        %725 = vmatpush1.bf16.msra.mxu0 %v683
        %726 = vmatprep.subr.bf16.mxu0 0
        %727 = vmatpush1.bf16.msra.mxu0 0
        %728 = vmatprep.subr.bf16.mxu0 0
        %729 = vmatpush1.bf16.msra.mxu0 0
        %730 = vmatprep.subr.bf16.mxu0 0
        %731 = vmatpush1.bf16.msra.mxu0 0
        %732 = vmatprep.subr.bf16.mxu0 0
        %733 = vmatpush1.bf16.msra.mxu0 0
        %734 = vmatprep.subr.bf16.mxu0 0
        %735 = vmatpush1.bf16.msra.mxu0 0
        %736 = vmatprep.subr.bf16.mxu0 0
        %737 = vmatpush1.bf16.msra.mxu0 0
        %738 = vmatprep.subr.bf16.mxu0 0
        %739 = vmatpush1.bf16.msra.mxu0 0
        %740 = vmatprep.subr.bf16.mxu0 0
        %741 = vmatpush1.bf16.msra.mxu0 0
        %742 = vmatprep.mubr.bf16.mxu0 0
        %743 = vmatmul.mubr.bf16.gmra.mrb[0].mxu0 %v542
        %v744 = vpop.f32.mrb[0].mxu0
        %v745 = vadd.f32 0.0, %v744
        %v746 = vpop.f32.mrb[0].mxu0
        %v747 = vadd.f32 0.0, %v746
        %v748 = vpop.f32.mrb[0].mxu0
        %v749 = vadd.f32 0.0, %v748
        %v750 = vpop.f32.mrb[0].mxu0
        %v751 = vadd.f32 0.0, %v750
        %752 = vmatprep.mubr.bf16.mxu0 0
        %753 = vmatmul.mubr.bf16.gmra.mrb[0].mxu0 %v543
        %v754 = vpop.f32.mrb[0].mxu0
        %v755 = vadd.f32 0.0, %v754
        %v756 = vpop.f32.mrb[0].mxu0
        %v757 = vadd.f32 0.0, %v756
        %v758 = vpop.f32.mrb[0].mxu0
        %v759 = vadd.f32 0.0, %v758
        %v760 = vpop.f32.mrb[0].mxu0
        %v761 = vadd.f32 0.0, %v760
        %762 = vmatprep.mubr.bf16.mxu0 0
        %763 = vmatmul.mubr.bf16.gmra.mrb[0].mxu0 %v544
        %v764 = vpop.f32.mrb[0].mxu0
        %v765 = vadd.f32 0.0, %v764
        %v766 = vpop.f32.mrb[0].mxu0
        %v767 = vadd.f32 0.0, %v766
        %v768 = vpop.f32.mrb[0].mxu0
        %v769 = vadd.f32 0.0, %v768
        %v770 = vpop.f32.mrb[0].mxu0
        %v771 = vadd.f32 0.0, %v770
        %772 = vmatprep.mubr.bf16.mxu0 0
        %773 = vmatmul.mubr.bf16.gmra.mrb[0].mxu0 %v545
        %v774 = vpop.f32.mrb[0].mxu0
        %v775 = vadd.f32 0.0, %v774
        %v776 = vpop.f32.mrb[0].mxu0
        %v777 = vadd.f32 0.0, %v776
        %v778 = vpop.f32.mrb[0].mxu0
        %v779 = vadd.f32 0.0, %v778
        %v780 = vpop.f32.mrb[0].mxu0
        %v781 = vadd.f32 0.0, %v780
        %782 = vmatprep.mubr.bf16.mxu0 0
        %783 = vmatmul.mubr.bf16.gmra.mrb[0].mxu0 %v546
        %v784 = vpop.f32.mrb[0].mxu0
        %v785 = vadd.f32 0.0, %v784
        %v786 = vpop.f32.mrb[0].mxu0
        %v787 = vadd.f32 0.0, %v786
        %v788 = vpop.f32.mrb[0].mxu0
        %v789 = vadd.f32 0.0, %v788
        %v790 = vpop.f32.mrb[0].mxu0
        %v791 = vadd.f32 0.0, %v790
        %792 = vmatprep.mubr.bf16.mxu0 0
        %793 = vmatmul.mubr.bf16.gmra.mrb[0].mxu0 %v547
        %v794 = vpop.f32.mrb[0].mxu0
        %v795 = vadd.f32 0.0, %v794
        %v796 = vpop.f32.mrb[0].mxu0
        %v797 = vadd.f32 0.0, %v796
        %v798 = vpop.f32.mrb[0].mxu0
        %v799 = vadd.f32 0.0, %v798
        %v800 = vpop.f32.mrb[0].mxu0
        %v801 = vadd.f32 0.0, %v800
        %802 = vmatprep.mubr.bf16.mxu0 0
        %803 = vmatmul.mubr.bf16.gmra.mrb[0].mxu0 %v548
        %v804 = vpop.f32.mrb[0].mxu0
        %v805 = vadd.f32 0.0, %v804
        %v806 = vpop.f32.mrb[0].mxu0
        %v807 = vadd.f32 0.0, %v806
        %v808 = vpop.f32.mrb[0].mxu0
        %v809 = vadd.f32 0.0, %v808
        %v810 = vpop.f32.mrb[0].mxu0
        %v811 = vadd.f32 0.0, %v810
        %812 = vmatprep.mubr.bf16.mxu0 0
        %813 = vmatmul.mubr.bf16.gmra.mrb[0].mxu0 %v549
        %v814 = vpop.f32.mrb[0].mxu0
        %v815 = vadd.f32 0.0, %v814
        %v816 = vpop.f32.mrb[0].mxu0
        %v817 = vadd.f32 0.0, %v816
        %v818 = vpop.f32.mrb[0].mxu0
        %v819 = vadd.f32 0.0, %v818
        %v820 = vpop.f32.mrb[0].mxu0
        %v821 = vadd.f32 0.0, %v820
        %822 = vdwg.mxu0
        %823 = vmatprep.subr.bf16.mxu0 0
        %824 = vmatpush1.bf16.msra.mxu0 %v664
        %825 = vmatprep.subr.bf16.mxu0 0
        %826 = vmatpush1.bf16.msra.mxu0 %v667
        %827 = vmatprep.subr.bf16.mxu0 0
        %828 = vmatpush1.bf16.msra.mxu0 %v670
        %829 = vmatprep.subr.bf16.mxu0 0
        %830 = vmatpush1.bf16.msra.mxu0 %v673
        %831 = vmatprep.subr.bf16.mxu0 0
        %832 = vmatpush1.bf16.msra.mxu0 %v676
        %833 = vmatprep.subr.bf16.mxu0 0
        %834 = vmatpush1.bf16.msra.mxu0 %v679
        %835 = vmatprep.subr.bf16.mxu0 0
        %836 = vmatpush1.bf16.msra.mxu0 %v682
        %837 = vmatprep.subr.bf16.mxu0 0
        %838 = vmatpush1.bf16.msra.mxu0 %v685
        %839 = vmatprep.subr.bf16.mxu0 0
        %840 = vmatpush1.bf16.msra.mxu0 0
        %841 = vmatprep.subr.bf16.mxu0 0
        %842 = vmatpush1.bf16.msra.mxu0 0
        %843 = vmatprep.subr.bf16.mxu0 0
        %844 = vmatpush1.bf16.msra.mxu0 0
        %845 = vmatprep.subr.bf16.mxu0 0
        %846 = vmatpush1.bf16.msra.mxu0 0
        %847 = vmatprep.subr.bf16.mxu0 0
        %848 = vmatpush1.bf16.msra.mxu0 0
        %849 = vmatprep.subr.bf16.mxu0 0
        %850 = vmatpush1.bf16.msra.mxu0 0
        %851 = vmatprep.subr.bf16.mxu0 0
        %852 = vmatpush1.bf16.msra.mxu0 0
        %853 = vmatprep.subr.bf16.mxu0 0
        %854 = vmatpush1.bf16.msra.mxu0 0
        %855 = vmatprep.mubr.bf16.mxu0 0
        %856 = vmatmul.mubr.bf16.gmra.mrb[0].mxu0 %v542
        %v857 = vpop.f32.mrb[0].mxu0
        %v858 = vadd.f32 0.0, %v857
        %v859 = vpop.f32.mrb[0].mxu0
        %v860 = vpop.f32.mrb[0].mxu0
        %v861 = vadd.f32 0.0, %v860
        %v862 = vpop.f32.mrb[0].mxu0
        %863 = vmatprep.mubr.bf16.mxu0 0
        %864 = vmatmul.mubr.bf16.gmra.mrb[0].mxu0 %v543
        %v865 = vpop.f32.mrb[0].mxu0
        %v866 = vadd.f32 0.0, %v865
        %v867 = vpop.f32.mrb[0].mxu0
        %v868 = vpop.f32.mrb[0].mxu0
        %v869 = vadd.f32 0.0, %v868
        %v870 = vpop.f32.mrb[0].mxu0
        %871 = vmatprep.mubr.bf16.mxu0 0
        %872 = vmatmul.mubr.bf16.gmra.mrb[0].mxu0 %v544
        %v873 = vpop.f32.mrb[0].mxu0
        %v874 = vadd.f32 0.0, %v873
        %v875 = vpop.f32.mrb[0].mxu0
        %v876 = vpop.f32.mrb[0].mxu0
        %v877 = vadd.f32 0.0, %v876
        %v878 = vpop.f32.mrb[0].mxu0
        %879 = vmatprep.mubr.bf16.mxu0 0
        %880 = vmatmul.mubr.bf16.gmra.mrb[0].mxu0 %v545
        %v881 = vpop.f32.mrb[0].mxu0
        %v882 = vadd.f32 0.0, %v881
        %v883 = vpop.f32.mrb[0].mxu0
        %v884 = vpop.f32.mrb[0].mxu0
        %v885 = vadd.f32 0.0, %v884
        %v886 = vpop.f32.mrb[0].mxu0
        %887 = vmatprep.mubr.bf16.mxu0 0
        %888 = vmatmul.mubr.bf16.gmra.mrb[0].mxu0 %v546
        %v889 = vpop.f32.mrb[0].mxu0
        %v890 = vadd.f32 0.0, %v889
        %v891 = vpop.f32.mrb[0].mxu0
        %v892 = vpop.f32.mrb[0].mxu0
        %v893 = vadd.f32 0.0, %v892
        %v894 = vpop.f32.mrb[0].mxu0
        %895 = vmatprep.mubr.bf16.mxu0 0
        %896 = vmatmul.mubr.bf16.gmra.mrb[0].mxu0 %v547
        %v897 = vpop.f32.mrb[0].mxu0
        %v898 = vadd.f32 0.0, %v897
        %v899 = vpop.f32.mrb[0].mxu0
        %v900 = vpop.f32.mrb[0].mxu0
        %v901 = vadd.f32 0.0, %v900
        %v902 = vpop.f32.mrb[0].mxu0
        %903 = vmatprep.mubr.bf16.mxu0 0
        %904 = vmatmul.mubr.bf16.gmra.mrb[0].mxu0 %v548
        %v905 = vpop.f32.mrb[0].mxu0
        %v906 = vadd.f32 0.0, %v905
        %v907 = vpop.f32.mrb[0].mxu0
        %v908 = vpop.f32.mrb[0].mxu0
        %v909 = vadd.f32 0.0, %v908
        %v910 = vpop.f32.mrb[0].mxu0
        %911 = vmatprep.mubr.bf16.mxu0 0
        %912 = vmatmul.mubr.bf16.gmra.mrb[0].mxu0 %v549
        %v913 = vpop.f32.mrb[0].mxu0
        %v914 = vadd.f32 0.0, %v913
        %v915 = vpop.f32.mrb[0].mxu0
        %v916 = vpop.f32.mrb[0].mxu0
        %v917 = vadd.f32 0.0, %v916
        %v918 = vpop.f32.mrb[0].mxu0
        %919 = vdwg.mxu0
        %v920 = vpack.c.bf16 %v749, %v745
        %v921 = vpack.c.bf16 %v759, %v755
        %v922 = vpack.c.bf16 %v769, %v765
        %v923 = vpack.c.bf16 %v779, %v775
        %v924 = vpack.c.bf16 %v789, %v785
        %v925 = vpack.c.bf16 %v799, %v795
        %v926 = vpack.c.bf16 %v809, %v805
        %v927 = vpack.c.bf16 %v819, %v815
        %v928 = vpack.c.bf16 %v751, %v747
        %v929 = vpack.c.bf16 %v761, %v757
        %v930 = vpack.c.bf16 %v771, %v767
        %v931 = vpack.c.bf16 %v781, %v777
        %v932 = vpack.c.bf16 %v791, %v787
        %v933 = vpack.c.bf16 %v801, %v797
        %v934 = vpack.c.bf16 %v811, %v807
        %v935 = vpack.c.bf16 %v821, %v817
        %v936 = vpack.c.bf16 %v861, %v858
        %v937 = vpack.c.bf16 %v869, %v866
        %v938 = vpack.c.bf16 %v877, %v874
        %v939 = vpack.c.bf16 %v885, %v882
        %v940 = vpack.c.bf16 %v893, %v890
        %v941 = vpack.c.bf16 %v901, %v898
        %v942 = vpack.c.bf16 %v909, %v906
        %v943 = vpack.c.bf16 %v917, %v914
        %vm944 = vcmask 261120
        %v946 = vsel %vm944, %v920, 0
        %v949 = vsel %vm944, %v921, 0
        %v952 = vsel %vm944, %v922, 0
        %v955 = vsel %vm944, %v923, 0
        %v958 = vsel %vm944, %v928, 0
        %v961 = vsel %vm944, %v929, 0
        %v964 = vsel %vm944, %v930, 0
        %v967 = vsel %vm944, %v931, 0
        %969 = vmatprep.subr.bf16.mxu0 0
        %970 = vmatpush1.bf16.xpose.msra.mxu0 %v958
        %971 = vmatprep.subr.bf16.mxu0 0
        %972 = vmatpush1.bf16.xpose.msra.mxu0 %v961
        %973 = vmatprep.subr.bf16.mxu0 0
        %974 = vmatpush1.bf16.xpose.msra.mxu0 %v964
        %975 = vmatprep.subr.bf16.mxu0 0
        %976 = vmatpush1.bf16.xpose.msra.mxu0 %v967
        %977 = vmatprep.subr.bf16.mxu0 0
        %978 = vmatpush1.bf16.xpose.msra.mxu0 0
        %979 = vmatprep.subr.bf16.mxu0 0
        %980 = vmatpush1.bf16.xpose.msra.mxu0 0
        %981 = vmatprep.subr.bf16.mxu0 0
        %982 = vmatpush1.bf16.xpose.msra.mxu0 0
        %983 = vmatprep.subr.bf16.mxu0 0
        %984 = vmatpush1.bf16.xpose.msra.mxu0 0
        %985 = vmatprep.subr.bf16.mxu0 0
        %986 = vmatpush1.bf16.xpose.msra.mxu0 0
        %987 = vmatprep.subr.bf16.mxu0 0
        %988 = vmatpush1.bf16.xpose.msra.mxu0 0
        %989 = vmatprep.subr.bf16.mxu0 0
        %990 = vmatpush1.bf16.xpose.msra.mxu0 0
        %991 = vmatprep.subr.bf16.mxu0 0
        %992 = vmatpush1.bf16.xpose.msra.mxu0 0
        %993 = vmatprep.subr.bf16.mxu0 0
        %994 = vmatpush1.bf16.xpose.msra.mxu0 0
        %995 = vmatprep.subr.bf16.mxu0 0
        %996 = vmatpush1.bf16.xpose.msra.mxu0 0
        %997 = vmatprep.subr.bf16.mxu0 0
        %998 = vmatpush1.bf16.xpose.msra.mxu0 0
        %999 = vmatprep.subr.bf16.mxu0 0
        %1000 = vmatpush1.bf16.xpose.msra.mxu0 0
        %1001 = vmatprep.mubr.bf16.mxu0 0
        %1002 = vmatmul.mubr.bf16.gmra.mrb[0].mxu0 %v946
        %v1003 = vpop.f32.mrb[0].mxu0
        %v1004 = vadd.f32 0.0, %v1003
        %v1005 = vpop.f32.mrb[0].mxu0
        %v1006 = vpop.f32.mrb[0].mxu0
        %v1007 = vadd.f32 0.0, %v1006
        %v1008 = vpop.f32.mrb[0].mxu0
        %1009 = vmatprep.mubr.bf16.mxu0 0
        %1010 = vmatmul.mubr.bf16.gmra.mrb[0].mxu0 %v949
        %v1011 = vpop.f32.mrb[0].mxu0
        %v1012 = vadd.f32 0.0, %v1011
        %v1013 = vpop.f32.mrb[0].mxu0
        %v1014 = vpop.f32.mrb[0].mxu0
        %v1015 = vadd.f32 0.0, %v1014
        %v1016 = vpop.f32.mrb[0].mxu0
        %1017 = vmatprep.mubr.bf16.mxu0 0
        %1018 = vmatmul.mubr.bf16.gmra.mrb[0].mxu0 %v952
        %v1019 = vpop.f32.mrb[0].mxu0
        %v1020 = vadd.f32 0.0, %v1019
        %v1021 = vpop.f32.mrb[0].mxu0
        %v1022 = vpop.f32.mrb[0].mxu0
        %v1023 = vadd.f32 0.0, %v1022
        %v1024 = vpop.f32.mrb[0].mxu0
        %1025 = vmatprep.mubr.bf16.mxu0 0
        %1026 = vmatmul.mubr.bf16.gmra.mrb[0].mxu0 %v955
        %v1027 = vpop.f32.mrb[0].mxu0
        %v1028 = vadd.f32 0.0, %v1027
        %v1029 = vpop.f32.mrb[0].mxu0
        %v1030 = vpop.f32.mrb[0].mxu0
        %v1031 = vadd.f32 0.0, %v1030
        %v1032 = vpop.f32.mrb[0].mxu0
        %1033 = vdwg.mxu0
        %v1035 = vsel %vm944, %v924, 0
        %v1038 = vsel %vm944, %v925, 0
        %v1041 = vsel %vm944, %v926, 0
        %v1044 = vsel %vm944, %v927, 0
        %v1047 = vsel %vm944, %v932, 0
        %v1050 = vsel %vm944, %v933, 0
        %v1053 = vsel %vm944, %v934, 0
        %v1056 = vsel %vm944, %v935, 0
        %1058 = vmatprep.subr.bf16.mxu0 0
        %1059 = vmatpush1.bf16.xpose.msra.mxu0 %v1047
        %1060 = vmatprep.subr.bf16.mxu0 0
        %1061 = vmatpush1.bf16.xpose.msra.mxu0 %v1050
        %1062 = vmatprep.subr.bf16.mxu0 0
        %1063 = vmatpush1.bf16.xpose.msra.mxu0 %v1053
        %1064 = vmatprep.subr.bf16.mxu0 0
        %1065 = vmatpush1.bf16.xpose.msra.mxu0 %v1056
        %1066 = vmatprep.subr.bf16.mxu0 0
        %1067 = vmatpush1.bf16.xpose.msra.mxu0 0
        %1068 = vmatprep.subr.bf16.mxu0 0
        %1069 = vmatpush1.bf16.xpose.msra.mxu0 0
        %1070 = vmatprep.subr.bf16.mxu0 0
        %1071 = vmatpush1.bf16.xpose.msra.mxu0 0
        %1072 = vmatprep.subr.bf16.mxu0 0
        %1073 = vmatpush1.bf16.xpose.msra.mxu0 0
        %1074 = vmatprep.subr.bf16.mxu0 0
        %1075 = vmatpush1.bf16.xpose.msra.mxu0 0
        %1076 = vmatprep.subr.bf16.mxu0 0
        %1077 = vmatpush1.bf16.xpose.msra.mxu0 0
        %1078 = vmatprep.subr.bf16.mxu0 0
        %1079 = vmatpush1.bf16.xpose.msra.mxu0 0
        %1080 = vmatprep.subr.bf16.mxu0 0
        %1081 = vmatpush1.bf16.xpose.msra.mxu0 0
        %1082 = vmatprep.subr.bf16.mxu0 0
        %1083 = vmatpush1.bf16.xpose.msra.mxu0 0
        %1084 = vmatprep.subr.bf16.mxu0 0
        %1085 = vmatpush1.bf16.xpose.msra.mxu0 0
        %1086 = vmatprep.subr.bf16.mxu0 0
        %1087 = vmatpush1.bf16.xpose.msra.mxu0 0
        %1088 = vmatprep.subr.bf16.mxu0 0
        %1089 = vmatpush1.bf16.xpose.msra.mxu0 0
        %1090 = vmatprep.mubr.bf16.mxu0 0
        %1091 = vmatmul.mubr.bf16.gmra.mrb[0].mxu0 %v1035
        %v1092 = vpop.f32.mrb[0].mxu0
        %v1093 = vadd.f32 0.0, %v1092
        %v1094 = vpop.f32.mrb[0].mxu0
        %v1095 = vpop.f32.mrb[0].mxu0
        %v1096 = vadd.f32 0.0, %v1095
        %v1097 = vpop.f32.mrb[0].mxu0
        %1098 = vmatprep.mubr.bf16.mxu0 0
        %1099 = vmatmul.mubr.bf16.gmra.mrb[0].mxu0 %v1038
        %v1100 = vpop.f32.mrb[0].mxu0
        %v1101 = vadd.f32 0.0, %v1100
        %v1102 = vpop.f32.mrb[0].mxu0
        %v1103 = vpop.f32.mrb[0].mxu0
        %v1104 = vadd.f32 0.0, %v1103
        %v1105 = vpop.f32.mrb[0].mxu0
        %1106 = vmatprep.mubr.bf16.mxu0 0
        %1107 = vmatmul.mubr.bf16.gmra.mrb[0].mxu0 %v1041
        %v1108 = vpop.f32.mrb[0].mxu0
        %v1109 = vadd.f32 0.0, %v1108
        %v1110 = vpop.f32.mrb[0].mxu0
        %v1111 = vpop.f32.mrb[0].mxu0
        %v1112 = vadd.f32 0.0, %v1111
        %v1113 = vpop.f32.mrb[0].mxu0
        %1114 = vmatprep.mubr.bf16.mxu0 0
        %1115 = vmatmul.mubr.bf16.gmra.mrb[0].mxu0 %v1044
        %v1116 = vpop.f32.mrb[0].mxu0
        %v1117 = vadd.f32 0.0, %v1116
        %v1118 = vpop.f32.mrb[0].mxu0
        %v1119 = vpop.f32.mrb[0].mxu0
        %v1120 = vadd.f32 0.0, %v1119
        %v1121 = vpop.f32.mrb[0].mxu0
        %1122 = vdwg.mxu0
        %vm1123 = vcmask 523264
        %v1124 = vsel %vm1123, %v1004, -inf
        %1125 = vmax.xlane.f32.xlu0 %v1124
        %v1126 = vpop.xlane.xlu0 %1125
        %v1127 = vsel %vm1123, %v1007, -inf
        %1128 = vmax.xlane.f32.xlu0 %v1127
        %v1129 = vpop.xlane.xlu0 %1128
        %v1130 = vsel %vm1123, %v1012, -inf
        %1131 = vmax.xlane.f32.xlu0 %v1130
        %v1132 = vpop.xlane.xlu0 %1131
        %v1133 = vsel %vm1123, %v1015, -inf
        %1134 = vmax.xlane.f32.xlu0 %v1133
        %v1135 = vpop.xlane.xlu0 %1134
        %v1136 = vsel %vm1123, %v1020, -inf
        %1137 = vmax.xlane.f32.xlu0 %v1136
        %v1138 = vpop.xlane.xlu0 %1137
        %v1139 = vsel %vm1123, %v1023, -inf
        %1140 = vmax.xlane.f32.xlu0 %v1139
        %v1141 = vpop.xlane.xlu0 %1140
        %v1142 = vsel %vm1123, %v1028, -inf
        %1143 = vmax.xlane.f32.xlu0 %v1142
        %v1144 = vpop.xlane.xlu0 %1143
        %v1145 = vsel %vm1123, %v1031, -inf
        %1146 = vmax.xlane.f32.xlu0 %v1145
        %v1147 = vpop.xlane.xlu0 %1146
        %v1148 = vsel %vm1123, %v1093, -inf
        %1149 = vmax.xlane.f32.xlu0 %v1148
        %v1150 = vpop.xlane.xlu0 %1149
        %v1151 = vsel %vm1123, %v1096, -inf
        %1152 = vmax.xlane.f32.xlu0 %v1151
        %v1153 = vpop.xlane.xlu0 %1152
        %v1154 = vsel %vm1123, %v1101, -inf
        %1155 = vmax.xlane.f32.xlu0 %v1154
        %v1156 = vpop.xlane.xlu0 %1155
        %v1157 = vsel %vm1123, %v1104, -inf
        %1158 = vmax.xlane.f32.xlu0 %v1157
        %v1159 = vpop.xlane.xlu0 %1158
        %v1160 = vsel %vm1123, %v1109, -inf
        %1161 = vmax.xlane.f32.xlu0 %v1160
        %v1162 = vpop.xlane.xlu0 %1161
        %v1163 = vsel %vm1123, %v1112, -inf
        %1164 = vmax.xlane.f32.xlu0 %v1163
        %v1165 = vpop.xlane.xlu0 %1164
        %v1166 = vsel %vm1123, %v1117, -inf
        %1167 = vmax.xlane.f32.xlu0 %v1166
        %v1168 = vpop.xlane.xlu0 %1167
        %v1169 = vsel %vm1123, %v1120, -inf
        %1170 = vmax.xlane.f32.xlu0 %v1169
        %v1171 = vpop.xlane.xlu0 %1170
        %v1172 = vsub.f32 %v1004, %v1126
        %v1173 = vsub.f32 %v1007, %v1129
        %v1174 = vsub.f32 %v1012, %v1132
        %v1175 = vsub.f32 %v1015, %v1135
        %v1176 = vsub.f32 %v1020, %v1138
        %v1177 = vsub.f32 %v1023, %v1141
        %v1178 = vsub.f32 %v1028, %v1144
        %v1179 = vsub.f32 %v1031, %v1147
        %v1180 = vsub.f32 %v1093, %v1150
        %v1181 = vsub.f32 %v1096, %v1153
        %v1182 = vsub.f32 %v1101, %v1156
        %v1183 = vsub.f32 %v1104, %v1159
        %v1184 = vsub.f32 %v1109, %v1162
        %v1185 = vsub.f32 %v1112, %v1165
        %v1186 = vsub.f32 %v1117, %v1168
        %v1187 = vsub.f32 %v1120, %v1171
        %v1188 = vmul.f32 %v1172, 1.442695
        %v1189 = vpow.pop %v1188
        %v1190 = vmul.f32 %v1173, 1.442695
        %v1191 = vpow.pop %v1190
        %v1192 = vmul.f32 %v1174, 1.442695
        %v1193 = vpow.pop %v1192
        %v1194 = vmul.f32 %v1175, 1.442695
        %v1195 = vpow.pop %v1194
        %v1196 = vmul.f32 %v1176, 1.442695
        %v1197 = vpow.pop %v1196
        %v1198 = vmul.f32 %v1177, 1.442695
        %v1199 = vpow.pop %v1198
        %v1200 = vmul.f32 %v1178, 1.442695
        %v1201 = vpow.pop %v1200
        %v1202 = vmul.f32 %v1179, 1.442695
        %v1203 = vpow.pop %v1202
        %v1204 = vmul.f32 %v1180, 1.442695
        %v1205 = vpow.pop %v1204
        %v1206 = vmul.f32 %v1181, 1.442695
        %v1207 = vpow.pop %v1206
        %v1208 = vmul.f32 %v1182, 1.442695
        %v1209 = vpow.pop %v1208
        %v1210 = vmul.f32 %v1183, 1.442695
        %v1211 = vpow.pop %v1210
        %v1212 = vmul.f32 %v1184, 1.442695
        %v1213 = vpow.pop %v1212
        %v1214 = vmul.f32 %v1185, 1.442695
        %v1215 = vpow.pop %v1214
        %v1216 = vmul.f32 %v1186, 1.442695
        %v1217 = vpow.pop %v1216
        %v1218 = vmul.f32 %v1187, 1.442695
        %v1219 = vpow.pop %v1218
        %v1220 = vsel %vm1123, %v1189, 0.0
        %1221 = vadd.xlane.f32.xlu0 %v1220
        %v1222 = vpop.xlane.xlu0 %1221
        %v1223 = vsel %vm1123, %v1191, 0.0
        %1224 = vadd.xlane.f32.xlu0 %v1223
        %v1225 = vpop.xlane.xlu0 %1224
        %v1226 = vsel %vm1123, %v1193, 0.0
        %1227 = vadd.xlane.f32.xlu0 %v1226
        %v1228 = vpop.xlane.xlu0 %1227
        %v1229 = vsel %vm1123, %v1195, 0.0
        %1230 = vadd.xlane.f32.xlu0 %v1229
        %v1231 = vpop.xlane.xlu0 %1230
        %v1232 = vsel %vm1123, %v1197, 0.0
        %1233 = vadd.xlane.f32.xlu0 %v1232
        %v1234 = vpop.xlane.xlu0 %1233
        %v1235 = vsel %vm1123, %v1199, 0.0
        %1236 = vadd.xlane.f32.xlu0 %v1235
        %v1237 = vpop.xlane.xlu0 %1236
        %v1238 = vsel %vm1123, %v1201, 0.0
        %1239 = vadd.xlane.f32.xlu0 %v1238
        %v1240 = vpop.xlane.xlu0 %1239
        %v1241 = vsel %vm1123, %v1203, 0.0
        %1242 = vadd.xlane.f32.xlu0 %v1241
        %v1243 = vpop.xlane.xlu0 %1242
        %v1244 = vsel %vm1123, %v1205, 0.0
        %1245 = vadd.xlane.f32.xlu0 %v1244
        %v1246 = vpop.xlane.xlu0 %1245
        %v1247 = vsel %vm1123, %v1207, 0.0
        %1248 = vadd.xlane.f32.xlu0 %v1247
        %v1249 = vpop.xlane.xlu0 %1248
        %v1250 = vsel %vm1123, %v1209, 0.0
        %1251 = vadd.xlane.f32.xlu0 %v1250
        %v1252 = vpop.xlane.xlu0 %1251
        %v1253 = vsel %vm1123, %v1211, 0.0
        %1254 = vadd.xlane.f32.xlu0 %v1253
        %v1255 = vpop.xlane.xlu0 %1254
        %v1256 = vsel %vm1123, %v1213, 0.0
        %1257 = vadd.xlane.f32.xlu0 %v1256
        %v1258 = vpop.xlane.xlu0 %1257
        %v1259 = vsel %vm1123, %v1215, 0.0
        %1260 = vadd.xlane.f32.xlu0 %v1259
        %v1261 = vpop.xlane.xlu0 %1260
        %v1262 = vsel %vm1123, %v1217, 0.0
        %1263 = vadd.xlane.f32.xlu0 %v1262
        %v1264 = vpop.xlane.xlu0 %1263
        %v1265 = vsel %vm1123, %v1219, 0.0
        %1266 = vadd.xlane.f32.xlu0 %v1265
        %v1267 = vpop.xlane.xlu0 %1266
        %v1268 = vrcp.pop %v1222
        %v1269 = vrcp.pop %v1225
        %v1270 = vrcp.pop %v1228
        %v1271 = vrcp.pop %v1231
        %v1272 = vrcp.pop %v1234
        %v1273 = vrcp.pop %v1237
        %v1274 = vrcp.pop %v1240
        %v1275 = vrcp.pop %v1243
        %v1276 = vrcp.pop %v1246
        %v1277 = vrcp.pop %v1249
        %v1278 = vrcp.pop %v1252
        %v1279 = vrcp.pop %v1255
        %v1280 = vrcp.pop %v1258
        %v1281 = vrcp.pop %v1261
        %v1282 = vrcp.pop %v1264
        %v1283 = vrcp.pop %v1267
        %v1284 = vmul.f32 %v1189, %v1268
        %v1285 = vmul.f32 %v1191, %v1269
        %v1286 = vmul.f32 %v1193, %v1270
        %v1287 = vmul.f32 %v1195, %v1271
        %v1288 = vmul.f32 %v1197, %v1272
        %v1289 = vmul.f32 %v1199, %v1273
        %v1290 = vmul.f32 %v1201, %v1274
        %v1291 = vmul.f32 %v1203, %v1275
        %v1292 = vmul.f32 %v1205, %v1276
        %v1293 = vmul.f32 %v1207, %v1277
        %v1294 = vmul.f32 %v1209, %v1278
        %v1295 = vmul.f32 %v1211, %v1279
        %v1296 = vmul.f32 %v1213, %v1280
        %v1297 = vmul.f32 %v1215, %v1281
        %v1298 = vmul.f32 %v1217, %v1282
        %v1299 = vmul.f32 %v1219, %v1283
        %v1300 = vpack.c.bf16 %v1285, %v1284
        %v1301 = vpack.c.bf16 %v1287, %v1286
        %v1302 = vpack.c.bf16 %v1289, %v1288
        %v1303 = vpack.c.bf16 %v1291, %v1290
        %v1304 = vpack.c.bf16 %v1293, %v1292
        %v1305 = vpack.c.bf16 %v1295, %v1294
        %v1306 = vpack.c.bf16 %v1297, %v1296
        %v1307 = vpack.c.bf16 %v1299, %v1298
        %v1309 = vsel %vm1123, %v1300, 0
        %v1312 = vsel %vm1123, %v1301, 0
        %v1315 = vsel %vm1123, %v1302, 0
        %v1318 = vsel %vm1123, %v1303, 0
        %1320 = vmatprep.subr.bf16.mxu0 0
        %1321 = vmatpush1.bf16.msra.mxu0 %v936
        %1322 = vmatprep.subr.bf16.mxu0 0
        %1323 = vmatpush1.bf16.msra.mxu0 %v937
        %1324 = vmatprep.subr.bf16.mxu0 0
        %1325 = vmatpush1.bf16.msra.mxu0 %v938
        %1326 = vmatprep.subr.bf16.mxu0 0
        %1327 = vmatpush1.bf16.msra.mxu0 %v939
        %1328 = vmatprep.subr.bf16.mxu0 0
        %1329 = vmatpush1.bf16.msra.mxu0 0
        %1330 = vmatprep.subr.bf16.mxu0 0
        %1331 = vmatpush1.bf16.msra.mxu0 0
        %1332 = vmatprep.subr.bf16.mxu0 0
        %1333 = vmatpush1.bf16.msra.mxu0 0
        %1334 = vmatprep.subr.bf16.mxu0 0
        %1335 = vmatpush1.bf16.msra.mxu0 0
        %1336 = vmatprep.subr.bf16.mxu0 0
        %1337 = vmatpush1.bf16.msra.mxu0 0
        %1338 = vmatprep.subr.bf16.mxu0 0
        %1339 = vmatpush1.bf16.msra.mxu0 0
        %1340 = vmatprep.subr.bf16.mxu0 0
        %1341 = vmatpush1.bf16.msra.mxu0 0
        %1342 = vmatprep.subr.bf16.mxu0 0
        %1343 = vmatpush1.bf16.msra.mxu0 0
        %1344 = vmatprep.subr.bf16.mxu0 0
        %1345 = vmatpush1.bf16.msra.mxu0 0
        %1346 = vmatprep.subr.bf16.mxu0 0
        %1347 = vmatpush1.bf16.msra.mxu0 0
        %1348 = vmatprep.subr.bf16.mxu0 0
        %1349 = vmatpush1.bf16.msra.mxu0 0
        %1350 = vmatprep.subr.bf16.mxu0 0
        %1351 = vmatpush1.bf16.msra.mxu0 0
        %1352 = vmatprep.mubr.bf16.mxu0 0
        %1353 = vmatmul.mubr.bf16.gmra.mrb[0].mxu0 %v1309
        %v1354 = vpop.f32.mrb[0].mxu0
        %v1355 = vadd.f32 0.0, %v1354
        %v1356 = vpop.f32.mrb[0].mxu0
        %v1357 = vpop.f32.mrb[0].mxu0
        %v1358 = vadd.f32 0.0, %v1357
        %v1359 = vpop.f32.mrb[0].mxu0
        %1360 = vmatprep.mubr.bf16.mxu0 0
        %1361 = vmatmul.mubr.bf16.gmra.mrb[0].mxu0 %v1312
        %v1362 = vpop.f32.mrb[0].mxu0
        %v1363 = vadd.f32 0.0, %v1362
        %v1364 = vpop.f32.mrb[0].mxu0
        %v1365 = vpop.f32.mrb[0].mxu0
        %v1366 = vadd.f32 0.0, %v1365
        %v1367 = vpop.f32.mrb[0].mxu0
        %1368 = vmatprep.mubr.bf16.mxu0 0
        %1369 = vmatmul.mubr.bf16.gmra.mrb[0].mxu0 %v1315
        %v1370 = vpop.f32.mrb[0].mxu0
        %v1371 = vadd.f32 0.0, %v1370
        %v1372 = vpop.f32.mrb[0].mxu0
        %v1373 = vpop.f32.mrb[0].mxu0
        %v1374 = vadd.f32 0.0, %v1373
        %v1375 = vpop.f32.mrb[0].mxu0
        %1376 = vmatprep.mubr.bf16.mxu0 0
        %1377 = vmatmul.mubr.bf16.gmra.mrb[0].mxu0 %v1318
        %v1378 = vpop.f32.mrb[0].mxu0
        %v1379 = vadd.f32 0.0, %v1378
        %v1380 = vpop.f32.mrb[0].mxu0
        %v1381 = vpop.f32.mrb[0].mxu0
        %v1382 = vadd.f32 0.0, %v1381
        %v1383 = vpop.f32.mrb[0].mxu0
        %1384 = vdwg.mxu0
        %v1386 = vsel %vm1123, %v1304, 0
        %v1389 = vsel %vm1123, %v1305, 0
        %v1392 = vsel %vm1123, %v1306, 0
        %v1395 = vsel %vm1123, %v1307, 0
        %1397 = vmatprep.subr.bf16.mxu0 0
        %1398 = vmatpush1.bf16.msra.mxu0 %v940
        %1399 = vmatprep.subr.bf16.mxu0 0
        %1400 = vmatpush1.bf16.msra.mxu0 %v941
        %1401 = vmatprep.subr.bf16.mxu0 0
        %1402 = vmatpush1.bf16.msra.mxu0 %v942
        %1403 = vmatprep.subr.bf16.mxu0 0
        %1404 = vmatpush1.bf16.msra.mxu0 %v943
        %1405 = vmatprep.subr.bf16.mxu0 0
        %1406 = vmatpush1.bf16.msra.mxu0 0
        %1407 = vmatprep.subr.bf16.mxu0 0
        %1408 = vmatpush1.bf16.msra.mxu0 0
        %1409 = vmatprep.subr.bf16.mxu0 0
        %1410 = vmatpush1.bf16.msra.mxu0 0
        %1411 = vmatprep.subr.bf16.mxu0 0
        %1412 = vmatpush1.bf16.msra.mxu0 0
        %1413 = vmatprep.subr.bf16.mxu0 0
        %1414 = vmatpush1.bf16.msra.mxu0 0
        %1415 = vmatprep.subr.bf16.mxu0 0
        %1416 = vmatpush1.bf16.msra.mxu0 0
        %1417 = vmatprep.subr.bf16.mxu0 0
        %1418 = vmatpush1.bf16.msra.mxu0 0
        %1419 = vmatprep.subr.bf16.mxu0 0
        %1420 = vmatpush1.bf16.msra.mxu0 0
        %1421 = vmatprep.subr.bf16.mxu0 0
        %1422 = vmatpush1.bf16.msra.mxu0 0
        %1423 = vmatprep.subr.bf16.mxu0 0
        %1424 = vmatpush1.bf16.msra.mxu0 0
        %1425 = vmatprep.subr.bf16.mxu0 0
        %1426 = vmatpush1.bf16.msra.mxu0 0
        %1427 = vmatprep.subr.bf16.mxu0 0
        %1428 = vmatpush1.bf16.msra.mxu0 0
        %1429 = vmatprep.mubr.bf16.mxu0 0
        %1430 = vmatmul.mubr.bf16.gmra.mrb[0].mxu0 %v1386
        %v1431 = vpop.f32.mrb[0].mxu0
        %v1432 = vadd.f32 0.0, %v1431
        %v1433 = vpop.f32.mrb[0].mxu0
        %v1434 = vpop.f32.mrb[0].mxu0
        %v1435 = vadd.f32 0.0, %v1434
        %v1436 = vpop.f32.mrb[0].mxu0
        %1437 = vmatprep.mubr.bf16.mxu0 0
        %1438 = vmatmul.mubr.bf16.gmra.mrb[0].mxu0 %v1389
        %v1439 = vpop.f32.mrb[0].mxu0
        %v1440 = vadd.f32 0.0, %v1439
        %v1441 = vpop.f32.mrb[0].mxu0
        %v1442 = vpop.f32.mrb[0].mxu0
        %v1443 = vadd.f32 0.0, %v1442
        %v1444 = vpop.f32.mrb[0].mxu0
        %1445 = vmatprep.mubr.bf16.mxu0 0
        %1446 = vmatmul.mubr.bf16.gmra.mrb[0].mxu0 %v1392
        %v1447 = vpop.f32.mrb[0].mxu0
        %v1448 = vadd.f32 0.0, %v1447
        %v1449 = vpop.f32.mrb[0].mxu0
        %v1450 = vpop.f32.mrb[0].mxu0
        %v1451 = vadd.f32 0.0, %v1450
        %v1452 = vpop.f32.mrb[0].mxu0
        %1453 = vmatprep.mubr.bf16.mxu0 0
        %1454 = vmatmul.mubr.bf16.gmra.mrb[0].mxu0 %v1395
        %v1455 = vpop.f32.mrb[0].mxu0
        %v1456 = vadd.f32 0.0, %v1455
        %v1457 = vpop.f32.mrb[0].mxu0
        %v1458 = vpop.f32.mrb[0].mxu0
        %v1459 = vadd.f32 0.0, %v1458
        %v1460 = vpop.f32.mrb[0].mxu0
        %1461 = vdwg.mxu0
        %1466 = vrot.lane.b32.xlu0 %v920, 96
        %v1467 = vpop.permute.xlu0 %1466
        %1468 = vrot.lane.b32.xlu0 %v921, 96
        %v1469 = vpop.permute.xlu0 %1468
        %1470 = vrot.lane.b32.xlu0 %v922, 96
        %v1471 = vpop.permute.xlu0 %1470
        %1472 = vrot.lane.b32.xlu0 %v923, 96
        %v1473 = vpop.permute.xlu0 %1472
        %1478 = vrot.lane.b32.xlu0 %v928, 96
        %v1479 = vpop.permute.xlu0 %1478
        %1480 = vrot.lane.b32.xlu0 %v929, 96
        %v1481 = vpop.permute.xlu0 %1480
        %1482 = vrot.lane.b32.xlu0 %v930, 96
        %v1483 = vpop.permute.xlu0 %1482
        %1484 = vrot.lane.b32.xlu0 %v931, 96
        %v1485 = vpop.permute.xlu0 %1484
        %v1487 = vsel %vm944, %v1467, 0
        %v1490 = vsel %vm944, %v1469, 0
        %v1493 = vsel %vm944, %v1471, 0
        %v1496 = vsel %vm944, %v1473, 0
        %v1499 = vsel %vm944, %v1479, 0
        %v1502 = vsel %vm944, %v1481, 0
        %v1505 = vsel %vm944, %v1483, 0
        %v1508 = vsel %vm944, %v1485, 0
        %1510 = vmatprep.subr.bf16.mxu0 0
        %1511 = vmatpush1.bf16.xpose.msra.mxu0 %v1499
        %1512 = vmatprep.subr.bf16.mxu0 0
        %1513 = vmatpush1.bf16.xpose.msra.mxu0 %v1502
        %1514 = vmatprep.subr.bf16.mxu0 0
        %1515 = vmatpush1.bf16.xpose.msra.mxu0 %v1505
        %1516 = vmatprep.subr.bf16.mxu0 0
        %1517 = vmatpush1.bf16.xpose.msra.mxu0 %v1508
        %1518 = vmatprep.subr.bf16.mxu0 0
        %1519 = vmatpush1.bf16.xpose.msra.mxu0 0
        %1520 = vmatprep.subr.bf16.mxu0 0
        %1521 = vmatpush1.bf16.xpose.msra.mxu0 0
        %1522 = vmatprep.subr.bf16.mxu0 0
        %1523 = vmatpush1.bf16.xpose.msra.mxu0 0
        %1524 = vmatprep.subr.bf16.mxu0 0
        %1525 = vmatpush1.bf16.xpose.msra.mxu0 0
        %1526 = vmatprep.subr.bf16.mxu0 0
        %1527 = vmatpush1.bf16.xpose.msra.mxu0 0
        %1528 = vmatprep.subr.bf16.mxu0 0
        %1529 = vmatpush1.bf16.xpose.msra.mxu0 0
        %1530 = vmatprep.subr.bf16.mxu0 0
        %1531 = vmatpush1.bf16.xpose.msra.mxu0 0
        %1532 = vmatprep.subr.bf16.mxu0 0
        %1533 = vmatpush1.bf16.xpose.msra.mxu0 0
        %1534 = vmatprep.subr.bf16.mxu0 0
        %1535 = vmatpush1.bf16.xpose.msra.mxu0 0
        %1536 = vmatprep.subr.bf16.mxu0 0
        %1537 = vmatpush1.bf16.xpose.msra.mxu0 0
        %1538 = vmatprep.subr.bf16.mxu0 0
        %1539 = vmatpush1.bf16.xpose.msra.mxu0 0
        %1540 = vmatprep.subr.bf16.mxu0 0
        %1541 = vmatpush1.bf16.xpose.msra.mxu0 0
        %1542 = vmatprep.mubr.bf16.mxu0 0
        %1543 = vmatmul.mubr.bf16.gmra.mrb[0].mxu0 %v1487
        %v1544 = vpop.f32.mrb[0].mxu0
        %v1545 = vadd.f32 0.0, %v1544
        %v1546 = vpop.f32.mrb[0].mxu0
        %v1547 = vpop.f32.mrb[0].mxu0
        %v1548 = vadd.f32 0.0, %v1547
        %v1549 = vpop.f32.mrb[0].mxu0
        %1550 = vmatprep.mubr.bf16.mxu0 0
        %1551 = vmatmul.mubr.bf16.gmra.mrb[0].mxu0 %v1490
        %v1552 = vpop.f32.mrb[0].mxu0
        %v1553 = vadd.f32 0.0, %v1552
        %v1554 = vpop.f32.mrb[0].mxu0
        %v1555 = vpop.f32.mrb[0].mxu0
        %v1556 = vadd.f32 0.0, %v1555
        %v1557 = vpop.f32.mrb[0].mxu0
        %1558 = vmatprep.mubr.bf16.mxu0 0
        %1559 = vmatmul.mubr.bf16.gmra.mrb[0].mxu0 %v1493
        %v1560 = vpop.f32.mrb[0].mxu0
        %v1561 = vadd.f32 0.0, %v1560
        %v1562 = vpop.f32.mrb[0].mxu0
        %v1563 = vpop.f32.mrb[0].mxu0
        %v1564 = vadd.f32 0.0, %v1563
        %v1565 = vpop.f32.mrb[0].mxu0
        %1566 = vmatprep.mubr.bf16.mxu0 0
        %1567 = vmatmul.mubr.bf16.gmra.mrb[0].mxu0 %v1496
        %v1568 = vpop.f32.mrb[0].mxu0
        %v1569 = vadd.f32 0.0, %v1568
        %v1570 = vpop.f32.mrb[0].mxu0
        %v1571 = vpop.f32.mrb[0].mxu0
        %v1572 = vadd.f32 0.0, %v1571
        %v1573 = vpop.f32.mrb[0].mxu0
        %1574 = vdwg.mxu0
        %1579 = vrot.lane.b32.xlu0 %v924, 96
        %v1580 = vpop.permute.xlu0 %1579
        %1581 = vrot.lane.b32.xlu0 %v925, 96
        %v1582 = vpop.permute.xlu0 %1581
        %1583 = vrot.lane.b32.xlu0 %v926, 96
        %v1584 = vpop.permute.xlu0 %1583
        %1585 = vrot.lane.b32.xlu0 %v927, 96
        %v1586 = vpop.permute.xlu0 %1585
        %1591 = vrot.lane.b32.xlu0 %v932, 96
        %v1592 = vpop.permute.xlu0 %1591
        %1593 = vrot.lane.b32.xlu0 %v933, 96
        %v1594 = vpop.permute.xlu0 %1593
        %1595 = vrot.lane.b32.xlu0 %v934, 96
        %v1596 = vpop.permute.xlu0 %1595
        %1597 = vrot.lane.b32.xlu0 %v935, 96
        %v1598 = vpop.permute.xlu0 %1597
        %v1600 = vsel %vm944, %v1580, 0
        %v1603 = vsel %vm944, %v1582, 0
        %v1606 = vsel %vm944, %v1584, 0
        %v1609 = vsel %vm944, %v1586, 0
        %v1612 = vsel %vm944, %v1592, 0
        %v1615 = vsel %vm944, %v1594, 0
        %v1618 = vsel %vm944, %v1596, 0
        %v1621 = vsel %vm944, %v1598, 0
        %1623 = vmatprep.subr.bf16.mxu0 0
        %1624 = vmatpush1.bf16.xpose.msra.mxu0 %v1612
        %1625 = vmatprep.subr.bf16.mxu0 0
        %1626 = vmatpush1.bf16.xpose.msra.mxu0 %v1615
        %1627 = vmatprep.subr.bf16.mxu0 0
        %1628 = vmatpush1.bf16.xpose.msra.mxu0 %v1618
        %1629 = vmatprep.subr.bf16.mxu0 0
        %1630 = vmatpush1.bf16.xpose.msra.mxu0 %v1621
        %1631 = vmatprep.subr.bf16.mxu0 0
        %1632 = vmatpush1.bf16.xpose.msra.mxu0 0
        %1633 = vmatprep.subr.bf16.mxu0 0
        %1634 = vmatpush1.bf16.xpose.msra.mxu0 0
        %1635 = vmatprep.subr.bf16.mxu0 0
        %1636 = vmatpush1.bf16.xpose.msra.mxu0 0
        %1637 = vmatprep.subr.bf16.mxu0 0
        %1638 = vmatpush1.bf16.xpose.msra.mxu0 0
        %1639 = vmatprep.subr.bf16.mxu0 0
        %1640 = vmatpush1.bf16.xpose.msra.mxu0 0
        %1641 = vmatprep.subr.bf16.mxu0 0
        %1642 = vmatpush1.bf16.xpose.msra.mxu0 0
        %1643 = vmatprep.subr.bf16.mxu0 0
        %1644 = vmatpush1.bf16.xpose.msra.mxu0 0
        %1645 = vmatprep.subr.bf16.mxu0 0
        %1646 = vmatpush1.bf16.xpose.msra.mxu0 0
        %1647 = vmatprep.subr.bf16.mxu0 0
        %1648 = vmatpush1.bf16.xpose.msra.mxu0 0
        %1649 = vmatprep.subr.bf16.mxu0 0
        %1650 = vmatpush1.bf16.xpose.msra.mxu0 0
        %1651 = vmatprep.subr.bf16.mxu0 0
        %1652 = vmatpush1.bf16.xpose.msra.mxu0 0
        %1653 = vmatprep.subr.bf16.mxu0 0
        %1654 = vmatpush1.bf16.xpose.msra.mxu0 0
        %1655 = vmatprep.mubr.bf16.mxu0 0
        %1656 = vmatmul.mubr.bf16.gmra.mrb[0].mxu0 %v1600
        %v1657 = vpop.f32.mrb[0].mxu0
        %v1658 = vadd.f32 0.0, %v1657
        %v1659 = vpop.f32.mrb[0].mxu0
        %v1660 = vpop.f32.mrb[0].mxu0
        %v1661 = vadd.f32 0.0, %v1660
        %v1662 = vpop.f32.mrb[0].mxu0
        %1663 = vmatprep.mubr.bf16.mxu0 0
        %1664 = vmatmul.mubr.bf16.gmra.mrb[0].mxu0 %v1603
        %v1665 = vpop.f32.mrb[0].mxu0
        %v1666 = vadd.f32 0.0, %v1665
        %v1667 = vpop.f32.mrb[0].mxu0
        %v1668 = vpop.f32.mrb[0].mxu0
        %v1669 = vadd.f32 0.0, %v1668
        %v1670 = vpop.f32.mrb[0].mxu0
        %1671 = vmatprep.mubr.bf16.mxu0 0
        %1672 = vmatmul.mubr.bf16.gmra.mrb[0].mxu0 %v1606
        %v1673 = vpop.f32.mrb[0].mxu0
        %v1674 = vadd.f32 0.0, %v1673
        %v1675 = vpop.f32.mrb[0].mxu0
        %v1676 = vpop.f32.mrb[0].mxu0
        %v1677 = vadd.f32 0.0, %v1676
        %v1678 = vpop.f32.mrb[0].mxu0
        %1679 = vmatprep.mubr.bf16.mxu0 0
        %1680 = vmatmul.mubr.bf16.gmra.mrb[0].mxu0 %v1609
        %v1681 = vpop.f32.mrb[0].mxu0
        %v1682 = vadd.f32 0.0, %v1681
        %v1683 = vpop.f32.mrb[0].mxu0
        %v1684 = vpop.f32.mrb[0].mxu0
        %v1685 = vadd.f32 0.0, %v1684
        %v1686 = vpop.f32.mrb[0].mxu0
        %1687 = vdwg.mxu0
        %v1688 = vsel %vm1123, %v1545, -inf
        %1689 = vmax.xlane.f32.xlu0 %v1688
        %v1690 = vpop.xlane.xlu0 %1689
        %v1691 = vsel %vm1123, %v1548, -inf
        %1692 = vmax.xlane.f32.xlu0 %v1691
        %v1693 = vpop.xlane.xlu0 %1692
        %v1694 = vsel %vm1123, %v1553, -inf
        %1695 = vmax.xlane.f32.xlu0 %v1694
        %v1696 = vpop.xlane.xlu0 %1695
        %v1697 = vsel %vm1123, %v1556, -inf
        %1698 = vmax.xlane.f32.xlu0 %v1697
        %v1699 = vpop.xlane.xlu0 %1698
        %v1700 = vsel %vm1123, %v1561, -inf
        %1701 = vmax.xlane.f32.xlu0 %v1700
        %v1702 = vpop.xlane.xlu0 %1701
        %v1703 = vsel %vm1123, %v1564, -inf
        %1704 = vmax.xlane.f32.xlu0 %v1703
        %v1705 = vpop.xlane.xlu0 %1704
        %v1706 = vsel %vm1123, %v1569, -inf
        %1707 = vmax.xlane.f32.xlu0 %v1706
        %v1708 = vpop.xlane.xlu0 %1707
        %v1709 = vsel %vm1123, %v1572, -inf
        %1710 = vmax.xlane.f32.xlu0 %v1709
        %v1711 = vpop.xlane.xlu0 %1710
        %v1712 = vsel %vm1123, %v1658, -inf
        %1713 = vmax.xlane.f32.xlu0 %v1712
        %v1714 = vpop.xlane.xlu0 %1713
        %v1715 = vsel %vm1123, %v1661, -inf
        %1716 = vmax.xlane.f32.xlu0 %v1715
        %v1717 = vpop.xlane.xlu0 %1716
        %v1718 = vsel %vm1123, %v1666, -inf
        %1719 = vmax.xlane.f32.xlu0 %v1718
        %v1720 = vpop.xlane.xlu0 %1719
        %v1721 = vsel %vm1123, %v1669, -inf
        %1722 = vmax.xlane.f32.xlu0 %v1721
        %v1723 = vpop.xlane.xlu0 %1722
        %v1724 = vsel %vm1123, %v1674, -inf
        %1725 = vmax.xlane.f32.xlu0 %v1724
        %v1726 = vpop.xlane.xlu0 %1725
        %v1727 = vsel %vm1123, %v1677, -inf
        %1728 = vmax.xlane.f32.xlu0 %v1727
        %v1729 = vpop.xlane.xlu0 %1728
        %v1730 = vsel %vm1123, %v1682, -inf
        %1731 = vmax.xlane.f32.xlu0 %v1730
        %v1732 = vpop.xlane.xlu0 %1731
        %v1733 = vsel %vm1123, %v1685, -inf
        %1734 = vmax.xlane.f32.xlu0 %v1733
        %v1735 = vpop.xlane.xlu0 %1734
        %v1736 = vsub.f32 %v1545, %v1690
        %v1737 = vsub.f32 %v1548, %v1693
        %v1738 = vsub.f32 %v1553, %v1696
        %v1739 = vsub.f32 %v1556, %v1699
        %v1740 = vsub.f32 %v1561, %v1702
        %v1741 = vsub.f32 %v1564, %v1705
        %v1742 = vsub.f32 %v1569, %v1708
        %v1743 = vsub.f32 %v1572, %v1711
        %v1744 = vsub.f32 %v1658, %v1714
        %v1745 = vsub.f32 %v1661, %v1717
        %v1746 = vsub.f32 %v1666, %v1720
        %v1747 = vsub.f32 %v1669, %v1723
        %v1748 = vsub.f32 %v1674, %v1726
        %v1749 = vsub.f32 %v1677, %v1729
        %v1750 = vsub.f32 %v1682, %v1732
        %v1751 = vsub.f32 %v1685, %v1735
        %v1752 = vmul.f32 %v1736, 1.442695
        %v1753 = vpow.pop %v1752
        %v1754 = vmul.f32 %v1737, 1.442695
        %v1755 = vpow.pop %v1754
        %v1756 = vmul.f32 %v1738, 1.442695
        %v1757 = vpow.pop %v1756
        %v1758 = vmul.f32 %v1739, 1.442695
        %v1759 = vpow.pop %v1758
        %v1760 = vmul.f32 %v1740, 1.442695
        %v1761 = vpow.pop %v1760
        %v1762 = vmul.f32 %v1741, 1.442695
        %v1763 = vpow.pop %v1762
        %v1764 = vmul.f32 %v1742, 1.442695
        %v1765 = vpow.pop %v1764
        %v1766 = vmul.f32 %v1743, 1.442695
        %v1767 = vpow.pop %v1766
        %v1768 = vmul.f32 %v1744, 1.442695
        %v1769 = vpow.pop %v1768
        %v1770 = vmul.f32 %v1745, 1.442695
        %v1771 = vpow.pop %v1770
        %v1772 = vmul.f32 %v1746, 1.442695
        %v1773 = vpow.pop %v1772
        %v1774 = vmul.f32 %v1747, 1.442695
        %v1775 = vpow.pop %v1774
        %v1776 = vmul.f32 %v1748, 1.442695
        %v1777 = vpow.pop %v1776
        %v1778 = vmul.f32 %v1749, 1.442695
        %v1779 = vpow.pop %v1778
        %v1780 = vmul.f32 %v1750, 1.442695
        %v1781 = vpow.pop %v1780
        %v1782 = vmul.f32 %v1751, 1.442695
        %v1783 = vpow.pop %v1782
        %v1784 = vsel %vm1123, %v1753, 0.0
        %1785 = vadd.xlane.f32.xlu0 %v1784
        %v1786 = vpop.xlane.xlu0 %1785
        %v1787 = vsel %vm1123, %v1755, 0.0
        %1788 = vadd.xlane.f32.xlu0 %v1787
        %v1789 = vpop.xlane.xlu0 %1788
        %v1790 = vsel %vm1123, %v1757, 0.0
        %1791 = vadd.xlane.f32.xlu0 %v1790
        %v1792 = vpop.xlane.xlu0 %1791
        %v1793 = vsel %vm1123, %v1759, 0.0
        %1794 = vadd.xlane.f32.xlu0 %v1793
        %v1795 = vpop.xlane.xlu0 %1794
        %v1796 = vsel %vm1123, %v1761, 0.0
        %1797 = vadd.xlane.f32.xlu0 %v1796
        %v1798 = vpop.xlane.xlu0 %1797
        %v1799 = vsel %vm1123, %v1763, 0.0
        %1800 = vadd.xlane.f32.xlu0 %v1799
        %v1801 = vpop.xlane.xlu0 %1800
        %v1802 = vsel %vm1123, %v1765, 0.0
        %1803 = vadd.xlane.f32.xlu0 %v1802
        %v1804 = vpop.xlane.xlu0 %1803
        %v1805 = vsel %vm1123, %v1767, 0.0
        %1806 = vadd.xlane.f32.xlu0 %v1805
        %v1807 = vpop.xlane.xlu0 %1806
        %v1808 = vsel %vm1123, %v1769, 0.0
        %1809 = vadd.xlane.f32.xlu0 %v1808
        %v1810 = vpop.xlane.xlu0 %1809
        %v1811 = vsel %vm1123, %v1771, 0.0
        %1812 = vadd.xlane.f32.xlu0 %v1811
        %v1813 = vpop.xlane.xlu0 %1812
        %v1814 = vsel %vm1123, %v1773, 0.0
        %1815 = vadd.xlane.f32.xlu0 %v1814
        %v1816 = vpop.xlane.xlu0 %1815
        %v1817 = vsel %vm1123, %v1775, 0.0
        %1818 = vadd.xlane.f32.xlu0 %v1817
        %v1819 = vpop.xlane.xlu0 %1818
        %v1820 = vsel %vm1123, %v1777, 0.0
        %1821 = vadd.xlane.f32.xlu0 %v1820
        %v1822 = vpop.xlane.xlu0 %1821
        %v1823 = vsel %vm1123, %v1779, 0.0
        %1824 = vadd.xlane.f32.xlu0 %v1823
        %v1825 = vpop.xlane.xlu0 %1824
        %v1826 = vsel %vm1123, %v1781, 0.0
        %1827 = vadd.xlane.f32.xlu0 %v1826
        %v1828 = vpop.xlane.xlu0 %1827
        %v1829 = vsel %vm1123, %v1783, 0.0
        %1830 = vadd.xlane.f32.xlu0 %v1829
        %v1831 = vpop.xlane.xlu0 %1830
        %v1832 = vrcp.pop %v1786
        %v1833 = vrcp.pop %v1789
        %v1834 = vrcp.pop %v1792
        %v1835 = vrcp.pop %v1795
        %v1836 = vrcp.pop %v1798
        %v1837 = vrcp.pop %v1801
        %v1838 = vrcp.pop %v1804
        %v1839 = vrcp.pop %v1807
        %v1840 = vrcp.pop %v1810
        %v1841 = vrcp.pop %v1813
        %v1842 = vrcp.pop %v1816
        %v1843 = vrcp.pop %v1819
        %v1844 = vrcp.pop %v1822
        %v1845 = vrcp.pop %v1825
        %v1846 = vrcp.pop %v1828
        %v1847 = vrcp.pop %v1831
        %v1848 = vmul.f32 %v1753, %v1832
        %v1849 = vmul.f32 %v1755, %v1833
        %v1850 = vmul.f32 %v1757, %v1834
        %v1851 = vmul.f32 %v1759, %v1835
        %v1852 = vmul.f32 %v1761, %v1836
        %v1853 = vmul.f32 %v1763, %v1837
        %v1854 = vmul.f32 %v1765, %v1838
        %v1855 = vmul.f32 %v1767, %v1839
        %v1856 = vmul.f32 %v1769, %v1840
        %v1857 = vmul.f32 %v1771, %v1841
        %v1858 = vmul.f32 %v1773, %v1842
        %v1859 = vmul.f32 %v1775, %v1843
        %v1860 = vmul.f32 %v1777, %v1844
        %v1861 = vmul.f32 %v1779, %v1845
        %v1862 = vmul.f32 %v1781, %v1846
        %v1863 = vmul.f32 %v1783, %v1847
        %v1864 = vpack.c.bf16 %v1849, %v1848
        %v1865 = vpack.c.bf16 %v1851, %v1850
        %v1866 = vpack.c.bf16 %v1853, %v1852
        %v1867 = vpack.c.bf16 %v1855, %v1854
        %v1868 = vpack.c.bf16 %v1857, %v1856
        %v1869 = vpack.c.bf16 %v1859, %v1858
        %v1870 = vpack.c.bf16 %v1861, %v1860
        %v1871 = vpack.c.bf16 %v1863, %v1862
        %1876 = vrot.lane.b32.xlu0 %v936, 96
        %v1877 = vpop.permute.xlu0 %1876
        %1878 = vrot.lane.b32.xlu0 %v937, 96
        %v1879 = vpop.permute.xlu0 %1878
        %1880 = vrot.lane.b32.xlu0 %v938, 96
        %v1881 = vpop.permute.xlu0 %1880
        %1882 = vrot.lane.b32.xlu0 %v939, 96
        %v1883 = vpop.permute.xlu0 %1882
        %v1889 = vsel %vm1123, %v1864, 0
        %v1892 = vsel %vm1123, %v1865, 0
        %v1895 = vsel %vm1123, %v1866, 0
        %v1898 = vsel %vm1123, %v1867, 0
        %1900 = vmatprep.subr.bf16.mxu0 0
        %1901 = vmatpush1.bf16.msra.mxu0 %v1877
        %1902 = vmatprep.subr.bf16.mxu0 0
        %1903 = vmatpush1.bf16.msra.mxu0 %v1879
        %1904 = vmatprep.subr.bf16.mxu0 0
        %1905 = vmatpush1.bf16.msra.mxu0 %v1881
        %1906 = vmatprep.subr.bf16.mxu0 0
        %1907 = vmatpush1.bf16.msra.mxu0 %v1883
        %1908 = vmatprep.subr.bf16.mxu0 0
        %1909 = vmatpush1.bf16.msra.mxu0 0
        %1910 = vmatprep.subr.bf16.mxu0 0
        %1911 = vmatpush1.bf16.msra.mxu0 0
        %1912 = vmatprep.subr.bf16.mxu0 0
        %1913 = vmatpush1.bf16.msra.mxu0 0
        %1914 = vmatprep.subr.bf16.mxu0 0
        %1915 = vmatpush1.bf16.msra.mxu0 0
        %1916 = vmatprep.subr.bf16.mxu0 0
        %1917 = vmatpush1.bf16.msra.mxu0 0
        %1918 = vmatprep.subr.bf16.mxu0 0
        %1919 = vmatpush1.bf16.msra.mxu0 0
        %1920 = vmatprep.subr.bf16.mxu0 0
        %1921 = vmatpush1.bf16.msra.mxu0 0
        %1922 = vmatprep.subr.bf16.mxu0 0
        %1923 = vmatpush1.bf16.msra.mxu0 0
        %1924 = vmatprep.subr.bf16.mxu0 0
        %1925 = vmatpush1.bf16.msra.mxu0 0
        %1926 = vmatprep.subr.bf16.mxu0 0
        %1927 = vmatpush1.bf16.msra.mxu0 0
        %1928 = vmatprep.subr.bf16.mxu0 0
        %1929 = vmatpush1.bf16.msra.mxu0 0
        %1930 = vmatprep.subr.bf16.mxu0 0
        %1931 = vmatpush1.bf16.msra.mxu0 0
        %1932 = vmatprep.mubr.bf16.mxu0 0
        %1933 = vmatmul.mubr.bf16.gmra.mrb[0].mxu0 %v1889
        %v1934 = vpop.f32.mrb[0].mxu0
        %v1935 = vadd.f32 0.0, %v1934
        %v1936 = vpop.f32.mrb[0].mxu0
        %v1937 = vpop.f32.mrb[0].mxu0
        %v1938 = vadd.f32 0.0, %v1937
        %v1939 = vpop.f32.mrb[0].mxu0
        %1940 = vmatprep.mubr.bf16.mxu0 0
        %1941 = vmatmul.mubr.bf16.gmra.mrb[0].mxu0 %v1892
        %v1942 = vpop.f32.mrb[0].mxu0
        %v1943 = vadd.f32 0.0, %v1942
        %v1944 = vpop.f32.mrb[0].mxu0
        %v1945 = vpop.f32.mrb[0].mxu0
        %v1946 = vadd.f32 0.0, %v1945
        %v1947 = vpop.f32.mrb[0].mxu0
        %1948 = vmatprep.mubr.bf16.mxu0 0
        %1949 = vmatmul.mubr.bf16.gmra.mrb[0].mxu0 %v1895
        %v1950 = vpop.f32.mrb[0].mxu0
        %v1951 = vadd.f32 0.0, %v1950
        %v1952 = vpop.f32.mrb[0].mxu0
        %v1953 = vpop.f32.mrb[0].mxu0
        %v1954 = vadd.f32 0.0, %v1953
        %v1955 = vpop.f32.mrb[0].mxu0
        %1956 = vmatprep.mubr.bf16.mxu0 0
        %1957 = vmatmul.mubr.bf16.gmra.mrb[0].mxu0 %v1898
        %v1958 = vpop.f32.mrb[0].mxu0
        %v1959 = vadd.f32 0.0, %v1958
        %v1960 = vpop.f32.mrb[0].mxu0
        %v1961 = vpop.f32.mrb[0].mxu0
        %v1962 = vadd.f32 0.0, %v1961
        %v1963 = vpop.f32.mrb[0].mxu0
        %1964 = vdwg.mxu0
        %1969 = vrot.lane.b32.xlu0 %v940, 96
        %v1970 = vpop.permute.xlu0 %1969
        %1971 = vrot.lane.b32.xlu0 %v941, 96
        %v1972 = vpop.permute.xlu0 %1971
        %1973 = vrot.lane.b32.xlu0 %v942, 96
        %v1974 = vpop.permute.xlu0 %1973
        %1975 = vrot.lane.b32.xlu0 %v943, 96
        %v1976 = vpop.permute.xlu0 %1975
        %v1982 = vsel %vm1123, %v1868, 0
        %v1985 = vsel %vm1123, %v1869, 0
        %v1988 = vsel %vm1123, %v1870, 0
        %v1991 = vsel %vm1123, %v1871, 0
        %1993 = vmatprep.subr.bf16.mxu0 0
        %1994 = vmatpush1.bf16.msra.mxu0 %v1970
        %1995 = vmatprep.subr.bf16.mxu0 0
        %1996 = vmatpush1.bf16.msra.mxu0 %v1972
        %1997 = vmatprep.subr.bf16.mxu0 0
        %1998 = vmatpush1.bf16.msra.mxu0 %v1974
        %1999 = vmatprep.subr.bf16.mxu0 0
        %2000 = vmatpush1.bf16.msra.mxu0 %v1976
        %2001 = vmatprep.subr.bf16.mxu0 0
        %2002 = vmatpush1.bf16.msra.mxu0 0
        %2003 = vmatprep.subr.bf16.mxu0 0
        %2004 = vmatpush1.bf16.msra.mxu0 0
        %2005 = vmatprep.subr.bf16.mxu0 0
        %2006 = vmatpush1.bf16.msra.mxu0 0
        %2007 = vmatprep.subr.bf16.mxu0 0
        %2008 = vmatpush1.bf16.msra.mxu0 0
        %2009 = vmatprep.subr.bf16.mxu0 0
        %2010 = vmatpush1.bf16.msra.mxu0 0
        %2011 = vmatprep.subr.bf16.mxu0 0
        %2012 = vmatpush1.bf16.msra.mxu0 0
        %2013 = vmatprep.subr.bf16.mxu0 0
        %2014 = vmatpush1.bf16.msra.mxu0 0
        %2015 = vmatprep.subr.bf16.mxu0 0
        %2016 = vmatpush1.bf16.msra.mxu0 0
        %2017 = vmatprep.subr.bf16.mxu0 0
        %2018 = vmatpush1.bf16.msra.mxu0 0
        %2019 = vmatprep.subr.bf16.mxu0 0
        %2020 = vmatpush1.bf16.msra.mxu0 0
        %2021 = vmatprep.subr.bf16.mxu0 0
        %2022 = vmatpush1.bf16.msra.mxu0 0
        %2023 = vmatprep.subr.bf16.mxu0 0
        %2024 = vmatpush1.bf16.msra.mxu0 0
        %2025 = vmatprep.mubr.bf16.mxu0 0
        %2026 = vmatmul.mubr.bf16.gmra.mrb[0].mxu0 %v1982
        %v2027 = vpop.f32.mrb[0].mxu0
        %v2028 = vadd.f32 0.0, %v2027
        %v2029 = vpop.f32.mrb[0].mxu0
        %v2030 = vpop.f32.mrb[0].mxu0
        %v2031 = vadd.f32 0.0, %v2030
        %v2032 = vpop.f32.mrb[0].mxu0
        %2033 = vmatprep.mubr.bf16.mxu0 0
        %2034 = vmatmul.mubr.bf16.gmra.mrb[0].mxu0 %v1985
        %v2035 = vpop.f32.mrb[0].mxu0
        %v2036 = vadd.f32 0.0, %v2035
        %v2037 = vpop.f32.mrb[0].mxu0
        %v2038 = vpop.f32.mrb[0].mxu0
        %v2039 = vadd.f32 0.0, %v2038
        %v2040 = vpop.f32.mrb[0].mxu0
        %2041 = vmatprep.mubr.bf16.mxu0 0
        %2042 = vmatmul.mubr.bf16.gmra.mrb[0].mxu0 %v1988
        %v2043 = vpop.f32.mrb[0].mxu0
        %v2044 = vadd.f32 0.0, %v2043
        %v2045 = vpop.f32.mrb[0].mxu0
        %v2046 = vpop.f32.mrb[0].mxu0
        %v2047 = vadd.f32 0.0, %v2046
        %v2048 = vpop.f32.mrb[0].mxu0
        %2049 = vmatprep.mubr.bf16.mxu0 0
        %2050 = vmatmul.mubr.bf16.gmra.mrb[0].mxu0 %v1991
        %v2051 = vpop.f32.mrb[0].mxu0
        %v2052 = vadd.f32 0.0, %v2051
        %v2053 = vpop.f32.mrb[0].mxu0
        %v2054 = vpop.f32.mrb[0].mxu0
        %v2055 = vadd.f32 0.0, %v2054
        %v2056 = vpop.f32.mrb[0].mxu0
        %2057 = vdwg.mxu0
        %2058 = vrot.lane.b32.xlu0 %v920, 64
        %v2059 = vpop.permute.xlu0 %2058
        %2060 = vrot.lane.b32.xlu0 %v921, 64
        %v2061 = vpop.permute.xlu0 %2060
        %2062 = vrot.lane.b32.xlu0 %v922, 64
        %v2063 = vpop.permute.xlu0 %2062
        %2064 = vrot.lane.b32.xlu0 %v923, 64
        %v2065 = vpop.permute.xlu0 %2064
        %2066 = vrot.lane.b32.xlu0 %v928, 64
        %v2067 = vpop.permute.xlu0 %2066
        %2068 = vrot.lane.b32.xlu0 %v929, 64
        %v2069 = vpop.permute.xlu0 %2068
        %2070 = vrot.lane.b32.xlu0 %v930, 64
        %v2071 = vpop.permute.xlu0 %2070
        %2072 = vrot.lane.b32.xlu0 %v931, 64
        %v2073 = vpop.permute.xlu0 %2072
        %v2075 = vsel %vm944, %v2059, 0
        %v2078 = vsel %vm944, %v2061, 0
        %v2081 = vsel %vm944, %v2063, 0
        %v2084 = vsel %vm944, %v2065, 0
        %v2087 = vsel %vm944, %v2067, 0
        %v2090 = vsel %vm944, %v2069, 0
        %v2093 = vsel %vm944, %v2071, 0
        %v2096 = vsel %vm944, %v2073, 0
        %2098 = vmatprep.subr.bf16.mxu0 0
        %2099 = vmatpush1.bf16.xpose.msra.mxu0 %v2087
        %2100 = vmatprep.subr.bf16.mxu0 0
        %2101 = vmatpush1.bf16.xpose.msra.mxu0 %v2090
        %2102 = vmatprep.subr.bf16.mxu0 0
        %2103 = vmatpush1.bf16.xpose.msra.mxu0 %v2093
        %2104 = vmatprep.subr.bf16.mxu0 0
        %2105 = vmatpush1.bf16.xpose.msra.mxu0 %v2096
        %2106 = vmatprep.subr.bf16.mxu0 0
        %2107 = vmatpush1.bf16.xpose.msra.mxu0 0
        %2108 = vmatprep.subr.bf16.mxu0 0
        %2109 = vmatpush1.bf16.xpose.msra.mxu0 0
        %2110 = vmatprep.subr.bf16.mxu0 0
        %2111 = vmatpush1.bf16.xpose.msra.mxu0 0
        %2112 = vmatprep.subr.bf16.mxu0 0
        %2113 = vmatpush1.bf16.xpose.msra.mxu0 0
        %2114 = vmatprep.subr.bf16.mxu0 0
        %2115 = vmatpush1.bf16.xpose.msra.mxu0 0
        %2116 = vmatprep.subr.bf16.mxu0 0
        %2117 = vmatpush1.bf16.xpose.msra.mxu0 0
        %2118 = vmatprep.subr.bf16.mxu0 0
        %2119 = vmatpush1.bf16.xpose.msra.mxu0 0
        %2120 = vmatprep.subr.bf16.mxu0 0
        %2121 = vmatpush1.bf16.xpose.msra.mxu0 0
        %2122 = vmatprep.subr.bf16.mxu0 0
        %2123 = vmatpush1.bf16.xpose.msra.mxu0 0
        %2124 = vmatprep.subr.bf16.mxu0 0
        %2125 = vmatpush1.bf16.xpose.msra.mxu0 0
        %2126 = vmatprep.subr.bf16.mxu0 0
        %2127 = vmatpush1.bf16.xpose.msra.mxu0 0
        %2128 = vmatprep.subr.bf16.mxu0 0
        %2129 = vmatpush1.bf16.xpose.msra.mxu0 0
        %2130 = vmatprep.mubr.bf16.mxu0 0
        %2131 = vmatmul.mubr.bf16.gmra.mrb[0].mxu0 %v2075
        %v2132 = vpop.f32.mrb[0].mxu0
        %v2133 = vadd.f32 0.0, %v2132
        %v2134 = vpop.f32.mrb[0].mxu0
        %v2135 = vpop.f32.mrb[0].mxu0
        %v2136 = vadd.f32 0.0, %v2135
        %v2137 = vpop.f32.mrb[0].mxu0
        %2138 = vmatprep.mubr.bf16.mxu0 0
        %2139 = vmatmul.mubr.bf16.gmra.mrb[0].mxu0 %v2078
        %v2140 = vpop.f32.mrb[0].mxu0
        %v2141 = vadd.f32 0.0, %v2140
        %v2142 = vpop.f32.mrb[0].mxu0
        %v2143 = vpop.f32.mrb[0].mxu0
        %v2144 = vadd.f32 0.0, %v2143
        %v2145 = vpop.f32.mrb[0].mxu0
        %2146 = vmatprep.mubr.bf16.mxu0 0
        %2147 = vmatmul.mubr.bf16.gmra.mrb[0].mxu0 %v2081
        %v2148 = vpop.f32.mrb[0].mxu0
        %v2149 = vadd.f32 0.0, %v2148
        %v2150 = vpop.f32.mrb[0].mxu0
        %v2151 = vpop.f32.mrb[0].mxu0
        %v2152 = vadd.f32 0.0, %v2151
        %v2153 = vpop.f32.mrb[0].mxu0
        %2154 = vmatprep.mubr.bf16.mxu0 0
        %2155 = vmatmul.mubr.bf16.gmra.mrb[0].mxu0 %v2084
        %v2156 = vpop.f32.mrb[0].mxu0
        %v2157 = vadd.f32 0.0, %v2156
        %v2158 = vpop.f32.mrb[0].mxu0
        %v2159 = vpop.f32.mrb[0].mxu0
        %v2160 = vadd.f32 0.0, %v2159
        %v2161 = vpop.f32.mrb[0].mxu0
        %2162 = vdwg.mxu0
        %2163 = vrot.lane.b32.xlu0 %v924, 64
        %v2164 = vpop.permute.xlu0 %2163
        %2165 = vrot.lane.b32.xlu0 %v925, 64
        %v2166 = vpop.permute.xlu0 %2165
        %2167 = vrot.lane.b32.xlu0 %v926, 64
        %v2168 = vpop.permute.xlu0 %2167
        %2169 = vrot.lane.b32.xlu0 %v927, 64
        %v2170 = vpop.permute.xlu0 %2169
        %2171 = vrot.lane.b32.xlu0 %v932, 64
        %v2172 = vpop.permute.xlu0 %2171
        %2173 = vrot.lane.b32.xlu0 %v933, 64
        %v2174 = vpop.permute.xlu0 %2173
        %2175 = vrot.lane.b32.xlu0 %v934, 64
        %v2176 = vpop.permute.xlu0 %2175
        %2177 = vrot.lane.b32.xlu0 %v935, 64
        %v2178 = vpop.permute.xlu0 %2177
        %v2180 = vsel %vm944, %v2164, 0
        %v2183 = vsel %vm944, %v2166, 0
        %v2186 = vsel %vm944, %v2168, 0
        %v2189 = vsel %vm944, %v2170, 0
        %v2192 = vsel %vm944, %v2172, 0
        %v2195 = vsel %vm944, %v2174, 0
        %v2198 = vsel %vm944, %v2176, 0
        %v2201 = vsel %vm944, %v2178, 0
        %2203 = vmatprep.subr.bf16.mxu0 0
        %2204 = vmatpush1.bf16.xpose.msra.mxu0 %v2192
        %2205 = vmatprep.subr.bf16.mxu0 0
        %2206 = vmatpush1.bf16.xpose.msra.mxu0 %v2195
        %2207 = vmatprep.subr.bf16.mxu0 0
        %2208 = vmatpush1.bf16.xpose.msra.mxu0 %v2198
        %2209 = vmatprep.subr.bf16.mxu0 0
        %2210 = vmatpush1.bf16.xpose.msra.mxu0 %v2201
        %2211 = vmatprep.subr.bf16.mxu0 0
        %2212 = vmatpush1.bf16.xpose.msra.mxu0 0
        %2213 = vmatprep.subr.bf16.mxu0 0
        %2214 = vmatpush1.bf16.xpose.msra.mxu0 0
        %2215 = vmatprep.subr.bf16.mxu0 0
        %2216 = vmatpush1.bf16.xpose.msra.mxu0 0
        %2217 = vmatprep.subr.bf16.mxu0 0
        %2218 = vmatpush1.bf16.xpose.msra.mxu0 0
        %2219 = vmatprep.subr.bf16.mxu0 0
        %2220 = vmatpush1.bf16.xpose.msra.mxu0 0
        %2221 = vmatprep.subr.bf16.mxu0 0
        %2222 = vmatpush1.bf16.xpose.msra.mxu0 0
        %2223 = vmatprep.subr.bf16.mxu0 0
        %2224 = vmatpush1.bf16.xpose.msra.mxu0 0
        %2225 = vmatprep.subr.bf16.mxu0 0
        %2226 = vmatpush1.bf16.xpose.msra.mxu0 0
        %2227 = vmatprep.subr.bf16.mxu0 0
        %2228 = vmatpush1.bf16.xpose.msra.mxu0 0
        %2229 = vmatprep.subr.bf16.mxu0 0
        %2230 = vmatpush1.bf16.xpose.msra.mxu0 0
        %2231 = vmatprep.subr.bf16.mxu0 0
        %2232 = vmatpush1.bf16.xpose.msra.mxu0 0
        %2233 = vmatprep.subr.bf16.mxu0 0
        %2234 = vmatpush1.bf16.xpose.msra.mxu0 0
        %2235 = vmatprep.mubr.bf16.mxu0 0
        %2236 = vmatmul.mubr.bf16.gmra.mrb[0].mxu0 %v2180
        %v2237 = vpop.f32.mrb[0].mxu0
        %v2238 = vadd.f32 0.0, %v2237
        %v2239 = vpop.f32.mrb[0].mxu0
        %v2240 = vpop.f32.mrb[0].mxu0
        %v2241 = vadd.f32 0.0, %v2240
        %v2242 = vpop.f32.mrb[0].mxu0
        %2243 = vmatprep.mubr.bf16.mxu0 0
        %2244 = vmatmul.mubr.bf16.gmra.mrb[0].mxu0 %v2183
        %v2245 = vpop.f32.mrb[0].mxu0
        %v2246 = vadd.f32 0.0, %v2245
        %v2247 = vpop.f32.mrb[0].mxu0
        %v2248 = vpop.f32.mrb[0].mxu0
        %v2249 = vadd.f32 0.0, %v2248
        %v2250 = vpop.f32.mrb[0].mxu0
        %2251 = vmatprep.mubr.bf16.mxu0 0
        %2252 = vmatmul.mubr.bf16.gmra.mrb[0].mxu0 %v2186
        %v2253 = vpop.f32.mrb[0].mxu0
        %v2254 = vadd.f32 0.0, %v2253
        %v2255 = vpop.f32.mrb[0].mxu0
        %v2256 = vpop.f32.mrb[0].mxu0
        %v2257 = vadd.f32 0.0, %v2256
        %v2258 = vpop.f32.mrb[0].mxu0
        %2259 = vmatprep.mubr.bf16.mxu0 0
        %2260 = vmatmul.mubr.bf16.gmra.mrb[0].mxu0 %v2189
        %v2261 = vpop.f32.mrb[0].mxu0
        %v2262 = vadd.f32 0.0, %v2261
        %v2263 = vpop.f32.mrb[0].mxu0
        %v2264 = vpop.f32.mrb[0].mxu0
        %v2265 = vadd.f32 0.0, %v2264
        %v2266 = vpop.f32.mrb[0].mxu0
        %2267 = vdwg.mxu0
        %v2268 = vsel %vm1123, %v2133, -inf
        %2269 = vmax.xlane.f32.xlu0 %v2268
        %v2270 = vpop.xlane.xlu0 %2269
        %v2271 = vsel %vm1123, %v2136, -inf
        %2272 = vmax.xlane.f32.xlu0 %v2271
        %v2273 = vpop.xlane.xlu0 %2272
        %v2274 = vsel %vm1123, %v2141, -inf
        %2275 = vmax.xlane.f32.xlu0 %v2274
        %v2276 = vpop.xlane.xlu0 %2275
        %v2277 = vsel %vm1123, %v2144, -inf
        %2278 = vmax.xlane.f32.xlu0 %v2277
        %v2279 = vpop.xlane.xlu0 %2278
        %v2280 = vsel %vm1123, %v2149, -inf
        %2281 = vmax.xlane.f32.xlu0 %v2280
        %v2282 = vpop.xlane.xlu0 %2281
        %v2283 = vsel %vm1123, %v2152, -inf
        %2284 = vmax.xlane.f32.xlu0 %v2283
        %v2285 = vpop.xlane.xlu0 %2284
        %v2286 = vsel %vm1123, %v2157, -inf
        %2287 = vmax.xlane.f32.xlu0 %v2286
        %v2288 = vpop.xlane.xlu0 %2287
        %v2289 = vsel %vm1123, %v2160, -inf
        %2290 = vmax.xlane.f32.xlu0 %v2289
        %v2291 = vpop.xlane.xlu0 %2290
        %v2292 = vsel %vm1123, %v2238, -inf
        %2293 = vmax.xlane.f32.xlu0 %v2292
        %v2294 = vpop.xlane.xlu0 %2293
        %v2295 = vsel %vm1123, %v2241, -inf
        %2296 = vmax.xlane.f32.xlu0 %v2295
        %v2297 = vpop.xlane.xlu0 %2296
        %v2298 = vsel %vm1123, %v2246, -inf
        %2299 = vmax.xlane.f32.xlu0 %v2298
        %v2300 = vpop.xlane.xlu0 %2299
        %v2301 = vsel %vm1123, %v2249, -inf
        %2302 = vmax.xlane.f32.xlu0 %v2301
        %v2303 = vpop.xlane.xlu0 %2302
        %v2304 = vsel %vm1123, %v2254, -inf
        %2305 = vmax.xlane.f32.xlu0 %v2304
        %v2306 = vpop.xlane.xlu0 %2305
        %v2307 = vsel %vm1123, %v2257, -inf
        %2308 = vmax.xlane.f32.xlu0 %v2307
        %v2309 = vpop.xlane.xlu0 %2308
        %v2310 = vsel %vm1123, %v2262, -inf
        %2311 = vmax.xlane.f32.xlu0 %v2310
        %v2312 = vpop.xlane.xlu0 %2311
        %v2313 = vsel %vm1123, %v2265, -inf
        %2314 = vmax.xlane.f32.xlu0 %v2313
        %v2315 = vpop.xlane.xlu0 %2314
        %v2316 = vsub.f32 %v2133, %v2270
        %v2317 = vsub.f32 %v2136, %v2273
        %v2318 = vsub.f32 %v2141, %v2276
        %v2319 = vsub.f32 %v2144, %v2279
        %v2320 = vsub.f32 %v2149, %v2282
        %v2321 = vsub.f32 %v2152, %v2285
        %v2322 = vsub.f32 %v2157, %v2288
        %v2323 = vsub.f32 %v2160, %v2291
        %v2324 = vsub.f32 %v2238, %v2294
        %v2325 = vsub.f32 %v2241, %v2297
        %v2326 = vsub.f32 %v2246, %v2300
        %v2327 = vsub.f32 %v2249, %v2303
        %v2328 = vsub.f32 %v2254, %v2306
        %v2329 = vsub.f32 %v2257, %v2309
        %v2330 = vsub.f32 %v2262, %v2312
        %v2331 = vsub.f32 %v2265, %v2315
        %v2332 = vmul.f32 %v2316, 1.442695
        %v2333 = vpow.pop %v2332
        %v2334 = vmul.f32 %v2317, 1.442695
        %v2335 = vpow.pop %v2334
        %v2336 = vmul.f32 %v2318, 1.442695
        %v2337 = vpow.pop %v2336
        %v2338 = vmul.f32 %v2319, 1.442695
        %v2339 = vpow.pop %v2338
        %v2340 = vmul.f32 %v2320, 1.442695
        %v2341 = vpow.pop %v2340
        %v2342 = vmul.f32 %v2321, 1.442695
        %v2343 = vpow.pop %v2342
        %v2344 = vmul.f32 %v2322, 1.442695
        %v2345 = vpow.pop %v2344
        %v2346 = vmul.f32 %v2323, 1.442695
        %v2347 = vpow.pop %v2346
        %v2348 = vmul.f32 %v2324, 1.442695
        %v2349 = vpow.pop %v2348
        %v2350 = vmul.f32 %v2325, 1.442695
        %v2351 = vpow.pop %v2350
        %v2352 = vmul.f32 %v2326, 1.442695
        %v2353 = vpow.pop %v2352
        %v2354 = vmul.f32 %v2327, 1.442695
        %v2355 = vpow.pop %v2354
        %v2356 = vmul.f32 %v2328, 1.442695
        %v2357 = vpow.pop %v2356
        %v2358 = vmul.f32 %v2329, 1.442695
        %v2359 = vpow.pop %v2358
        %v2360 = vmul.f32 %v2330, 1.442695
        %v2361 = vpow.pop %v2360
        %v2362 = vmul.f32 %v2331, 1.442695
        %v2363 = vpow.pop %v2362
        %v2364 = vsel %vm1123, %v2333, 0.0
        %2365 = vadd.xlane.f32.xlu0 %v2364
        %v2366 = vpop.xlane.xlu0 %2365
        %v2367 = vsel %vm1123, %v2335, 0.0
        %2368 = vadd.xlane.f32.xlu0 %v2367
        %v2369 = vpop.xlane.xlu0 %2368
        %v2370 = vsel %vm1123, %v2337, 0.0
        %2371 = vadd.xlane.f32.xlu0 %v2370
        %v2372 = vpop.xlane.xlu0 %2371
        %v2373 = vsel %vm1123, %v2339, 0.0
        %2374 = vadd.xlane.f32.xlu0 %v2373
        %v2375 = vpop.xlane.xlu0 %2374
        %v2376 = vsel %vm1123, %v2341, 0.0
        %2377 = vadd.xlane.f32.xlu0 %v2376
        %v2378 = vpop.xlane.xlu0 %2377
        %v2379 = vsel %vm1123, %v2343, 0.0
        %2380 = vadd.xlane.f32.xlu0 %v2379
        %v2381 = vpop.xlane.xlu0 %2380
        %v2382 = vsel %vm1123, %v2345, 0.0
        %2383 = vadd.xlane.f32.xlu0 %v2382
        %v2384 = vpop.xlane.xlu0 %2383
        %v2385 = vsel %vm1123, %v2347, 0.0
        %2386 = vadd.xlane.f32.xlu0 %v2385
        %v2387 = vpop.xlane.xlu0 %2386
        %v2388 = vsel %vm1123, %v2349, 0.0
        %2389 = vadd.xlane.f32.xlu0 %v2388
        %v2390 = vpop.xlane.xlu0 %2389
        %v2391 = vsel %vm1123, %v2351, 0.0
        %2392 = vadd.xlane.f32.xlu0 %v2391
        %v2393 = vpop.xlane.xlu0 %2392
        %v2394 = vsel %vm1123, %v2353, 0.0
        %2395 = vadd.xlane.f32.xlu0 %v2394
        %v2396 = vpop.xlane.xlu0 %2395
        %v2397 = vsel %vm1123, %v2355, 0.0
        %2398 = vadd.xlane.f32.xlu0 %v2397
        %v2399 = vpop.xlane.xlu0 %2398
        %v2400 = vsel %vm1123, %v2357, 0.0
        %2401 = vadd.xlane.f32.xlu0 %v2400
        %v2402 = vpop.xlane.xlu0 %2401
        %v2403 = vsel %vm1123, %v2359, 0.0
        %2404 = vadd.xlane.f32.xlu0 %v2403
        %v2405 = vpop.xlane.xlu0 %2404
        %v2406 = vsel %vm1123, %v2361, 0.0
        %2407 = vadd.xlane.f32.xlu0 %v2406
        %v2408 = vpop.xlane.xlu0 %2407
        %v2409 = vsel %vm1123, %v2363, 0.0
        %2410 = vadd.xlane.f32.xlu0 %v2409
        %v2411 = vpop.xlane.xlu0 %2410
        %v2412 = vrcp.pop %v2366
        %v2413 = vrcp.pop %v2369
        %v2414 = vrcp.pop %v2372
        %v2415 = vrcp.pop %v2375
        %v2416 = vrcp.pop %v2378
        %v2417 = vrcp.pop %v2381
        %v2418 = vrcp.pop %v2384
        %v2419 = vrcp.pop %v2387
        %v2420 = vrcp.pop %v2390
        %v2421 = vrcp.pop %v2393
        %v2422 = vrcp.pop %v2396
        %v2423 = vrcp.pop %v2399
        %v2424 = vrcp.pop %v2402
        %v2425 = vrcp.pop %v2405
        %v2426 = vrcp.pop %v2408
        %v2427 = vrcp.pop %v2411
        %v2428 = vmul.f32 %v2333, %v2412
        %v2429 = vmul.f32 %v2335, %v2413
        %v2430 = vmul.f32 %v2337, %v2414
        %v2431 = vmul.f32 %v2339, %v2415
        %v2432 = vmul.f32 %v2341, %v2416
        %v2433 = vmul.f32 %v2343, %v2417
        %v2434 = vmul.f32 %v2345, %v2418
        %v2435 = vmul.f32 %v2347, %v2419
        %v2436 = vmul.f32 %v2349, %v2420
        %v2437 = vmul.f32 %v2351, %v2421
        %v2438 = vmul.f32 %v2353, %v2422
        %v2439 = vmul.f32 %v2355, %v2423
        %v2440 = vmul.f32 %v2357, %v2424
        %v2441 = vmul.f32 %v2359, %v2425
        %v2442 = vmul.f32 %v2361, %v2426
        %v2443 = vmul.f32 %v2363, %v2427
        %v2444 = vpack.c.bf16 %v2429, %v2428
        %v2445 = vpack.c.bf16 %v2431, %v2430
        %v2446 = vpack.c.bf16 %v2433, %v2432
        %v2447 = vpack.c.bf16 %v2435, %v2434
        %v2448 = vpack.c.bf16 %v2437, %v2436
        %v2449 = vpack.c.bf16 %v2439, %v2438
        %v2450 = vpack.c.bf16 %v2441, %v2440
        %v2451 = vpack.c.bf16 %v2443, %v2442
        %2452 = vrot.lane.b32.xlu0 %v936, 64
        %v2453 = vpop.permute.xlu0 %2452
        %2454 = vrot.lane.b32.xlu0 %v937, 64
        %v2455 = vpop.permute.xlu0 %2454
        %2456 = vrot.lane.b32.xlu0 %v938, 64
        %v2457 = vpop.permute.xlu0 %2456
        %2458 = vrot.lane.b32.xlu0 %v939, 64
        %v2459 = vpop.permute.xlu0 %2458
        %v2465 = vsel %vm1123, %v2444, 0
        %v2468 = vsel %vm1123, %v2445, 0
        %v2471 = vsel %vm1123, %v2446, 0
        %v2474 = vsel %vm1123, %v2447, 0
        %2476 = vmatprep.subr.bf16.mxu0 0
        %2477 = vmatpush1.bf16.msra.mxu0 %v2453
        %2478 = vmatprep.subr.bf16.mxu0 0
        %2479 = vmatpush1.bf16.msra.mxu0 %v2455
        %2480 = vmatprep.subr.bf16.mxu0 0
        %2481 = vmatpush1.bf16.msra.mxu0 %v2457
        %2482 = vmatprep.subr.bf16.mxu0 0
        %2483 = vmatpush1.bf16.msra.mxu0 %v2459
        %2484 = vmatprep.subr.bf16.mxu0 0
        %2485 = vmatpush1.bf16.msra.mxu0 0
        %2486 = vmatprep.subr.bf16.mxu0 0
        %2487 = vmatpush1.bf16.msra.mxu0 0
        %2488 = vmatprep.subr.bf16.mxu0 0
        %2489 = vmatpush1.bf16.msra.mxu0 0
        %2490 = vmatprep.subr.bf16.mxu0 0
        %2491 = vmatpush1.bf16.msra.mxu0 0
        %2492 = vmatprep.subr.bf16.mxu0 0
        %2493 = vmatpush1.bf16.msra.mxu0 0
        %2494 = vmatprep.subr.bf16.mxu0 0
        %2495 = vmatpush1.bf16.msra.mxu0 0
        %2496 = vmatprep.subr.bf16.mxu0 0
        %2497 = vmatpush1.bf16.msra.mxu0 0
        %2498 = vmatprep.subr.bf16.mxu0 0
        %2499 = vmatpush1.bf16.msra.mxu0 0
        %2500 = vmatprep.subr.bf16.mxu0 0
        %2501 = vmatpush1.bf16.msra.mxu0 0
        %2502 = vmatprep.subr.bf16.mxu0 0
        %2503 = vmatpush1.bf16.msra.mxu0 0
        %2504 = vmatprep.subr.bf16.mxu0 0
        %2505 = vmatpush1.bf16.msra.mxu0 0
        %2506 = vmatprep.subr.bf16.mxu0 0
        %2507 = vmatpush1.bf16.msra.mxu0 0
        %2508 = vmatprep.mubr.bf16.mxu0 0
        %2509 = vmatmul.mubr.bf16.gmra.mrb[0].mxu0 %v2465
        %v2510 = vpop.f32.mrb[0].mxu0
        %v2511 = vadd.f32 0.0, %v2510
        %v2512 = vpop.f32.mrb[0].mxu0
        %v2513 = vpop.f32.mrb[0].mxu0
        %v2514 = vadd.f32 0.0, %v2513
        %v2515 = vpop.f32.mrb[0].mxu0
        %2516 = vmatprep.mubr.bf16.mxu0 0
        %2517 = vmatmul.mubr.bf16.gmra.mrb[0].mxu0 %v2468
        %v2518 = vpop.f32.mrb[0].mxu0
        %v2519 = vadd.f32 0.0, %v2518
        %v2520 = vpop.f32.mrb[0].mxu0
        %v2521 = vpop.f32.mrb[0].mxu0
        %v2522 = vadd.f32 0.0, %v2521
        %v2523 = vpop.f32.mrb[0].mxu0
        %2524 = vmatprep.mubr.bf16.mxu0 0
        %2525 = vmatmul.mubr.bf16.gmra.mrb[0].mxu0 %v2471
        %v2526 = vpop.f32.mrb[0].mxu0
        %v2527 = vadd.f32 0.0, %v2526
        %v2528 = vpop.f32.mrb[0].mxu0
        %v2529 = vpop.f32.mrb[0].mxu0
        %v2530 = vadd.f32 0.0, %v2529
        %v2531 = vpop.f32.mrb[0].mxu0
        %2532 = vmatprep.mubr.bf16.mxu0 0
        %2533 = vmatmul.mubr.bf16.gmra.mrb[0].mxu0 %v2474
        %v2534 = vpop.f32.mrb[0].mxu0
        %v2535 = vadd.f32 0.0, %v2534
        %v2536 = vpop.f32.mrb[0].mxu0
        %v2537 = vpop.f32.mrb[0].mxu0
        %v2538 = vadd.f32 0.0, %v2537
        %v2539 = vpop.f32.mrb[0].mxu0
        %2540 = vdwg.mxu0
        %2541 = vrot.lane.b32.xlu0 %v940, 64
        %v2542 = vpop.permute.xlu0 %2541
        %2543 = vrot.lane.b32.xlu0 %v941, 64
        %v2544 = vpop.permute.xlu0 %2543
        %2545 = vrot.lane.b32.xlu0 %v942, 64
        %v2546 = vpop.permute.xlu0 %2545
        %2547 = vrot.lane.b32.xlu0 %v943, 64
        %v2548 = vpop.permute.xlu0 %2547
        %v2554 = vsel %vm1123, %v2448, 0
        %v2557 = vsel %vm1123, %v2449, 0
        %v2560 = vsel %vm1123, %v2450, 0
        %v2563 = vsel %vm1123, %v2451, 0
        %2565 = vmatprep.subr.bf16.mxu0 0
        %2566 = vmatpush1.bf16.msra.mxu0 %v2542
        %2567 = vmatprep.subr.bf16.mxu0 0
        %2568 = vmatpush1.bf16.msra.mxu0 %v2544
        %2569 = vmatprep.subr.bf16.mxu0 0
        %2570 = vmatpush1.bf16.msra.mxu0 %v2546
        %2571 = vmatprep.subr.bf16.mxu0 0
        %2572 = vmatpush1.bf16.msra.mxu0 %v2548
        %2573 = vmatprep.subr.bf16.mxu0 0
        %2574 = vmatpush1.bf16.msra.mxu0 0
        %2575 = vmatprep.subr.bf16.mxu0 0
        %2576 = vmatpush1.bf16.msra.mxu0 0
        %2577 = vmatprep.subr.bf16.mxu0 0
        %2578 = vmatpush1.bf16.msra.mxu0 0
        %2579 = vmatprep.subr.bf16.mxu0 0
        %2580 = vmatpush1.bf16.msra.mxu0 0
        %2581 = vmatprep.subr.bf16.mxu0 0
        %2582 = vmatpush1.bf16.msra.mxu0 0
        %2583 = vmatprep.subr.bf16.mxu0 0
        %2584 = vmatpush1.bf16.msra.mxu0 0
        %2585 = vmatprep.subr.bf16.mxu0 0
        %2586 = vmatpush1.bf16.msra.mxu0 0
        %2587 = vmatprep.subr.bf16.mxu0 0
        %2588 = vmatpush1.bf16.msra.mxu0 0
        %2589 = vmatprep.subr.bf16.mxu0 0
        %2590 = vmatpush1.bf16.msra.mxu0 0
        %2591 = vmatprep.subr.bf16.mxu0 0
        %2592 = vmatpush1.bf16.msra.mxu0 0
        %2593 = vmatprep.subr.bf16.mxu0 0
        %2594 = vmatpush1.bf16.msra.mxu0 0
        %2595 = vmatprep.subr.bf16.mxu0 0
        %2596 = vmatpush1.bf16.msra.mxu0 0
        %2597 = vmatprep.mubr.bf16.mxu0 0
        %2598 = vmatmul.mubr.bf16.gmra.mrb[0].mxu0 %v2554
        %v2599 = vpop.f32.mrb[0].mxu0
        %v2600 = vadd.f32 0.0, %v2599
        %v2601 = vpop.f32.mrb[0].mxu0
        %v2602 = vpop.f32.mrb[0].mxu0
        %v2603 = vadd.f32 0.0, %v2602
        %v2604 = vpop.f32.mrb[0].mxu0
        %2605 = vmatprep.mubr.bf16.mxu0 0
        %2606 = vmatmul.mubr.bf16.gmra.mrb[0].mxu0 %v2557
        %v2607 = vpop.f32.mrb[0].mxu0
        %v2608 = vadd.f32 0.0, %v2607
        %v2609 = vpop.f32.mrb[0].mxu0
        %v2610 = vpop.f32.mrb[0].mxu0
        %v2611 = vadd.f32 0.0, %v2610
        %v2612 = vpop.f32.mrb[0].mxu0
        %2613 = vmatprep.mubr.bf16.mxu0 0
        %2614 = vmatmul.mubr.bf16.gmra.mrb[0].mxu0 %v2560
        %v2615 = vpop.f32.mrb[0].mxu0
        %v2616 = vadd.f32 0.0, %v2615
        %v2617 = vpop.f32.mrb[0].mxu0
        %v2618 = vpop.f32.mrb[0].mxu0
        %v2619 = vadd.f32 0.0, %v2618
        %v2620 = vpop.f32.mrb[0].mxu0
        %2621 = vmatprep.mubr.bf16.mxu0 0
        %2622 = vmatmul.mubr.bf16.gmra.mrb[0].mxu0 %v2563
        %v2623 = vpop.f32.mrb[0].mxu0
        %v2624 = vadd.f32 0.0, %v2623
        %v2625 = vpop.f32.mrb[0].mxu0
        %v2626 = vpop.f32.mrb[0].mxu0
        %v2627 = vadd.f32 0.0, %v2626
        %v2628 = vpop.f32.mrb[0].mxu0
        %2629 = vdwg.mxu0
        %2630 = vrot.lane.b32.xlu0 %v920, 32
        %v2631 = vpop.permute.xlu0 %2630
        %2632 = vrot.lane.b32.xlu0 %v921, 32
        %v2633 = vpop.permute.xlu0 %2632
        %2634 = vrot.lane.b32.xlu0 %v922, 32
        %v2635 = vpop.permute.xlu0 %2634
        %2636 = vrot.lane.b32.xlu0 %v923, 32
        %v2637 = vpop.permute.xlu0 %2636
        %2638 = vrot.lane.b32.xlu0 %v928, 32
        %v2639 = vpop.permute.xlu0 %2638
        %2640 = vrot.lane.b32.xlu0 %v929, 32
        %v2641 = vpop.permute.xlu0 %2640
        %2642 = vrot.lane.b32.xlu0 %v930, 32
        %v2643 = vpop.permute.xlu0 %2642
        %2644 = vrot.lane.b32.xlu0 %v931, 32
        %v2645 = vpop.permute.xlu0 %2644
        %v2647 = vsel %vm944, %v2631, 0
        %v2650 = vsel %vm944, %v2633, 0
        %v2653 = vsel %vm944, %v2635, 0
        %v2656 = vsel %vm944, %v2637, 0
        %v2659 = vsel %vm944, %v2639, 0
        %v2662 = vsel %vm944, %v2641, 0
        %v2665 = vsel %vm944, %v2643, 0
        %v2668 = vsel %vm944, %v2645, 0
        %2670 = vmatprep.subr.bf16.mxu0 0
        %2671 = vmatpush1.bf16.xpose.msra.mxu0 %v2659
        %2672 = vmatprep.subr.bf16.mxu0 0
        %2673 = vmatpush1.bf16.xpose.msra.mxu0 %v2662
        %2674 = vmatprep.subr.bf16.mxu0 0
        %2675 = vmatpush1.bf16.xpose.msra.mxu0 %v2665
        %2676 = vmatprep.subr.bf16.mxu0 0
        %2677 = vmatpush1.bf16.xpose.msra.mxu0 %v2668
        %2678 = vmatprep.subr.bf16.mxu0 0
        %2679 = vmatpush1.bf16.xpose.msra.mxu0 0
        %2680 = vmatprep.subr.bf16.mxu0 0
        %2681 = vmatpush1.bf16.xpose.msra.mxu0 0
        %2682 = vmatprep.subr.bf16.mxu0 0
        %2683 = vmatpush1.bf16.xpose.msra.mxu0 0
        %2684 = vmatprep.subr.bf16.mxu0 0
        %2685 = vmatpush1.bf16.xpose.msra.mxu0 0
        %2686 = vmatprep.subr.bf16.mxu0 0
        %2687 = vmatpush1.bf16.xpose.msra.mxu0 0
        %2688 = vmatprep.subr.bf16.mxu0 0
        %2689 = vmatpush1.bf16.xpose.msra.mxu0 0
        %2690 = vmatprep.subr.bf16.mxu0 0
        %2691 = vmatpush1.bf16.xpose.msra.mxu0 0
        %2692 = vmatprep.subr.bf16.mxu0 0
        %2693 = vmatpush1.bf16.xpose.msra.mxu0 0
        %2694 = vmatprep.subr.bf16.mxu0 0
        %2695 = vmatpush1.bf16.xpose.msra.mxu0 0
        %2696 = vmatprep.subr.bf16.mxu0 0
        %2697 = vmatpush1.bf16.xpose.msra.mxu0 0
        %2698 = vmatprep.subr.bf16.mxu0 0
        %2699 = vmatpush1.bf16.xpose.msra.mxu0 0
        %2700 = vmatprep.subr.bf16.mxu0 0
        %2701 = vmatpush1.bf16.xpose.msra.mxu0 0
        %2702 = vmatprep.mubr.bf16.mxu0 0
        %2703 = vmatmul.mubr.bf16.gmra.mrb[0].mxu0 %v2647
        %v2704 = vpop.f32.mrb[0].mxu0
        %v2705 = vadd.f32 0.0, %v2704
        %v2706 = vpop.f32.mrb[0].mxu0
        %v2707 = vpop.f32.mrb[0].mxu0
        %v2708 = vadd.f32 0.0, %v2707
        %v2709 = vpop.f32.mrb[0].mxu0
        %2710 = vmatprep.mubr.bf16.mxu0 0
        %2711 = vmatmul.mubr.bf16.gmra.mrb[0].mxu0 %v2650
        %v2712 = vpop.f32.mrb[0].mxu0
        %v2713 = vadd.f32 0.0, %v2712
        %v2714 = vpop.f32.mrb[0].mxu0
        %v2715 = vpop.f32.mrb[0].mxu0
        %v2716 = vadd.f32 0.0, %v2715
        %v2717 = vpop.f32.mrb[0].mxu0
        %2718 = vmatprep.mubr.bf16.mxu0 0
        %2719 = vmatmul.mubr.bf16.gmra.mrb[0].mxu0 %v2653
        %v2720 = vpop.f32.mrb[0].mxu0
        %v2721 = vadd.f32 0.0, %v2720
        %v2722 = vpop.f32.mrb[0].mxu0
        %v2723 = vpop.f32.mrb[0].mxu0
        %v2724 = vadd.f32 0.0, %v2723
        %v2725 = vpop.f32.mrb[0].mxu0
        %2726 = vmatprep.mubr.bf16.mxu0 0
        %2727 = vmatmul.mubr.bf16.gmra.mrb[0].mxu0 %v2656
        %v2728 = vpop.f32.mrb[0].mxu0
        %v2729 = vadd.f32 0.0, %v2728
        %v2730 = vpop.f32.mrb[0].mxu0
        %v2731 = vpop.f32.mrb[0].mxu0
        %v2732 = vadd.f32 0.0, %v2731
        %v2733 = vpop.f32.mrb[0].mxu0
        %2734 = vdwg.mxu0
        %2735 = vrot.lane.b32.xlu0 %v924, 32
        %v2736 = vpop.permute.xlu0 %2735
        %2737 = vrot.lane.b32.xlu0 %v925, 32
        %v2738 = vpop.permute.xlu0 %2737
        %2739 = vrot.lane.b32.xlu0 %v926, 32
        %v2740 = vpop.permute.xlu0 %2739
        %2741 = vrot.lane.b32.xlu0 %v927, 32
        %v2742 = vpop.permute.xlu0 %2741
        %2743 = vrot.lane.b32.xlu0 %v932, 32
        %v2744 = vpop.permute.xlu0 %2743
        %2745 = vrot.lane.b32.xlu0 %v933, 32
        %v2746 = vpop.permute.xlu0 %2745
        %2747 = vrot.lane.b32.xlu0 %v934, 32
        %v2748 = vpop.permute.xlu0 %2747
        %2749 = vrot.lane.b32.xlu0 %v935, 32
        %v2750 = vpop.permute.xlu0 %2749
        %v2752 = vsel %vm944, %v2736, 0
        %v2755 = vsel %vm944, %v2738, 0
        %v2758 = vsel %vm944, %v2740, 0
        %v2761 = vsel %vm944, %v2742, 0
        %v2764 = vsel %vm944, %v2744, 0
        %v2767 = vsel %vm944, %v2746, 0
        %v2770 = vsel %vm944, %v2748, 0
        %v2773 = vsel %vm944, %v2750, 0
        %2775 = vmatprep.subr.bf16.mxu0 0
        %2776 = vmatpush1.bf16.xpose.msra.mxu0 %v2764
        %2777 = vmatprep.subr.bf16.mxu0 0
        %2778 = vmatpush1.bf16.xpose.msra.mxu0 %v2767
        %2779 = vmatprep.subr.bf16.mxu0 0
        %2780 = vmatpush1.bf16.xpose.msra.mxu0 %v2770
        %2781 = vmatprep.subr.bf16.mxu0 0
        %2782 = vmatpush1.bf16.xpose.msra.mxu0 %v2773
        %2783 = vmatprep.subr.bf16.mxu0 0
        %2784 = vmatpush1.bf16.xpose.msra.mxu0 0
        %2785 = vmatprep.subr.bf16.mxu0 0
        %2786 = vmatpush1.bf16.xpose.msra.mxu0 0
        %2787 = vmatprep.subr.bf16.mxu0 0
        %2788 = vmatpush1.bf16.xpose.msra.mxu0 0
        %2789 = vmatprep.subr.bf16.mxu0 0
        %2790 = vmatpush1.bf16.xpose.msra.mxu0 0
        %2791 = vmatprep.subr.bf16.mxu0 0
        %2792 = vmatpush1.bf16.xpose.msra.mxu0 0
        %2793 = vmatprep.subr.bf16.mxu0 0
        %2794 = vmatpush1.bf16.xpose.msra.mxu0 0
        %2795 = vmatprep.subr.bf16.mxu0 0
        %2796 = vmatpush1.bf16.xpose.msra.mxu0 0
        %2797 = vmatprep.subr.bf16.mxu0 0
        %2798 = vmatpush1.bf16.xpose.msra.mxu0 0
        %2799 = vmatprep.subr.bf16.mxu0 0
        %2800 = vmatpush1.bf16.xpose.msra.mxu0 0
        %2801 = vmatprep.subr.bf16.mxu0 0
        %2802 = vmatpush1.bf16.xpose.msra.mxu0 0
        %2803 = vmatprep.subr.bf16.mxu0 0
        %2804 = vmatpush1.bf16.xpose.msra.mxu0 0
        %2805 = vmatprep.subr.bf16.mxu0 0
        %2806 = vmatpush1.bf16.xpose.msra.mxu0 0
        %2807 = vmatprep.mubr.bf16.mxu0 0
        %2808 = vmatmul.mubr.bf16.gmra.mrb[0].mxu0 %v2752
        %v2809 = vpop.f32.mrb[0].mxu0
        %v2810 = vadd.f32 0.0, %v2809
        %v2811 = vpop.f32.mrb[0].mxu0
        %v2812 = vpop.f32.mrb[0].mxu0
        %v2813 = vadd.f32 0.0, %v2812
        %v2814 = vpop.f32.mrb[0].mxu0
        %2815 = vmatprep.mubr.bf16.mxu0 0
        %2816 = vmatmul.mubr.bf16.gmra.mrb[0].mxu0 %v2755
        %v2817 = vpop.f32.mrb[0].mxu0
        %v2818 = vadd.f32 0.0, %v2817
        %v2819 = vpop.f32.mrb[0].mxu0
        %v2820 = vpop.f32.mrb[0].mxu0
        %v2821 = vadd.f32 0.0, %v2820
        %v2822 = vpop.f32.mrb[0].mxu0
        %2823 = vmatprep.mubr.bf16.mxu0 0
        %2824 = vmatmul.mubr.bf16.gmra.mrb[0].mxu0 %v2758
        %v2825 = vpop.f32.mrb[0].mxu0
        %v2826 = vadd.f32 0.0, %v2825
        %v2827 = vpop.f32.mrb[0].mxu0
        %v2828 = vpop.f32.mrb[0].mxu0
        %v2829 = vadd.f32 0.0, %v2828
        %v2830 = vpop.f32.mrb[0].mxu0
        %2831 = vmatprep.mubr.bf16.mxu0 0
        %2832 = vmatmul.mubr.bf16.gmra.mrb[0].mxu0 %v2761
        %v2833 = vpop.f32.mrb[0].mxu0
        %v2834 = vadd.f32 0.0, %v2833
        %v2835 = vpop.f32.mrb[0].mxu0
        %v2836 = vpop.f32.mrb[0].mxu0
        %v2837 = vadd.f32 0.0, %v2836
        %v2838 = vpop.f32.mrb[0].mxu0
        %2839 = vdwg.mxu0
        %v2840 = vsel %vm1123, %v2705, -inf
        %2841 = vmax.xlane.f32.xlu0 %v2840
        %v2842 = vpop.xlane.xlu0 %2841
        %v2843 = vsel %vm1123, %v2708, -inf
        %2844 = vmax.xlane.f32.xlu0 %v2843
        %v2845 = vpop.xlane.xlu0 %2844
        %v2846 = vsel %vm1123, %v2713, -inf
        %2847 = vmax.xlane.f32.xlu0 %v2846
        %v2848 = vpop.xlane.xlu0 %2847
        %v2849 = vsel %vm1123, %v2716, -inf
        %2850 = vmax.xlane.f32.xlu0 %v2849
        %v2851 = vpop.xlane.xlu0 %2850
        %v2852 = vsel %vm1123, %v2721, -inf
        %2853 = vmax.xlane.f32.xlu0 %v2852
        %v2854 = vpop.xlane.xlu0 %2853
        %v2855 = vsel %vm1123, %v2724, -inf
        %2856 = vmax.xlane.f32.xlu0 %v2855
        %v2857 = vpop.xlane.xlu0 %2856
        %v2858 = vsel %vm1123, %v2729, -inf
        %2859 = vmax.xlane.f32.xlu0 %v2858
        %v2860 = vpop.xlane.xlu0 %2859
        %v2861 = vsel %vm1123, %v2732, -inf
        %2862 = vmax.xlane.f32.xlu0 %v2861
        %v2863 = vpop.xlane.xlu0 %2862
        %v2864 = vsel %vm1123, %v2810, -inf
        %2865 = vmax.xlane.f32.xlu0 %v2864
        %v2866 = vpop.xlane.xlu0 %2865
        %v2867 = vsel %vm1123, %v2813, -inf
        %2868 = vmax.xlane.f32.xlu0 %v2867
        %v2869 = vpop.xlane.xlu0 %2868
        %v2870 = vsel %vm1123, %v2818, -inf
        %2871 = vmax.xlane.f32.xlu0 %v2870
        %v2872 = vpop.xlane.xlu0 %2871
        %v2873 = vsel %vm1123, %v2821, -inf
        %2874 = vmax.xlane.f32.xlu0 %v2873
        %v2875 = vpop.xlane.xlu0 %2874
        %v2876 = vsel %vm1123, %v2826, -inf
        %2877 = vmax.xlane.f32.xlu0 %v2876
        %v2878 = vpop.xlane.xlu0 %2877
        %v2879 = vsel %vm1123, %v2829, -inf
        %2880 = vmax.xlane.f32.xlu0 %v2879
        %v2881 = vpop.xlane.xlu0 %2880
        %v2882 = vsel %vm1123, %v2834, -inf
        %2883 = vmax.xlane.f32.xlu0 %v2882
        %v2884 = vpop.xlane.xlu0 %2883
        %v2885 = vsel %vm1123, %v2837, -inf
        %2886 = vmax.xlane.f32.xlu0 %v2885
        %v2887 = vpop.xlane.xlu0 %2886
        %v2888 = vsub.f32 %v2705, %v2842
        %v2889 = vsub.f32 %v2708, %v2845
        %v2890 = vsub.f32 %v2713, %v2848
        %v2891 = vsub.f32 %v2716, %v2851
        %v2892 = vsub.f32 %v2721, %v2854
        %v2893 = vsub.f32 %v2724, %v2857
        %v2894 = vsub.f32 %v2729, %v2860
        %v2895 = vsub.f32 %v2732, %v2863
        %v2896 = vsub.f32 %v2810, %v2866
        %v2897 = vsub.f32 %v2813, %v2869
        %v2898 = vsub.f32 %v2818, %v2872
        %v2899 = vsub.f32 %v2821, %v2875
        %v2900 = vsub.f32 %v2826, %v2878
        %v2901 = vsub.f32 %v2829, %v2881
        %v2902 = vsub.f32 %v2834, %v2884
        %v2903 = vsub.f32 %v2837, %v2887
        %v2904 = vmul.f32 %v2888, 1.442695
        %v2905 = vpow.pop %v2904
        %v2906 = vmul.f32 %v2889, 1.442695
        %v2907 = vpow.pop %v2906
        %v2908 = vmul.f32 %v2890, 1.442695
        %v2909 = vpow.pop %v2908
        %v2910 = vmul.f32 %v2891, 1.442695
        %v2911 = vpow.pop %v2910
        %v2912 = vmul.f32 %v2892, 1.442695
        %v2913 = vpow.pop %v2912
        %v2914 = vmul.f32 %v2893, 1.442695
        %v2915 = vpow.pop %v2914
        %v2916 = vmul.f32 %v2894, 1.442695
        %v2917 = vpow.pop %v2916
        %v2918 = vmul.f32 %v2895, 1.442695
        %v2919 = vpow.pop %v2918
        %v2920 = vmul.f32 %v2896, 1.442695
        %v2921 = vpow.pop %v2920
        %v2922 = vmul.f32 %v2897, 1.442695
        %v2923 = vpow.pop %v2922
        %v2924 = vmul.f32 %v2898, 1.442695
        %v2925 = vpow.pop %v2924
        %v2926 = vmul.f32 %v2899, 1.442695
        %v2927 = vpow.pop %v2926
        %v2928 = vmul.f32 %v2900, 1.442695
        %v2929 = vpow.pop %v2928
        %v2930 = vmul.f32 %v2901, 1.442695
        %v2931 = vpow.pop %v2930
        %v2932 = vmul.f32 %v2902, 1.442695
        %v2933 = vpow.pop %v2932
        %v2934 = vmul.f32 %v2903, 1.442695
        %v2935 = vpow.pop %v2934
        %v2936 = vsel %vm1123, %v2905, 0.0
        %2937 = vadd.xlane.f32.xlu0 %v2936
        %v2938 = vpop.xlane.xlu0 %2937
        %v2939 = vsel %vm1123, %v2907, 0.0
        %2940 = vadd.xlane.f32.xlu0 %v2939
        %v2941 = vpop.xlane.xlu0 %2940
        %v2942 = vsel %vm1123, %v2909, 0.0
        %2943 = vadd.xlane.f32.xlu0 %v2942
        %v2944 = vpop.xlane.xlu0 %2943
        %v2945 = vsel %vm1123, %v2911, 0.0
        %2946 = vadd.xlane.f32.xlu0 %v2945
        %v2947 = vpop.xlane.xlu0 %2946
        %v2948 = vsel %vm1123, %v2913, 0.0
        %2949 = vadd.xlane.f32.xlu0 %v2948
        %v2950 = vpop.xlane.xlu0 %2949
        %v2951 = vsel %vm1123, %v2915, 0.0
        %2952 = vadd.xlane.f32.xlu0 %v2951
        %v2953 = vpop.xlane.xlu0 %2952
        %v2954 = vsel %vm1123, %v2917, 0.0
        %2955 = vadd.xlane.f32.xlu0 %v2954
        %v2956 = vpop.xlane.xlu0 %2955
        %v2957 = vsel %vm1123, %v2919, 0.0
        %2958 = vadd.xlane.f32.xlu0 %v2957
        %v2959 = vpop.xlane.xlu0 %2958
        %v2960 = vsel %vm1123, %v2921, 0.0
        %2961 = vadd.xlane.f32.xlu0 %v2960
        %v2962 = vpop.xlane.xlu0 %2961
        %v2963 = vsel %vm1123, %v2923, 0.0
        %2964 = vadd.xlane.f32.xlu0 %v2963
        %v2965 = vpop.xlane.xlu0 %2964
        %v2966 = vsel %vm1123, %v2925, 0.0
        %2967 = vadd.xlane.f32.xlu0 %v2966
        %v2968 = vpop.xlane.xlu0 %2967
        %v2969 = vsel %vm1123, %v2927, 0.0
        %2970 = vadd.xlane.f32.xlu0 %v2969
        %v2971 = vpop.xlane.xlu0 %2970
        %v2972 = vsel %vm1123, %v2929, 0.0
        %2973 = vadd.xlane.f32.xlu0 %v2972
        %v2974 = vpop.xlane.xlu0 %2973
        %v2975 = vsel %vm1123, %v2931, 0.0
        %2976 = vadd.xlane.f32.xlu0 %v2975
        %v2977 = vpop.xlane.xlu0 %2976
        %v2978 = vsel %vm1123, %v2933, 0.0
        %2979 = vadd.xlane.f32.xlu0 %v2978
        %v2980 = vpop.xlane.xlu0 %2979
        %v2981 = vsel %vm1123, %v2935, 0.0
        %2982 = vadd.xlane.f32.xlu0 %v2981
        %v2983 = vpop.xlane.xlu0 %2982
        %v2984 = vrcp.pop %v2938
        %v2985 = vrcp.pop %v2941
        %v2986 = vrcp.pop %v2944
        %v2987 = vrcp.pop %v2947
        %v2988 = vrcp.pop %v2950
        %v2989 = vrcp.pop %v2953
        %v2990 = vrcp.pop %v2956
        %v2991 = vrcp.pop %v2959
        %v2992 = vrcp.pop %v2962
        %v2993 = vrcp.pop %v2965
        %v2994 = vrcp.pop %v2968
        %v2995 = vrcp.pop %v2971
        %v2996 = vrcp.pop %v2974
        %v2997 = vrcp.pop %v2977
        %v2998 = vrcp.pop %v2980
        %v2999 = vrcp.pop %v2983
        %v3000 = vmul.f32 %v2905, %v2984
        %v3001 = vmul.f32 %v2907, %v2985
        %v3002 = vmul.f32 %v2909, %v2986
        %v3003 = vmul.f32 %v2911, %v2987
        %v3004 = vmul.f32 %v2913, %v2988
        %v3005 = vmul.f32 %v2915, %v2989
        %v3006 = vmul.f32 %v2917, %v2990
        %v3007 = vmul.f32 %v2919, %v2991
        %v3008 = vmul.f32 %v2921, %v2992
        %v3009 = vmul.f32 %v2923, %v2993
        %v3010 = vmul.f32 %v2925, %v2994
        %v3011 = vmul.f32 %v2927, %v2995
        %v3012 = vmul.f32 %v2929, %v2996
        %v3013 = vmul.f32 %v2931, %v2997
        %v3014 = vmul.f32 %v2933, %v2998
        %v3015 = vmul.f32 %v2935, %v2999
        %v3016 = vpack.c.bf16 %v3001, %v3000
        %v3017 = vpack.c.bf16 %v3003, %v3002
        %v3018 = vpack.c.bf16 %v3005, %v3004
        %v3019 = vpack.c.bf16 %v3007, %v3006
        %v3020 = vpack.c.bf16 %v3009, %v3008
        %v3021 = vpack.c.bf16 %v3011, %v3010
        %v3022 = vpack.c.bf16 %v3013, %v3012
        %v3023 = vpack.c.bf16 %v3015, %v3014
        %3024 = vrot.lane.b32.xlu0 %v936, 32
        %v3025 = vpop.permute.xlu0 %3024
        %3026 = vrot.lane.b32.xlu0 %v937, 32
        %v3027 = vpop.permute.xlu0 %3026
        %3028 = vrot.lane.b32.xlu0 %v938, 32
        %v3029 = vpop.permute.xlu0 %3028
        %3030 = vrot.lane.b32.xlu0 %v939, 32
        %v3031 = vpop.permute.xlu0 %3030
        %v3037 = vsel %vm1123, %v3016, 0
        %v3040 = vsel %vm1123, %v3017, 0
        %v3043 = vsel %vm1123, %v3018, 0
        %v3046 = vsel %vm1123, %v3019, 0
        %3048 = vmatprep.subr.bf16.mxu0 0
        %3049 = vmatpush1.bf16.msra.mxu0 %v3025
        %3050 = vmatprep.subr.bf16.mxu0 0
        %3051 = vmatpush1.bf16.msra.mxu0 %v3027
        %3052 = vmatprep.subr.bf16.mxu0 0
        %3053 = vmatpush1.bf16.msra.mxu0 %v3029
        %3054 = vmatprep.subr.bf16.mxu0 0
        %3055 = vmatpush1.bf16.msra.mxu0 %v3031
        %3056 = vmatprep.subr.bf16.mxu0 0
        %3057 = vmatpush1.bf16.msra.mxu0 0
        %3058 = vmatprep.subr.bf16.mxu0 0
        %3059 = vmatpush1.bf16.msra.mxu0 0
        %3060 = vmatprep.subr.bf16.mxu0 0
        %3061 = vmatpush1.bf16.msra.mxu0 0
        %3062 = vmatprep.subr.bf16.mxu0 0
        %3063 = vmatpush1.bf16.msra.mxu0 0
        %3064 = vmatprep.subr.bf16.mxu0 0
        %3065 = vmatpush1.bf16.msra.mxu0 0
        %3066 = vmatprep.subr.bf16.mxu0 0
        %3067 = vmatpush1.bf16.msra.mxu0 0
        %3068 = vmatprep.subr.bf16.mxu0 0
        %3069 = vmatpush1.bf16.msra.mxu0 0
        %3070 = vmatprep.subr.bf16.mxu0 0
        %3071 = vmatpush1.bf16.msra.mxu0 0
        %3072 = vmatprep.subr.bf16.mxu0 0
        %3073 = vmatpush1.bf16.msra.mxu0 0
        %3074 = vmatprep.subr.bf16.mxu0 0
        %3075 = vmatpush1.bf16.msra.mxu0 0
        %3076 = vmatprep.subr.bf16.mxu0 0
        %3077 = vmatpush1.bf16.msra.mxu0 0
        %3078 = vmatprep.subr.bf16.mxu0 0
        %3079 = vmatpush1.bf16.msra.mxu0 0
        %3080 = vmatprep.mubr.bf16.mxu0 0
        %3081 = vmatmul.mubr.bf16.gmra.mrb[0].mxu0 %v3037
        %v3082 = vpop.f32.mrb[0].mxu0
        %v3083 = vadd.f32 0.0, %v3082
        %v3084 = vpop.f32.mrb[0].mxu0
        %v3085 = vpop.f32.mrb[0].mxu0
        %v3086 = vadd.f32 0.0, %v3085
        %v3087 = vpop.f32.mrb[0].mxu0
        %3088 = vmatprep.mubr.bf16.mxu0 0
        %3089 = vmatmul.mubr.bf16.gmra.mrb[0].mxu0 %v3040
        %v3090 = vpop.f32.mrb[0].mxu0
        %v3091 = vadd.f32 0.0, %v3090
        %v3092 = vpop.f32.mrb[0].mxu0
        %v3093 = vpop.f32.mrb[0].mxu0
        %v3094 = vadd.f32 0.0, %v3093
        %v3095 = vpop.f32.mrb[0].mxu0
        %3096 = vmatprep.mubr.bf16.mxu0 0
        %3097 = vmatmul.mubr.bf16.gmra.mrb[0].mxu0 %v3043
        %v3098 = vpop.f32.mrb[0].mxu0
        %v3099 = vadd.f32 0.0, %v3098
        %v3100 = vpop.f32.mrb[0].mxu0
        %v3101 = vpop.f32.mrb[0].mxu0
        %v3102 = vadd.f32 0.0, %v3101
        %v3103 = vpop.f32.mrb[0].mxu0
        %3104 = vmatprep.mubr.bf16.mxu0 0
        %3105 = vmatmul.mubr.bf16.gmra.mrb[0].mxu0 %v3046
        %v3106 = vpop.f32.mrb[0].mxu0
        %v3107 = vadd.f32 0.0, %v3106
        %v3108 = vpop.f32.mrb[0].mxu0
        %v3109 = vpop.f32.mrb[0].mxu0
        %v3110 = vadd.f32 0.0, %v3109
        %v3111 = vpop.f32.mrb[0].mxu0
        %3112 = vdwg.mxu0
        %3113 = vrot.lane.b32.xlu0 %v940, 32
        %v3114 = vpop.permute.xlu0 %3113
        %3115 = vrot.lane.b32.xlu0 %v941, 32
        %v3116 = vpop.permute.xlu0 %3115
        %3117 = vrot.lane.b32.xlu0 %v942, 32
        %v3118 = vpop.permute.xlu0 %3117
        %3119 = vrot.lane.b32.xlu0 %v943, 32
        %v3120 = vpop.permute.xlu0 %3119
        %v3126 = vsel %vm1123, %v3020, 0
        %v3129 = vsel %vm1123, %v3021, 0
        %v3132 = vsel %vm1123, %v3022, 0
        %v3135 = vsel %vm1123, %v3023, 0
        %3137 = vmatprep.subr.bf16.mxu0 0
        %3138 = vmatpush1.bf16.msra.mxu0 %v3114
        %3139 = vmatprep.subr.bf16.mxu0 0
        %3140 = vmatpush1.bf16.msra.mxu0 %v3116
        %3141 = vmatprep.subr.bf16.mxu0 0
        %3142 = vmatpush1.bf16.msra.mxu0 %v3118
        %3143 = vmatprep.subr.bf16.mxu0 0
        %3144 = vmatpush1.bf16.msra.mxu0 %v3120
        %3145 = vmatprep.subr.bf16.mxu0 0
        %3146 = vmatpush1.bf16.msra.mxu0 0
        %3147 = vmatprep.subr.bf16.mxu0 0
        %3148 = vmatpush1.bf16.msra.mxu0 0
        %3149 = vmatprep.subr.bf16.mxu0 0
        %3150 = vmatpush1.bf16.msra.mxu0 0
        %3151 = vmatprep.subr.bf16.mxu0 0
        %3152 = vmatpush1.bf16.msra.mxu0 0
        %3153 = vmatprep.subr.bf16.mxu0 0
        %3154 = vmatpush1.bf16.msra.mxu0 0
        %3155 = vmatprep.subr.bf16.mxu0 0
        %3156 = vmatpush1.bf16.msra.mxu0 0
        %3157 = vmatprep.subr.bf16.mxu0 0
        %3158 = vmatpush1.bf16.msra.mxu0 0
        %3159 = vmatprep.subr.bf16.mxu0 0
        %3160 = vmatpush1.bf16.msra.mxu0 0
        %3161 = vmatprep.subr.bf16.mxu0 0
        %3162 = vmatpush1.bf16.msra.mxu0 0
        %3163 = vmatprep.subr.bf16.mxu0 0
        %3164 = vmatpush1.bf16.msra.mxu0 0
        %3165 = vmatprep.subr.bf16.mxu0 0
        %3166 = vmatpush1.bf16.msra.mxu0 0
        %3167 = vmatprep.subr.bf16.mxu0 0
        %3168 = vmatpush1.bf16.msra.mxu0 0
        %3169 = vmatprep.mubr.bf16.mxu0 0
        %3170 = vmatmul.mubr.bf16.gmra.mrb[0].mxu0 %v3126
        %v3171 = vpop.f32.mrb[0].mxu0
        %v3172 = vadd.f32 0.0, %v3171
        %v3173 = vpop.f32.mrb[0].mxu0
        %v3174 = vpop.f32.mrb[0].mxu0
        %v3175 = vadd.f32 0.0, %v3174
        %v3176 = vpop.f32.mrb[0].mxu0
        %3177 = vmatprep.mubr.bf16.mxu0 0
        %3178 = vmatmul.mubr.bf16.gmra.mrb[0].mxu0 %v3129
        %v3179 = vpop.f32.mrb[0].mxu0
        %v3180 = vadd.f32 0.0, %v3179
        %v3181 = vpop.f32.mrb[0].mxu0
        %v3182 = vpop.f32.mrb[0].mxu0
        %v3183 = vadd.f32 0.0, %v3182
        %v3184 = vpop.f32.mrb[0].mxu0
        %3185 = vmatprep.mubr.bf16.mxu0 0
        %3186 = vmatmul.mubr.bf16.gmra.mrb[0].mxu0 %v3132
        %v3187 = vpop.f32.mrb[0].mxu0
        %v3188 = vadd.f32 0.0, %v3187
        %v3189 = vpop.f32.mrb[0].mxu0
        %v3190 = vpop.f32.mrb[0].mxu0
        %v3191 = vadd.f32 0.0, %v3190
        %v3192 = vpop.f32.mrb[0].mxu0
        %3193 = vmatprep.mubr.bf16.mxu0 0
        %3194 = vmatmul.mubr.bf16.gmra.mrb[0].mxu0 %v3135
        %v3195 = vpop.f32.mrb[0].mxu0
        %v3196 = vadd.f32 0.0, %v3195
        %v3197 = vpop.f32.mrb[0].mxu0
        %v3198 = vpop.f32.mrb[0].mxu0
        %v3199 = vadd.f32 0.0, %v3198
        %v3200 = vpop.f32.mrb[0].mxu0
        %3201 = vdwg.mxu0
        %3218 = vrot.lane.b32.xlu0 %v1935, 32
        %v3219 = vpop.permute.xlu0 %3218
        %3220 = vrot.lane.b32.xlu0 %v1938, 32
        %v3221 = vpop.permute.xlu0 %3220
        %3222 = vrot.lane.b32.xlu0 %v1943, 32
        %v3223 = vpop.permute.xlu0 %3222
        %3224 = vrot.lane.b32.xlu0 %v1946, 32
        %v3225 = vpop.permute.xlu0 %3224
        %3226 = vrot.lane.b32.xlu0 %v1951, 32
        %v3227 = vpop.permute.xlu0 %3226
        %3228 = vrot.lane.b32.xlu0 %v1954, 32
        %v3229 = vpop.permute.xlu0 %3228
        %3230 = vrot.lane.b32.xlu0 %v1959, 32
        %v3231 = vpop.permute.xlu0 %3230
        %3232 = vrot.lane.b32.xlu0 %v1962, 32
        %v3233 = vpop.permute.xlu0 %3232
        %3234 = vrot.lane.b32.xlu0 %v2028, 32
        %v3235 = vpop.permute.xlu0 %3234
        %3236 = vrot.lane.b32.xlu0 %v2031, 32
        %v3237 = vpop.permute.xlu0 %3236
        %3238 = vrot.lane.b32.xlu0 %v2036, 32
        %v3239 = vpop.permute.xlu0 %3238
        %3240 = vrot.lane.b32.xlu0 %v2039, 32
        %v3241 = vpop.permute.xlu0 %3240
        %3242 = vrot.lane.b32.xlu0 %v2044, 32
        %v3243 = vpop.permute.xlu0 %3242
        %3244 = vrot.lane.b32.xlu0 %v2047, 32
        %v3245 = vpop.permute.xlu0 %3244
        %3246 = vrot.lane.b32.xlu0 %v2052, 32
        %v3247 = vpop.permute.xlu0 %3246
        %3248 = vrot.lane.b32.xlu0 %v2055, 32
        %v3249 = vpop.permute.xlu0 %3248
        %3282 = vrot.lane.b32.xlu0 %v2511, 64
        %v3283 = vpop.permute.xlu0 %3282
        %3284 = vrot.lane.b32.xlu0 %v2514, 64
        %v3285 = vpop.permute.xlu0 %3284
        %3286 = vrot.lane.b32.xlu0 %v2519, 64
        %v3287 = vpop.permute.xlu0 %3286
        %3288 = vrot.lane.b32.xlu0 %v2522, 64
        %v3289 = vpop.permute.xlu0 %3288
        %3290 = vrot.lane.b32.xlu0 %v2527, 64
        %v3291 = vpop.permute.xlu0 %3290
        %3292 = vrot.lane.b32.xlu0 %v2530, 64
        %v3293 = vpop.permute.xlu0 %3292
        %3294 = vrot.lane.b32.xlu0 %v2535, 64
        %v3295 = vpop.permute.xlu0 %3294
        %3296 = vrot.lane.b32.xlu0 %v2538, 64
        %v3297 = vpop.permute.xlu0 %3296
        %3298 = vrot.lane.b32.xlu0 %v2600, 64
        %v3299 = vpop.permute.xlu0 %3298
        %3300 = vrot.lane.b32.xlu0 %v2603, 64
        %v3301 = vpop.permute.xlu0 %3300
        %3302 = vrot.lane.b32.xlu0 %v2608, 64
        %v3303 = vpop.permute.xlu0 %3302
        %3304 = vrot.lane.b32.xlu0 %v2611, 64
        %v3305 = vpop.permute.xlu0 %3304
        %3306 = vrot.lane.b32.xlu0 %v2616, 64
        %v3307 = vpop.permute.xlu0 %3306
        %3308 = vrot.lane.b32.xlu0 %v2619, 64
        %v3309 = vpop.permute.xlu0 %3308
        %3310 = vrot.lane.b32.xlu0 %v2624, 64
        %v3311 = vpop.permute.xlu0 %3310
        %3312 = vrot.lane.b32.xlu0 %v2627, 64
        %v3313 = vpop.permute.xlu0 %3312
        %3346 = vrot.lane.b32.xlu0 %v3083, 96
        %v3347 = vpop.permute.xlu0 %3346
        %3348 = vrot.lane.b32.xlu0 %v3086, 96
        %v3349 = vpop.permute.xlu0 %3348
        %3350 = vrot.lane.b32.xlu0 %v3091, 96
        %v3351 = vpop.permute.xlu0 %3350
        %3352 = vrot.lane.b32.xlu0 %v3094, 96
        %v3353 = vpop.permute.xlu0 %3352
        %3354 = vrot.lane.b32.xlu0 %v3099, 96
        %v3355 = vpop.permute.xlu0 %3354
        %3356 = vrot.lane.b32.xlu0 %v3102, 96
        %v3357 = vpop.permute.xlu0 %3356
        %3358 = vrot.lane.b32.xlu0 %v3107, 96
        %v3359 = vpop.permute.xlu0 %3358
        %3360 = vrot.lane.b32.xlu0 %v3110, 96
        %v3361 = vpop.permute.xlu0 %3360
        %3362 = vrot.lane.b32.xlu0 %v3172, 96
        %v3363 = vpop.permute.xlu0 %3362
        %3364 = vrot.lane.b32.xlu0 %v3175, 96
        %v3365 = vpop.permute.xlu0 %3364
        %3366 = vrot.lane.b32.xlu0 %v3180, 96
        %v3367 = vpop.permute.xlu0 %3366
        %3368 = vrot.lane.b32.xlu0 %v3183, 96
        %v3369 = vpop.permute.xlu0 %3368
        %3370 = vrot.lane.b32.xlu0 %v3188, 96
        %v3371 = vpop.permute.xlu0 %3370
        %3372 = vrot.lane.b32.xlu0 %v3191, 96
        %v3373 = vpop.permute.xlu0 %3372
        %3374 = vrot.lane.b32.xlu0 %v3196, 96
        %v3375 = vpop.permute.xlu0 %3374
        %3376 = vrot.lane.b32.xlu0 %v3199, 96
        %v3377 = vpop.permute.xlu0 %3376
        %v3394 = vsel %vm944, %v1355, %v3219
        %v3395 = vsel %vm944, %v1358, %v3221
        %v3396 = vsel %vm944, %v1363, %v3223
        %v3397 = vsel %vm944, %v1366, %v3225
        %v3398 = vsel %vm944, %v1371, %v3227
        %v3399 = vsel %vm944, %v1374, %v3229
        %v3400 = vsel %vm944, %v1379, %v3231
        %v3401 = vsel %vm944, %v1382, %v3233
        %v3402 = vsel %vm944, %v1432, %v3235
        %v3403 = vsel %vm944, %v1435, %v3237
        %v3404 = vsel %vm944, %v1440, %v3239
        %v3405 = vsel %vm944, %v1443, %v3241
        %v3406 = vsel %vm944, %v1448, %v3243
        %v3407 = vsel %vm944, %v1451, %v3245
        %v3408 = vsel %vm944, %v1456, %v3247
        %v3409 = vsel %vm944, %v1459, %v3249
        %v3410 = vsel %vm1123, %v3394, %v3283
        %v3411 = vsel %vm1123, %v3395, %v3285
        %v3412 = vsel %vm1123, %v3396, %v3287
        %v3413 = vsel %vm1123, %v3397, %v3289
        %v3414 = vsel %vm1123, %v3398, %v3291
        %v3415 = vsel %vm1123, %v3399, %v3293
        %v3416 = vsel %vm1123, %v3400, %v3295
        %v3417 = vsel %vm1123, %v3401, %v3297
        %v3418 = vsel %vm1123, %v3402, %v3299
        %v3419 = vsel %vm1123, %v3403, %v3301
        %v3420 = vsel %vm1123, %v3404, %v3303
        %v3421 = vsel %vm1123, %v3405, %v3305
        %v3422 = vsel %vm1123, %v3406, %v3307
        %v3423 = vsel %vm1123, %v3407, %v3309
        %v3424 = vsel %vm1123, %v3408, %v3311
        %v3425 = vsel %vm1123, %v3409, %v3313
        %vm3426 = vcmask 785408
        %v3427 = vsel %vm3426, %v3410, %v3347
        %v3428 = vsel %vm3426, %v3411, %v3349
        %v3429 = vsel %vm3426, %v3412, %v3351
        %v3430 = vsel %vm3426, %v3413, %v3353
        %v3431 = vsel %vm3426, %v3414, %v3355
        %v3432 = vsel %vm3426, %v3415, %v3357
        %v3433 = vsel %vm3426, %v3416, %v3359
        %v3434 = vsel %vm3426, %v3417, %v3361
        %v3435 = vsel %vm3426, %v3418, %v3363
        %v3436 = vsel %vm3426, %v3419, %v3365
        %v3437 = vsel %vm3426, %v3420, %v3367
        %v3438 = vsel %vm3426, %v3421, %v3369
        %v3439 = vsel %vm3426, %v3422, %v3371
        %v3440 = vsel %vm3426, %v3423, %v3373
        %v3441 = vsel %vm3426, %v3424, %v3375
        %v3442 = vsel %vm3426, %v3425, %v3377
        %v3443 = vpack.c.bf16 %v3428, %v3427
        %v3444 = vpack.c.bf16 %v3430, %v3429
        %v3445 = vpack.c.bf16 %v3432, %v3431
        %v3446 = vpack.c.bf16 %v3434, %v3433
        %v3447 = vpack.c.bf16 %v3436, %v3435
        %v3448 = vpack.c.bf16 %v3438, %v3437
        %v3449 = vpack.c.bf16 %v3440, %v3439
        %v3450 = vpack.c.bf16 %v3442, %v3441
        %v3451 = vld [vmem:[#allocation7] sm:$0xf]
        %v3452 = vld [vmem:[#allocation7 + $0x4] sm:$0xf]
        %v3453 = vld [vmem:[#allocation7 + $0x8] sm:$0xf]
        %v3454 = vld [vmem:[#allocation7 + $0xc] sm:$0xf]
        %v3455 = vld [vmem:[#allocation7 + $0x10] sm:$0xf]
        %v3456 = vld [vmem:[#allocation7 + $0x14] sm:$0xf]
        %v3457 = vld [vmem:[#allocation7 + $0x18] sm:$0xf]
        %v3458 = vld [vmem:[#allocation7 + $0x1c] sm:$0xf]
        %v3459 = vld [vmem:[#allocation7 + $0x20] sm:$0xf]
        %v3460 = vld [vmem:[#allocation7 + $0x24] sm:$0xf]
        %v3461 = vld [vmem:[#allocation7 + $0x28] sm:$0xf]
        %v3462 = vld [vmem:[#allocation7 + $0x2c] sm:$0xf]
        %v3463 = vld [vmem:[#allocation7 + $0x30] sm:$0xf]
        %v3464 = vld [vmem:[#allocation7 + $0x34] sm:$0xf]
        %v3465 = vld [vmem:[#allocation7 + $0x38] sm:$0xf]
        %v3466 = vld [vmem:[#allocation7 + $0x3c] sm:$0xf]
        %v3467 = vld [vmem:[%s3] sm:$0x1]
        %v3469 = vlaneseq
        %v3470 = vshrl.u32 %v3469, 7
        %v3471 = vsub.s32 0, %v3470
        %v3472 = vrot.slane %v3467, %v3471
        %v3490 = vunpack.c.l.b16 %v3451
        %v3491 = vunpack.c.l.b16 %v3452
        %v3492 = vunpack.c.l.b16 %v3453
        %v3493 = vunpack.c.l.b16 %v3454
        %v3494 = vunpack.c.l.b16 %v3455
        %v3495 = vunpack.c.l.b16 %v3456
        %v3496 = vunpack.c.l.b16 %v3457
        %v3497 = vunpack.c.l.b16 %v3458
        %v3498 = vunpack.c.l.b16 %v3459
        %v3499 = vunpack.c.l.b16 %v3460
        %v3500 = vunpack.c.l.b16 %v3461
        %v3501 = vunpack.c.l.b16 %v3462
        %v3502 = vunpack.c.l.b16 %v3463
        %v3503 = vunpack.c.l.b16 %v3464
        %v3504 = vunpack.c.l.b16 %v3465
        %v3505 = vunpack.c.l.b16 %v3466
        %v3506 = vpack.c.b16 %v3491, %v3490
        %v3507 = vpack.c.b16 %v3493, %v3492
        %v3508 = vpack.c.b16 %v3495, %v3494
        %v3509 = vpack.c.b16 %v3497, %v3496
        %v3510 = vpack.c.b16 %v3499, %v3498
        %v3511 = vpack.c.b16 %v3501, %v3500
        %v3512 = vpack.c.b16 %v3503, %v3502
        %v3513 = vpack.c.b16 %v3505, %v3504
        %3522 = vmatprep.subr.bf16.mxu0 0
        %3523 = vmatpush1.bf16.msra.mxu0 %v3506
        %3524 = vmatprep.subr.bf16.mxu0 0
        %3525 = vmatpush1.bf16.msra.mxu0 %v3507
        %3526 = vmatprep.subr.bf16.mxu0 0
        %3527 = vmatpush1.bf16.msra.mxu0 %v3508
        %3528 = vmatprep.subr.bf16.mxu0 0
        %3529 = vmatpush1.bf16.msra.mxu0 %v3509
        %3530 = vmatprep.subr.bf16.mxu0 0
        %3531 = vmatpush1.bf16.msra.mxu0 %v3510
        %3532 = vmatprep.subr.bf16.mxu0 0
        %3533 = vmatpush1.bf16.msra.mxu0 %v3511
        %3534 = vmatprep.subr.bf16.mxu0 0
        %3535 = vmatpush1.bf16.msra.mxu0 %v3512
        %3536 = vmatprep.subr.bf16.mxu0 0
        %3537 = vmatpush1.bf16.msra.mxu0 %v3513
        %3538 = vmatprep.subr.bf16.mxu0 0
        %3539 = vmatpush1.bf16.msra.mxu0 0
        %3540 = vmatprep.subr.bf16.mxu0 0
        %3541 = vmatpush1.bf16.msra.mxu0 0
        %3542 = vmatprep.subr.bf16.mxu0 0
        %3543 = vmatpush1.bf16.msra.mxu0 0
        %3544 = vmatprep.subr.bf16.mxu0 0
        %3545 = vmatpush1.bf16.msra.mxu0 0
        %3546 = vmatprep.subr.bf16.mxu0 0
        %3547 = vmatpush1.bf16.msra.mxu0 0
        %3548 = vmatprep.subr.bf16.mxu0 0
        %3549 = vmatpush1.bf16.msra.mxu0 0
        %3550 = vmatprep.subr.bf16.mxu0 0
        %3551 = vmatpush1.bf16.msra.mxu0 0
        %3552 = vmatprep.subr.bf16.mxu0 0
        %3553 = vmatpush1.bf16.msra.mxu0 0
        %3554 = vmatprep.mubr.bf16.mxu0 0
        %3555 = vmatmul.mubr.bf16.gmra.mrb[0].mxu0 %v3443
        %v3556 = vpop.f32.mrb[0].mxu0
        %v3557 = vadd.f32 %v3472, %v3556
        %v3558 = vpop.f32.mrb[0].mxu0
        %v3559 = vpop.f32.mrb[0].mxu0
        %v3560 = vadd.f32 %v3472, %v3559
        %v3561 = vpop.f32.mrb[0].mxu0
        %3562 = vmatprep.mubr.bf16.mxu0 0
        %3563 = vmatmul.mubr.bf16.gmra.mrb[0].mxu0 %v3444
        %v3564 = vpop.f32.mrb[0].mxu0
        %v3565 = vadd.f32 %v3472, %v3564
        %v3566 = vpop.f32.mrb[0].mxu0
        %v3567 = vpop.f32.mrb[0].mxu0
        %v3568 = vadd.f32 %v3472, %v3567
        %v3569 = vpop.f32.mrb[0].mxu0
        %3570 = vmatprep.mubr.bf16.mxu0 0
        %3571 = vmatmul.mubr.bf16.gmra.mrb[0].mxu0 %v3445
        %v3572 = vpop.f32.mrb[0].mxu0
        %v3573 = vadd.f32 %v3472, %v3572
        %v3574 = vpop.f32.mrb[0].mxu0
        %v3575 = vpop.f32.mrb[0].mxu0
        %v3576 = vadd.f32 %v3472, %v3575
        %v3577 = vpop.f32.mrb[0].mxu0
        %3578 = vmatprep.mubr.bf16.mxu0 0
        %3579 = vmatmul.mubr.bf16.gmra.mrb[0].mxu0 %v3446
        %v3580 = vpop.f32.mrb[0].mxu0
        %v3581 = vadd.f32 %v3472, %v3580
        %v3582 = vpop.f32.mrb[0].mxu0
        %v3583 = vpop.f32.mrb[0].mxu0
        %v3584 = vadd.f32 %v3472, %v3583
        %v3585 = vpop.f32.mrb[0].mxu0
        %3586 = vmatprep.mubr.bf16.mxu0 0
        %3587 = vmatmul.mubr.bf16.gmra.mrb[0].mxu0 %v3447
        %v3588 = vpop.f32.mrb[0].mxu0
        %v3589 = vadd.f32 %v3472, %v3588
        %v3590 = vpop.f32.mrb[0].mxu0
        %v3591 = vpop.f32.mrb[0].mxu0
        %v3592 = vadd.f32 %v3472, %v3591
        %v3593 = vpop.f32.mrb[0].mxu0
        %3594 = vmatprep.mubr.bf16.mxu0 0
        %3595 = vmatmul.mubr.bf16.gmra.mrb[0].mxu0 %v3448
        %v3596 = vpop.f32.mrb[0].mxu0
        %v3597 = vadd.f32 %v3472, %v3596
        %v3598 = vpop.f32.mrb[0].mxu0
        %v3599 = vpop.f32.mrb[0].mxu0
        %v3600 = vadd.f32 %v3472, %v3599
        %v3601 = vpop.f32.mrb[0].mxu0
        %3602 = vmatprep.mubr.bf16.mxu0 0
        %3603 = vmatmul.mubr.bf16.gmra.mrb[0].mxu0 %v3449
        %v3604 = vpop.f32.mrb[0].mxu0
        %v3605 = vadd.f32 %v3472, %v3604
        %v3606 = vpop.f32.mrb[0].mxu0
        %v3607 = vpop.f32.mrb[0].mxu0
        %v3608 = vadd.f32 %v3472, %v3607
        %v3609 = vpop.f32.mrb[0].mxu0
        %3610 = vmatprep.mubr.bf16.mxu0 0
        %3611 = vmatmul.mubr.bf16.gmra.mrb[0].mxu0 %v3450
        %v3612 = vpop.f32.mrb[0].mxu0
        %v3613 = vadd.f32 %v3472, %v3612
        %v3614 = vpop.f32.mrb[0].mxu0
        %v3615 = vpop.f32.mrb[0].mxu0
        %v3616 = vadd.f32 %v3472, %v3615
        %v3617 = vpop.f32.mrb[0].mxu0
        %3618 = vdwg.mxu0
        %v3619 = vadd.f32 %v3557, %v303
        %v3620 = vadd.f32 %v3560, %v304
        %v3621 = vadd.f32 %v3565, %v305
        %v3622 = vadd.f32 %v3568, %v306
        %v3623 = vadd.f32 %v3573, %v307
        %v3624 = vadd.f32 %v3576, %v308
        %v3625 = vadd.f32 %v3581, %v309
        %v3626 = vadd.f32 %v3584, %v310
        %v3627 = vadd.f32 %v3589, %v311
        %v3628 = vadd.f32 %v3592, %v312
        %v3629 = vadd.f32 %v3597, %v313
        %v3630 = vadd.f32 %v3600, %v314
        %v3631 = vadd.f32 %v3605, %v315
        %v3632 = vadd.f32 %v3608, %v316
        %v3633 = vadd.f32 %v3613, %v317
        %v3634 = vadd.f32 %v3616, %v318
        %3635 = vst [vmem:[%s299] sm:$0xff] %v3619
        %3636 = vst [vmem:[%s299 + $0x8] sm:$0xff] %v3620
        %3637 = vst [vmem:[%s299 + $0x10] sm:$0xff] %v3621
        %3638 = vst [vmem:[%s299 + $0x18] sm:$0xff] %v3622
        %3639 = vst [vmem:[%s299 + $0x20] sm:$0xff] %v3623
        %3640 = vst [vmem:[%s299 + $0x28] sm:$0xff] %v3624
        %3641 = vst [vmem:[%s299 + $0x30] sm:$0xff] %v3625
        %3642 = vst [vmem:[%s299 + $0x38] sm:$0xff] %v3626
        %3643 = vst [vmem:[%s299 + $0x40] sm:$0xff] %v3627
        %3644 = vst [vmem:[%s299 + $0x48] sm:$0xff] %v3628
        %3645 = vst [vmem:[%s299 + $0x50] sm:$0xff] %v3629
        %3646 = vst [vmem:[%s299 + $0x58] sm:$0xff] %v3630
        %3647 = vst [vmem:[%s299 + $0x60] sm:$0xff] %v3631
        %3648 = vst [vmem:[%s299 + $0x68] sm:$0xff] %v3632
        %3649 = vst [vmem:[%s299 + $0x70] sm:$0xff] %v3633
        %3650 = vst [vmem:[%s299 + $0x78] sm:$0xff] %v3634
        %s3651 = sand.u32 %s163, 1
        %s3652 = scalar_lea.sflag [#allocation4], %s3651
        %s3653 = sand.u32 %s163, 1
        %s3654 = smul.addr %s3653, 128
        %s3655 = scalar_lea.vmem [#allocation8], %s3654
        // Predicated region
        $region57: #{tpu_custom_call.1} parent=43 // pred_check
          %p3656 = pneg %p173
        $region58: #{tpu_custom_call.1} parent=43 // pred_check_branch
          %3658 = sbr.rel (%p3656) target = $region60
        $region59: #{tpu_custom_call.1} parent=43 // pred_region
          %s3659 = smul.u32 2, %s24
          %s3661 = ssub.s32 2048, 2048
          %3662 = vsyncadd %s3652, %s3661
          %s3663 = smul.addr %s3659, 8
          %s3664 = smul.addr %s3663, 128
          %s3665 = scalar_lea.hbm %s6, %s3664
          %s3666 = sshll.u32 %s3655, 4
          %s3667 = int_to_ptr.vmem [resolvable:$true] %s3666
          %3672 = dma.vmem_to_hbm [thread:$0]  %s3667, 2048, %s3665, %s3652, 128, 128, 8
        $region60: #{tpu_custom_call.1} parent=43 // pred_fallthru
          _
      $region44: #{tpu_custom_call.1} parent=5 // pred_fallthru
        _
      %p3673 = scmp.le.s32.totalorder 2, %s19
      // Predicated region
      $region61: #{tpu_custom_call.1} parent=5 // pred_check
        %p3674 = pneg %p3673
      $region62: #{tpu_custom_call.1} parent=5 // pred_check_branch
        %3676 = sbr.rel (%p3674) target = $region64
      $region63: #{tpu_custom_call.1} parent=5 // pred_region
        %s3677 = ssub.s32 %s19, 2
        // Predicated region
        $region65: #{tpu_custom_call.1} parent=63 // pred_check
          %p3678 = pneg %p179
        $region66: #{tpu_custom_call.1} parent=63 // pred_check_branch
          %3680 = sbr.rel (%p3678) target = $region68
        $region67: #{tpu_custom_call.1} parent=63 // pred_region
          %s3681 = sand.u32 %s164, 1
          %s3682 = scalar_lea.sflag [#allocation4], %s3681
          %s3683 = sand.u32 %s164, 1
          %s3684 = smul.addr %s3683, 128
          %s3685 = scalar_lea.vmem [#allocation8], %s3684
          %3686 = dma.done %s3682, 2048
        $region68: #{tpu_custom_call.1} parent=63 // pred_fallthru
          _
      $region64: #{tpu_custom_call.1} parent=5 // pred_fallthru
        _
    $region6: #{tpu_custom_call.1} parent=1 // loop_footer
      %s23 = sadd.s32 1, %s19
    $region7: #{tpu_custom_call.1} parent=1 // loop_footer_branch
      %18 = sbr.rel target = $region3
    $region8: #{tpu_custom_call.1} parent=1 // loop_exit
      _
    %3687 = vsyncpa [#allocation3], 1
    %s3688 = scalar_lea.sflag [#allocation3], 1
    %3689 = vsyncpa %s3688, 1
    %3690 = vsyncpa [#allocation6], 1
    %3691 = vsyncpa [#allocation4], 1
    %s3692 = scalar_lea.sflag [#allocation4], 1
    %3693 = vsyncpa %s3692, 1

</llo_original>
